<compile_context>
chip_gen: v5e
topology: v5e:2x2
jax: 0.10.0
libtpu: 0.0.40
codegen_flags: <defaults>
</compile_context>

<pallas_src>
import jax
import jax.numpy as jnp
from jax import lax
from jax.experimental import pallas as pl
from jax.experimental.pallas import tpu as pltpu

_VMEM_LIMIT = 32 * 1024 * 1024  # explicit scoped-VMEM cap (safe on v5e/v6e/v7x)


def _round_up(x, m):
    return (x + m - 1) // m * m


# ----------------------------- Pallas kernels -----------------------------

def _conv_bn_pool_kernel(p0_ref, p1_ref, p2_ref, p3_ref,
                         w_ref, b_ref, scale_ref, shift_ref, o_ref):
    """Fused conv (im2col matmul) + bias + ReLU + BN affine + 2x2 max-pool.

    p{0..3}: (tm, K) patch rows for the four pool taps of the same pooled
    output positions.  Output: (tm, Cout) pooled activations.
    """
    w = w_ref[...]
    b = b_ref[...]
    sc = scale_ref[...]
    sh = shift_ref[...]

    def act(p_ref):
        y = jnp.dot(p_ref[...], w, preferred_element_type=jnp.float32) + b
        y = jnp.maximum(y, 0.0)            # ReLU (reference order: conv->ReLU->BN)
        return y * sc + sh                 # BatchNorm (eval) affine

    o_ref[...] = jnp.maximum(jnp.maximum(act(p0_ref), act(p1_ref)),
                             jnp.maximum(act(p2_ref), act(p3_ref)))


def _matmul_bias_kernel(x_ref, w_ref, b_ref, o_ref):
    o_ref[...] = (jnp.dot(x_ref[...], w_ref[...],
                          preferred_element_type=jnp.float32) + b_ref[...])


def _linear_logsoftmax_kernel(x_ref, w_ref, b_ref, o_ref):
    logits = (jnp.dot(x_ref[...], w_ref[...],
                      preferred_element_type=jnp.float32) + b_ref[...])
    m = jnp.max(logits, axis=-1, keepdims=True)
    z = logits - m
    lse = jnp.log(jnp.sum(jnp.exp(z), axis=-1, keepdims=True))
    o_ref[...] = z - lse


def _lstm_recurrent_kernel(gx_ref, whh_ref, o_ref):
    """Recurrence only: gates_x is precomputed.  Everything VMEM-resident.

    gx_ref: (T, B, 4*Hp) precomputed x-projection (+ bias), gate-padded.
    whh_ref: (Hp, 4*Hp) hidden-to-hidden weights, gate-padded.
    o_ref:  (T, B, Hp) hidden states.
    """
    T, B, _ = gx_ref.shape
    Hp = whh_ref.shape[0]
    whh = whh_ref[...]

    def step(t, carry):
        h, c = carry
        gates = gx_ref[t] + jnp.dot(h, whh, preferred_element_type=jnp.float32)
        # 128-aligned gate slices (Hp is a multiple of 128).
        i_g = jax.nn.sigmoid(gates[:, 0 * Hp:1 * Hp])
        f_g = jax.nn.sigmoid(gates[:, 1 * Hp:2 * Hp])
        g_g = jnp.tanh(gates[:, 2 * Hp:3 * Hp])
        o_g = jax.nn.sigmoid(gates[:, 3 * Hp:4 * Hp])
        c_new = f_g * c + i_g * g_g
        h_new = o_g * jnp.tanh(c_new)
        o_ref[t] = h_new
        return (h_new, c_new)

    h0 = jnp.zeros((B, Hp), jnp.float32)
    c0 = jnp.zeros((B, Hp), jnp.float32)
    lax.fori_loop(0, T, step, (h0, c0))


# ----------------------------- wrappers (glue) -----------------------------

def _tiled_rowwise_matmul(kernel, x2d, w, b2d, tile_m=512):
    """Row-tiled fused matmul kernel call; pads M up to a tile multiple."""
    M, K = x2d.shape
    N = w.shape[1]
    tm = min(tile_m, _round_up(M, 8))
    Mp = _round_up(M, tm)
    xp = jnp.pad(x2d, ((0, Mp - M), (0, 0))) if Mp != M else x2d
    out = pl.pallas_call(
        kernel,
        out_shape=jax.ShapeDtypeStruct((Mp, N), jnp.float32),
        grid_spec=pltpu.PrefetchScalarGridSpec(
            num_scalar_prefetch=0,
            grid=(Mp // tm,),
            in_specs=[pl.BlockSpec((tm, K), lambda i: (i, 0)),
                      pl.BlockSpec((K, N), lambda i: (0, 0)),
                      pl.BlockSpec((1, N), lambda i: (0, 0))],
            out_specs=pl.BlockSpec((tm, N), lambda i: (i, 0)),
        ),
        compiler_params=pltpu.CompilerParams(
            dimension_semantics=("parallel",),
            vmem_limit_bytes=_VMEM_LIMIT),
    )(xp, w, b2d)
    return out[:M]


def conv_relu_bn_pool(x_nhwc, w_oihw, bias, gamma, beta, mean, var,
                      eps=1e-5, tile_m=512):
    """conv3x3(valid) -> ReLU -> BN(eval) -> dropout(identity) -> maxpool2x2.

    NHWC in, NHWC out.  The pre-pool activation is never written to HBM.
    """
    B, H, W, Cin = x_nhwc.shape
    Cout = w_oihw.shape[0]
    Ho, Wo = H - 2, W - 2
    Hp, Wp = Ho // 2, Wo // 2
    K = 9 * Cin
    Q = B * Hp * Wp

    # Four pool-tap patch matrices (partition of the conv output positions).
    # TODO(synk): patch extraction is still XLA glue (~9x input reads).
    taps = []
    for dy in range(2):
        for dx in range(2):
            cols = [x_nhwc[:, dy + kh: dy + kh + 2 * Hp: 2,
                           dx + kw: dx + kw + 2 * Wp: 2, :]
                    for kh in range(3) for kw in range(3)]
            taps.append(jnp.concatenate(cols, axis=-1).reshape(Q, K))

    # weight flattened to (kh, kw, cin) x cout to match the patch feature order
    w2d = jnp.transpose(w_oihw, (2, 3, 1, 0)).reshape(K, Cout)
    scale = gamma / jnp.sqrt(var + eps)
    shift = beta - mean * scale

    tm = min(tile_m, _round_up(Q, 8))
    Qp = _round_up(Q, tm)
    if Qp != Q:
        taps = [jnp.pad(t, ((0, Qp - Q), (0, 0))) for t in taps]

    patch_spec = pl.BlockSpec((tm, K), lambda i: (i, 0))
    vec_spec = pl.BlockSpec((1, Cout), lambda i: (0, 0))
    out = pl.pallas_call(
        _conv_bn_pool_kernel,
        out_shape=jax.ShapeDtypeStruct((Qp, Cout), jnp.float32),
        grid_spec=pltpu.PrefetchScalarGridSpec(
            num_scalar_prefetch=0,
            grid=(Qp // tm,),
            in_specs=[patch_spec] * 4 + [
                pl.BlockSpec((K, Cout), lambda i: (0, 0)),
                vec_spec, vec_spec, vec_spec],
            out_specs=pl.BlockSpec((tm, Cout), lambda i: (i, 0)),
        ),
        compiler_params=pltpu.CompilerParams(
            dimension_semantics=("parallel",),
            vmem_limit_bytes=_VMEM_LIMIT),
    )(*taps, w2d, bias[None, :], scale[None, :], shift[None, :])
    return out[:Q].reshape(B, Hp, Wp, Cout)


def _pad_gate_cols(w_t, H, Hpad):
    """Re-lay gate columns [i|f|g|o] (width H each) into 128-aligned blocks."""
    blocks = [jnp.pad(w_t[:, g * H:(g + 1) * H], ((0, 0), (0, Hpad - H)))
              for g in range(4)]
    return jnp.concatenate(blocks, axis=1)


def lstm_forward(x_tbi, w_ih, w_hh, b_ih, b_hh):
    """Single-layer LSTM, zero initial state.  Returns (T, B, Hpad); the
    hidden lanes >= H are exactly zero by construction."""
    T, B, I = x_tbi.shape
    H = w_hh.shape[1]
    Hpad = _round_up(H, 128)

    wih_p = _pad_gate_cols(w_ih.T, H, Hpad)                       # (I, 4*Hpad)
    bias_p = _pad_gate_cols((b_ih + b_hh)[None, :], H, Hpad)      # (1, 4*Hpad)
    whh_p = jnp.pad(_pad_gate_cols(w_hh.T, H, Hpad),
                    ((0, Hpad - H), (0, 0)))                      # (Hpad, 4*Hpad)

    # (1) hoisted input projection: one big MXU-friendly matmul for all steps.
    gates_x = _tiled_rowwise_matmul(
        _matmul_bias_kernel, x_tbi.reshape(T * B, I), wih_p, bias_p
    ).reshape(T, B, 4 * Hpad)

    # (2) recurrence: one pallas_call, fori_loop over T, no per-step grid cost.
    h_all = pl.pallas_call(
        _lstm_recurrent_kernel,
        out_shape=jax.ShapeDtypeStruct((T, B, Hpad), jnp.float32),
        compiler_params=pltpu.CompilerParams(vmem_limit_bytes=_VMEM_LIMIT),
    )(gates_x, whh_p)
    return h_all


def probnet_forward(x_nchw, p):
    # NCHW input (torch convention) -> NHWC once, stay channel-last throughout.
    x = jnp.transpose(x_nchw, (0, 2, 3, 1))

    out = conv_relu_bn_pool(x, p['conv1_w'], p['conv1_b'],
                            p['bn1_gamma'], p['bn1_beta'],
                            p['bn1_mean'], p['bn1_var'])
    out = conv_relu_bn_pool(out, p['conv2_w'], p['conv2_b'],
                            p['bn2_gamma'], p['bn2_beta'],
                            p['bn2_mean'], p['bn2_var'])

    # NHWC (B, freq, frames, C) -> (frames, B, C*freq)  [matches
    # .view(B, C*freq, frames).permute(2, 0, 1) on the NCHW tensor]
    B, freq, frames, C = out.shape
    out = jnp.transpose(out, (2, 0, 3, 1)).reshape(frames, B, C * freq)

    h_all = lstm_forward(out, p['lstm_w_ih'], p['lstm_w_hh'],
                         p['lstm_b_ih'], p['lstm_b_hh'])          # (T, B, Hpad)
    T, B2, Hpad = h_all.shape

    # permute(1,0,2) -> Linear -> LogSoftmax(dim=2) -> permute(1,0,2):
    # per-row ops commute with the permutes, so compute on (T*B, Hpad) rows.
    lin_w_p = jnp.pad(p['lin_w'].T,
                      ((0, Hpad - p['lin_w'].shape[1]), (0, 0)))  # (Hpad, C)
    logp = _tiled_rowwise_matmul(_linear_logsoftmax_kernel,
                                 h_all.reshape(T * B2, Hpad),
                                 lin_w_p, p['lin_b'][None, :])
    return logp.reshape(T, B2, -1)                                # (T, B, classes)


# --------------------------- parameter creation ---------------------------

def init_params(key, first_filter, second_filter, lstm_in, lstm_out, num_classes):
    ks = jax.random.split(key, 20)
    n = lambda k, s, sc=0.1: sc * jax.random.normal(k, s, jnp.float32)
    p = {}
    p['conv1_w'] = n(ks[0], (first_filter, 1, 3, 3), 0.2)
    p['conv1_b'] = n(ks[1], (first_filter,))
    p['bn1_gamma'] = 1.0 + n(ks[2], (first_filter,))
    p['bn1_beta'] = n(ks[3], (first_filter,))
    p['bn1_mean'] = n(ks[4], (first_filter,))
    p['bn1_var'] = 0.5 + jax.random.uniform(ks[5], (first_filter,), jnp.float32)

    p['conv2_w'] = n(ks[6], (second_filter, first_filter, 3, 3), 0.2)
    p['conv2_b'] = n(ks[7], (second_filter,))
    p['bn2_gamma'] = 1.0 + n(ks[8], (second_filter,))
    p['bn2_beta'] = n(ks[9], (second_filter,))
    p['bn2_mean'] = n(ks[10], (second_filter,))
    p['bn2_var'] = 0.5 + jax.random.uniform(ks[11], (second_filter,), jnp.float32)

    p['lstm_w_ih'] = n(ks[12], (4 * lstm_out, lstm_in), 0.15)
    p['lstm_w_hh'] = n(ks[13], (4 * lstm_out, lstm_out), 0.15)
    p['lstm_b_ih'] = n(ks[14], (4 * lstm_out,))
    p['lstm_b_hh'] = n(ks[15], (4 * lstm_out,))

    p['lin_w'] = n(ks[16], (num_classes, lstm_out), 0.2)
    p['lin_b'] = n(ks[17], (num_classes,))
    return p


# ---------------------------------- main ----------------------------------

if __name__ == "__main__":
    # small synthetic config (the module's fixed (161, 101) spectrogram is
    # shrunk; lstm_in is derived from the actual input so the LSTM matches).
    B, Cin, H, W = 2, 1, 22, 38
    first_filter, second_filter = 4, 8
    lstm_out, num_classes = 32, 10

    def conv_out(hw, k, s=1):
        return ((hw[0] - k) // s + 1, (hw[1] - k) // s + 1)

    h, w = conv_out((H, W), 3)
    h, w = conv_out((h, w), 2, 2)
    h, w = conv_out((h, w), 3)
    h, w = conv_out((h, w), 2, 2)
    lstm_in = h * second_filter     # = 32
    frames = w                      # = 8

    key = jax.random.PRNGKey(0)
    kx, kp = jax.random.split(key)
    x = jax.random.normal(kx, (B, Cin, H, W), jnp.float32)
    params = init_params(kp, first_filter, second_filter,
                         lstm_in, lstm_out, num_classes)

    fwd = jax.jit(probnet_forward)
    out = fwd(x, params)
    out = jax.block_until_ready(out)

    assert out.shape == (frames, B, num_classes), out.shape
    assert bool(jnp.all(jnp.isfinite(out)))
    # log-softmax sanity: probabilities over classes sum to 1
    assert bool(jnp.allclose(jnp.exp(out).sum(axis=-1), 1.0, atol=1e-4))
    print("KERNEL_OK")
</pallas_src>

<mosaic_0001>
module attributes {stable_mosaic.version = 11 : i64} {
  func.func @_conv_bn_pool_kernel(%arg0: i32, %arg1: memref<360x9xf32, #tpu.memory_space<vmem>>, %arg2: memref<360x9xf32, #tpu.memory_space<vmem>>, %arg3: memref<360x9xf32, #tpu.memory_space<vmem>>, %arg4: memref<360x9xf32, #tpu.memory_space<vmem>>, %arg5: memref<9x4xf32, #tpu.memory_space<vmem>>, %arg6: memref<1x4xf32, #tpu.memory_space<vmem>>, %arg7: memref<1x4xf32, #tpu.memory_space<vmem>>, %arg8: memref<1x4xf32, #tpu.memory_space<vmem>>, %arg9: memref<360x4xf32, #tpu.memory_space<vmem>>) attributes {dimension_semantics = [#tpu.dimension_semantics<parallel>], iteration_bounds = array<i64: 1>, scalar_prefetch = 0 : i64, scratch_operands = 0 : i64, tpu.core_type = #tpu.core_type<tc>, window_params = [{transform_indices = @transform_0, window_bounds = array<i64: 360, 9>}, {transform_indices = @transform_1, window_bounds = array<i64: 360, 9>}, {transform_indices = @transform_2, window_bounds = array<i64: 360, 9>}, {transform_indices = @transform_3, window_bounds = array<i64: 360, 9>}, {pipeline_mode = #tpu.pipeline_mode<synchronous>, transform_indices = @transform_4, window_bounds = array<i64: 9, 4>}, {pipeline_mode = #tpu.pipeline_mode<synchronous>, transform_indices = @transform_5, window_bounds = array<i64: 1, 4>}, {pipeline_mode = #tpu.pipeline_mode<synchronous>, transform_indices = @transform_6, window_bounds = array<i64: 1, 4>}, {pipeline_mode = #tpu.pipeline_mode<synchronous>, transform_indices = @transform_7, window_bounds = array<i64: 1, 4>}, {transform_indices = @transform_8, window_bounds = array<i64: 360, 4>}]} {
    %c0 = arith.constant 0 : index
    %c0_0 = arith.constant 0 : index
    %0 = vector.load %arg5[%c0, %c0_0] : memref<9x4xf32, #tpu.memory_space<vmem>>, vector<9x4xf32>
    %c0_1 = arith.constant 0 : index
    %c0_2 = arith.constant 0 : index
    %1 = vector.load %arg6[%c0_1, %c0_2] : memref<1x4xf32, #tpu.memory_space<vmem>>, vector<1x4xf32>
    %c0_3 = arith.constant 0 : index
    %c0_4 = arith.constant 0 : index
    %2 = vector.load %arg7[%c0_3, %c0_4] : memref<1x4xf32, #tpu.memory_space<vmem>>, vector<1x4xf32>
    %c0_5 = arith.constant 0 : index
    %c0_6 = arith.constant 0 : index
    %3 = vector.load %arg8[%c0_5, %c0_6] : memref<1x4xf32, #tpu.memory_space<vmem>>, vector<1x4xf32>
    %c0_7 = arith.constant 0 : index
    %c0_8 = arith.constant 0 : index
    %4 = vector.load %arg1[%c0_7, %c0_8] : memref<360x9xf32, #tpu.memory_space<vmem>>, vector<360x9xf32>
    %cst = arith.constant dense<0.000000e+00> : vector<360x4xf32>
    %5 = tpu.matmul %4, %0, %cst {dimension_numbers = #tpu.dot_dimension_numbers<[1], [0], [0], [1], [0, 0, 1, 1], [], []>} : vector<360x9xf32>, vector<9x4xf32>, vector<360x4xf32> -> vector<360x4xf32>
    %6 = vector.broadcast %1 : vector<1x4xf32> to vector<360x4xf32>
    %7 = arith.addf %5, %6 : vector<360x4xf32>
    %cst_9 = arith.constant 0.000000e+00 : f32
    %8 = vector.broadcast %cst_9 : f32 to vector<360x4xf32>
    %9 = arith.maximumf %7, %8 : vector<360x4xf32>
    %10 = vector.broadcast %2 : vector<1x4xf32> to vector<360x4xf32>
    %11 = arith.mulf %9, %10 : vector<360x4xf32>
    %12 = vector.broadcast %3 : vector<1x4xf32> to vector<360x4xf32>
    %13 = arith.addf %11, %12 : vector<360x4xf32>
    %c0_10 = arith.constant 0 : index
    %c0_11 = arith.constant 0 : index
    %14 = vector.load %arg2[%c0_10, %c0_11] : memref<360x9xf32, #tpu.memory_space<vmem>>, vector<360x9xf32>
    %cst_12 = arith.constant dense<0.000000e+00> : vector<360x4xf32>
    %15 = tpu.matmul %14, %0, %cst_12 {dimension_numbers = #tpu.dot_dimension_numbers<[1], [0], [0], [1], [0, 0, 1, 1], [], []>} : vector<360x9xf32>, vector<9x4xf32>, vector<360x4xf32> -> vector<360x4xf32>
    %16 = vector.broadcast %1 : vector<1x4xf32> to vector<360x4xf32>
    %17 = arith.addf %15, %16 : vector<360x4xf32>
    %cst_13 = arith.constant 0.000000e+00 : f32
    %18 = vector.broadcast %cst_13 : f32 to vector<360x4xf32>
    %19 = arith.maximumf %17, %18 : vector<360x4xf32>
    %20 = vector.broadcast %2 : vector<1x4xf32> to vector<360x4xf32>
    %21 = arith.mulf %19, %20 : vector<360x4xf32>
    %22 = vector.broadcast %3 : vector<1x4xf32> to vector<360x4xf32>
    %23 = arith.addf %21, %22 : vector<360x4xf32>
    %24 = arith.maximumf %13, %23 : vector<360x4xf32>
    %c0_14 = arith.constant 0 : index
    %c0_15 = arith.constant 0 : index
    %25 = vector.load %arg3[%c0_14, %c0_15] : memref<360x9xf32, #tpu.memory_space<vmem>>, vector<360x9xf32>
    %cst_16 = arith.constant dense<0.000000e+00> : vector<360x4xf32>
    %26 = tpu.matmul %25, %0, %cst_16 {dimension_numbers = #tpu.dot_dimension_numbers<[1], [0], [0], [1], [0, 0, 1, 1], [], []>} : vector<360x9xf32>, vector<9x4xf32>, vector<360x4xf32> -> vector<360x4xf32>
    %27 = vector.broadcast %1 : vector<1x4xf32> to vector<360x4xf32>
    %28 = arith.addf %26, %27 : vector<360x4xf32>
    %cst_17 = arith.constant 0.000000e+00 : f32
    %29 = vector.broadcast %cst_17 : f32 to vector<360x4xf32>
    %30 = arith.maximumf %28, %29 : vector<360x4xf32>
    %31 = vector.broadcast %2 : vector<1x4xf32> to vector<360x4xf32>
    %32 = arith.mulf %30, %31 : vector<360x4xf32>
    %33 = vector.broadcast %3 : vector<1x4xf32> to vector<360x4xf32>
    %34 = arith.addf %32, %33 : vector<360x4xf32>
    %c0_18 = arith.constant 0 : index
    %c0_19 = arith.constant 0 : index
    %35 = vector.load %arg4[%c0_18, %c0_19] : memref<360x9xf32, #tpu.memory_space<vmem>>, vector<360x9xf32>
    %cst_20 = arith.constant dense<0.000000e+00> : vector<360x4xf32>
    %36 = tpu.matmul %35, %0, %cst_20 {dimension_numbers = #tpu.dot_dimension_numbers<[1], [0], [0], [1], [0, 0, 1, 1], [], []>} : vector<360x9xf32>, vector<9x4xf32>, vector<360x4xf32> -> vector<360x4xf32>
    %37 = vector.broadcast %1 : vector<1x4xf32> to vector<360x4xf32>
    %38 = arith.addf %36, %37 : vector<360x4xf32>
    %cst_21 = arith.constant 0.000000e+00 : f32
    %39 = vector.broadcast %cst_21 : f32 to vector<360x4xf32>
    %40 = arith.maximumf %38, %39 : vector<360x4xf32>
    %41 = vector.broadcast %2 : vector<1x4xf32> to vector<360x4xf32>
    %42 = arith.mulf %40, %41 : vector<360x4xf32>
    %43 = vector.broadcast %3 : vector<1x4xf32> to vector<360x4xf32>
    %44 = arith.addf %42, %43 : vector<360x4xf32>
    %45 = arith.maximumf %34, %44 : vector<360x4xf32>
    %46 = arith.maximumf %24, %45 : vector<360x4xf32>
    %c0_22 = arith.constant 0 : index
    %c0_23 = arith.constant 0 : index
    %47 = vector.load %arg9[%c0_22, %c0_23] : memref<360x4xf32, #tpu.memory_space<vmem>>, vector<360x4xf32>
    tpu.vector_store %arg9[%c0_22, %c0_23], %46 {strides = array<i32>} : memref<360x4xf32, #tpu.memory_space<vmem>>, vector<360x4xf32>,
    return
  }
  func.func @transform_0(%arg0: i32) -> (i32, i32) {
    %c0_i32 = arith.constant 0 : i32
    %c0_i32_0 = arith.constant 0 : i32
    return %arg0, %c0_i32 : i32, i32
  }
  func.func @transform_1(%arg0: i32) -> (i32, i32) {
    %c0_i32 = arith.constant 0 : i32
    %c0_i32_0 = arith.constant 0 : i32
    return %arg0, %c0_i32 : i32, i32
  }
  func.func @transform_2(%arg0: i32) -> (i32, i32) {
    %c0_i32 = arith.constant 0 : i32
    %c0_i32_0 = arith.constant 0 : i32
    return %arg0, %c0_i32 : i32, i32
  }
  func.func @transform_3(%arg0: i32) -> (i32, i32) {
    %c0_i32 = arith.constant 0 : i32
    %c0_i32_0 = arith.constant 0 : i32
    return %arg0, %c0_i32 : i32, i32
  }
  func.func @transform_4(%arg0: i32) -> (i32, i32) {
    %c0_i32 = arith.constant 0 : i32
    %c0_i32_0 = arith.constant 0 : i32
    %c0_i32_1 = arith.constant 0 : i32
    return %c0_i32, %c0_i32_0 : i32, i32
  }
  func.func @transform_5(%arg0: i32) -> (i32, i32) {
    %c0_i32 = arith.constant 0 : i32
    %c0_i32_0 = arith.constant 0 : i32
    %c0_i32_1 = arith.constant 0 : i32
    return %c0_i32, %c0_i32_0 : i32, i32
  }
  func.func @transform_6(%arg0: i32) -> (i32, i32) {
    %c0_i32 = arith.constant 0 : i32
    %c0_i32_0 = arith.constant 0 : i32
    %c0_i32_1 = arith.constant 0 : i32
    return %c0_i32, %c0_i32_0 : i32, i32
  }
  func.func @transform_7(%arg0: i32) -> (i32, i32) {
    %c0_i32 = arith.constant 0 : i32
    %c0_i32_0 = arith.constant 0 : i32
    %c0_i32_1 = arith.constant 0 : i32
    return %c0_i32, %c0_i32_0 : i32, i32
  }
  func.func @transform_8(%arg0: i32) -> (i32, i32) {
    %c0_i32 = arith.constant 0 : i32
    %c0_i32_0 = arith.constant 0 : i32
    return %arg0, %c0_i32 : i32, i32
  }
}

module attributes {stable_mosaic.version = 11 : i64} {
  func.func @_conv_bn_pool_kernel(%arg0: i32, %arg1: memref<64x36xf32, #tpu.memory_space<vmem>>, %arg2: memref<64x36xf32, #tpu.memory_space<vmem>>, %arg3: memref<64x36xf32, #tpu.memory_space<vmem>>, %arg4: memref<64x36xf32, #tpu.memory_space<vmem>>, %arg5: memref<36x8xf32, #tpu.memory_space<vmem>>, %arg6: memref<1x8xf32, #tpu.memory_space<vmem>>, %arg7: memref<1x8xf32, #tpu.memory_space<vmem>>, %arg8: memref<1x8xf32, #tpu.memory_space<vmem>>, %arg9: memref<64x8xf32, #tpu.memory_space<vmem>>) attributes {dimension_semantics = [#tpu.dimension_semantics<parallel>], iteration_bounds = array<i64: 1>, scalar_prefetch = 0 : i64, scratch_operands = 0 : i64, tpu.core_type = #tpu.core_type<tc>, window_params = [{transform_indices = @transform_0, window_bounds = array<i64: 64, 36>}, {transform_indices = @transform_1, window_bounds = array<i64: 64, 36>}, {transform_indices = @transform_2, window_bounds = array<i64: 64, 36>}, {transform_indices = @transform_3, window_bounds = array<i64: 64, 36>}, {pipeline_mode = #tpu.pipeline_mode<synchronous>, transform_indices = @transform_4, window_bounds = array<i64: 36, 8>}, {pipeline_mode = #tpu.pipeline_mode<synchronous>, transform_indices = @transform_5, window_bounds = array<i64: 1, 8>}, {pipeline_mode = #tpu.pipeline_mode<synchronous>, transform_indices = @transform_6, window_bounds = array<i64: 1, 8>}, {pipeline_mode = #tpu.pipeline_mode<synchronous>, transform_indices = @transform_7, window_bounds = array<i64: 1, 8>}, {transform_indices = @transform_8, window_bounds = array<i64: 64, 8>}]} {
    %c0 = arith.constant 0 : index
    %c0_0 = arith.constant 0 : index
    %0 = vector.load %arg5[%c0, %c0_0] : memref<36x8xf32, #tpu.memory_space<vmem>>, vector<36x8xf32>
    %c0_1 = arith.constant 0 : index
    %c0_2 = arith.constant 0 : index
    %1 = vector.load %arg6[%c0_1, %c0_2] : memref<1x8xf32, #tpu.memory_space<vmem>>, vector<1x8xf32>
    %c0_3 = arith.constant 0 : index
    %c0_4 = arith.constant 0 : index
    %2 = vector.load %arg7[%c0_3, %c0_4] : memref<1x8xf32, #tpu.memory_space<vmem>>, vector<1x8xf32>
    %c0_5 = arith.constant 0 : index
    %c0_6 = arith.constant 0 : index
    %3 = vector.load %arg8[%c0_5, %c0_6] : memref<1x8xf32, #tpu.memory_space<vmem>>, vector<1x8xf32>
    %c0_7 = arith.constant 0 : index
    %c0_8 = arith.constant 0 : index
    %4 = vector.load %arg1[%c0_7, %c0_8] : memref<64x36xf32, #tpu.memory_space<vmem>>, vector<64x36xf32>
    %cst = arith.constant dense<0.000000e+00> : vector<64x8xf32>
    %5 = tpu.matmul %4, %0, %cst {dimension_numbers = #tpu.dot_dimension_numbers<[1], [0], [0], [1], [0, 0, 1, 1], [], []>} : vector<64x36xf32>, vector<36x8xf32>, vector<64x8xf32> -> vector<64x8xf32>
    %6 = vector.broadcast %1 : vector<1x8xf32> to vector<64x8xf32>
    %7 = arith.addf %5, %6 : vector<64x8xf32>
    %cst_9 = arith.constant 0.000000e+00 : f32
    %8 = vector.broadcast %cst_9 : f32 to vector<64x8xf32>
    %9 = arith.maximumf %7, %8 : vector<64x8xf32>
    %10 = vector.broadcast %2 : vector<1x8xf32> to vector<64x8xf32>
    %11 = arith.mulf %9, %10 : vector<64x8xf32>
    %12 = vector.broadcast %3 : vector<1x8xf32> to vector<64x8xf32>
    %13 = arith.addf %11, %12 : vector<64x8xf32>
    %c0_10 = arith.constant 0 : index
    %c0_11 = arith.constant 0 : index
    %14 = vector.load %arg2[%c0_10, %c0_11] : memref<64x36xf32, #tpu.memory_space<vmem>>, vector<64x36xf32>
    %cst_12 = arith.constant dense<0.000000e+00> : vector<64x8xf32>
    %15 = tpu.matmul %14, %0, %cst_12 {dimension_numbers = #tpu.dot_dimension_numbers<[1], [0], [0], [1], [0, 0, 1, 1], [], []>} : vector<64x36xf32>, vector<36x8xf32>, vector<64x8xf32> -> vector<64x8xf32>
    %16 = vector.broadcast %1 : vector<1x8xf32> to vector<64x8xf32>
    %17 = arith.addf %15, %16 : vector<64x8xf32>
    %cst_13 = arith.constant 0.000000e+00 : f32
    %18 = vector.broadcast %cst_13 : f32 to vector<64x8xf32>
    %19 = arith.maximumf %17, %18 : vector<64x8xf32>
    %20 = vector.broadcast %2 : vector<1x8xf32> to vector<64x8xf32>
    %21 = arith.mulf %19, %20 : vector<64x8xf32>
    %22 = vector.broadcast %3 : vector<1x8xf32> to vector<64x8xf32>
    %23 = arith.addf %21, %22 : vector<64x8xf32>
    %24 = arith.maximumf %13, %23 : vector<64x8xf32>
    %c0_14 = arith.constant 0 : index
    %c0_15 = arith.constant 0 : index
    %25 = vector.load %arg3[%c0_14, %c0_15] : memref<64x36xf32, #tpu.memory_space<vmem>>, vector<64x36xf32>
    %cst_16 = arith.constant dense<0.000000e+00> : vector<64x8xf32>
    %26 = tpu.matmul %25, %0, %cst_16 {dimension_numbers = #tpu.dot_dimension_numbers<[1], [0], [0], [1], [0, 0, 1, 1], [], []>} : vector<64x36xf32>, vector<36x8xf32>, vector<64x8xf32> -> vector<64x8xf32>
    %27 = vector.broadcast %1 : vector<1x8xf32> to vector<64x8xf32>
    %28 = arith.addf %26, %27 : vector<64x8xf32>
    %cst_17 = arith.constant 0.000000e+00 : f32
    %29 = vector.broadcast %cst_17 : f32 to vector<64x8xf32>
    %30 = arith.maximumf %28, %29 : vector<64x8xf32>
    %31 = vector.broadcast %2 : vector<1x8xf32> to vector<64x8xf32>
    %32 = arith.mulf %30, %31 : vector<64x8xf32>
    %33 = vector.broadcast %3 : vector<1x8xf32> to vector<64x8xf32>
    %34 = arith.addf %32, %33 : vector<64x8xf32>
    %c0_18 = arith.constant 0 : index
    %c0_19 = arith.constant 0 : index
    %35 = vector.load %arg4[%c0_18, %c0_19] : memref<64x36xf32, #tpu.memory_space<vmem>>, vector<64x36xf32>
    %cst_20 = arith.constant dense<0.000000e+00> : vector<64x8xf32>
    %36 = tpu.matmul %35, %0, %cst_20 {dimension_numbers = #tpu.dot_dimension_numbers<[1], [0], [0], [1], [0, 0, 1, 1], [], []>} : vector<64x36xf32>, vector<36x8xf32>, vector<64x8xf32> -> vector<64x8xf32>
    %37 = vector.broadcast %1 : vector<1x8xf32> to vector<64x8xf32>
    %38 = arith.addf %36, %37 : vector<64x8xf32>
    %cst_21 = arith.constant 0.000000e+00 : f32
    %39 = vector.broadcast %cst_21 : f32 to vector<64x8xf32>
    %40 = arith.maximumf %38, %39 : vector<64x8xf32>
    %41 = vector.broadcast %2 : vector<1x8xf32> to vector<64x8xf32>
    %42 = arith.mulf %40, %41 : vector<64x8xf32>
    %43 = vector.broadcast %3 : vector<1x8xf32> to vector<64x8xf32>
    %44 = arith.addf %42, %43 : vector<64x8xf32>
    %45 = arith.maximumf %34, %44 : vector<64x8xf32>
    %46 = arith.maximumf %24, %45 : vector<64x8xf32>
    %c0_22 = arith.constant 0 : index
    %c0_23 = arith.constant 0 : index
    %47 = vector.load %arg9[%c0_22, %c0_23] : memref<64x8xf32, #tpu.memory_space<vmem>>, vector<64x8xf32>
    tpu.vector_store %arg9[%c0_22, %c0_23], %46 {strides = array<i32>} : memref<64x8xf32, #tpu.memory_space<vmem>>, vector<64x8xf32>,
    return
  }
  func.func @transform_0(%arg0: i32) -> (i32, i32) {
    %c0_i32 = arith.constant 0 : i32
    %c0_i32_0 = arith.constant 0 : i32
    return %arg0, %c0_i32 : i32, i32
  }
  func.func @transform_1(%arg0: i32) -> (i32, i32) {
    %c0_i32 = arith.constant 0 : i32
    %c0_i32_0 = arith.constant 0 : i32
    return %arg0, %c0_i32 : i32, i32
  }
  func.func @transform_2(%arg0: i32) -> (i32, i32) {
    %c0_i32 = arith.constant 0 : i32
    %c0_i32_0 = arith.constant 0 : i32
    return %arg0, %c0_i32 : i32, i32
  }
  func.func @transform_3(%arg0: i32) -> (i32, i32) {
    %c0_i32 = arith.constant 0 : i32
    %c0_i32_0 = arith.constant 0 : i32
    return %arg0, %c0_i32 : i32, i32
  }
  func.func @transform_4(%arg0: i32) -> (i32, i32) {
    %c0_i32 = arith.constant 0 : i32
    %c0_i32_0 = arith.constant 0 : i32
    %c0_i32_1 = arith.constant 0 : i32
    return %c0_i32, %c0_i32_0 : i32, i32
  }
  func.func @transform_5(%arg0: i32) -> (i32, i32) {
    %c0_i32 = arith.constant 0 : i32
    %c0_i32_0 = arith.constant 0 : i32
    %c0_i32_1 = arith.constant 0 : i32
    return %c0_i32, %c0_i32_0 : i32, i32
  }
  func.func @transform_6(%arg0: i32) -> (i32, i32) {
    %c0_i32 = arith.constant 0 : i32
    %c0_i32_0 = arith.constant 0 : i32
    %c0_i32_1 = arith.constant 0 : i32
    return %c0_i32, %c0_i32_0 : i32, i32
  }
  func.func @transform_7(%arg0: i32) -> (i32, i32) {
    %c0_i32 = arith.constant 0 : i32
    %c0_i32_0 = arith.constant 0 : i32
    %c0_i32_1 = arith.constant 0 : i32
    return %c0_i32, %c0_i32_0 : i32, i32
  }
  func.func @transform_8(%arg0: i32) -> (i32, i32) {
    %c0_i32 = arith.constant 0 : i32
    %c0_i32_0 = arith.constant 0 : i32
    return %arg0, %c0_i32 : i32, i32
  }
}

module attributes {stable_mosaic.version = 11 : i64} {
  func.func @_matmul_bias_kernel(%arg0: i32, %arg1: memref<16x32xf32, #tpu.memory_space<vmem>>, %arg2: memref<32x512xf32, #tpu.memory_space<vmem>>, %arg3: memref<1x512xf32, #tpu.memory_space<vmem>>, %arg4: memref<16x512xf32, #tpu.memory_space<vmem>>) attributes {dimension_semantics = [#tpu.dimension_semantics<parallel>], iteration_bounds = array<i64: 1>, scalar_prefetch = 0 : i64, scratch_operands = 0 : i64, tpu.core_type = #tpu.core_type<tc>, window_params = [{transform_indices = @transform_0, window_bounds = array<i64: 16, 32>}, {pipeline_mode = #tpu.pipeline_mode<synchronous>, transform_indices = @transform_1, window_bounds = array<i64: 32, 512>}, {pipeline_mode = #tpu.pipeline_mode<synchronous>, transform_indices = @transform_2, window_bounds = array<i64: 1, 512>}, {transform_indices = @transform_3, window_bounds = array<i64: 16, 512>}]} {
    %c0 = arith.constant 0 : index
    %c0_0 = arith.constant 0 : index
    %0 = vector.load %arg1[%c0, %c0_0] : memref<16x32xf32, #tpu.memory_space<vmem>>, vector<16x32xf32>
    %c0_1 = arith.constant 0 : index
    %c0_2 = arith.constant 0 : index
    %1 = vector.load %arg2[%c0_1, %c0_2] : memref<32x512xf32, #tpu.memory_space<vmem>>, vector<32x512xf32>
    %cst = arith.constant dense<0.000000e+00> : vector<16x512xf32>
    %2 = tpu.matmul %0, %1, %cst {dimension_numbers = #tpu.dot_dimension_numbers<[1], [0], [0], [1], [0, 0, 1, 1], [], []>} : vector<16x32xf32>, vector<32x512xf32>, vector<16x512xf32> -> vector<16x512xf32>
    %c0_3 = arith.constant 0 : index
    %c0_4 = arith.constant 0 : index
    %3 = vector.load %arg3[%c0_3, %c0_4] : memref<1x512xf32, #tpu.memory_space<vmem>>, vector<1x512xf32>
    %4 = vector.broadcast %3 : vector<1x512xf32> to vector<16x512xf32>
    %5 = arith.addf %2, %4 : vector<16x512xf32>
    %c0_5 = arith.constant 0 : index
    %c0_6 = arith.constant 0 : index
    %6 = vector.load %arg4[%c0_5, %c0_6] : memref<16x512xf32, #tpu.memory_space<vmem>>, vector<16x512xf32>
    tpu.vector_store %arg4[%c0_5, %c0_6], %5 {strides = array<i32>} : memref<16x512xf32, #tpu.memory_space<vmem>>, vector<16x512xf32>,
    return
  }
  func.func @transform_0(%arg0: i32) -> (i32, i32) {
    %c0_i32 = arith.constant 0 : i32
    %c0_i32_0 = arith.constant 0 : i32
    return %arg0, %c0_i32 : i32, i32
  }
  func.func @transform_1(%arg0: i32) -> (i32, i32) {
    %c0_i32 = arith.constant 0 : i32
    %c0_i32_0 = arith.constant 0 : i32
    %c0_i32_1 = arith.constant 0 : i32
    return %c0_i32, %c0_i32_0 : i32, i32
  }
  func.func @transform_2(%arg0: i32) -> (i32, i32) {
    %c0_i32 = arith.constant 0 : i32
    %c0_i32_0 = arith.constant 0 : i32
    %c0_i32_1 = arith.constant 0 : i32
    return %c0_i32, %c0_i32_0 : i32, i32
  }
  func.func @transform_3(%arg0: i32) -> (i32, i32) {
    %c0_i32 = arith.constant 0 : i32
    %c0_i32_0 = arith.constant 0 : i32
    return %arg0, %c0_i32 : i32, i32
  }
}

module attributes {stable_mosaic.version = 11 : i64} {
  func.func @_lstm_recurrent_kernel(%arg0: memref<8x2x512xf32, #tpu.memory_space<vmem>>, %arg1: memref<128x512xf32, #tpu.memory_space<vmem>>, %arg2: memref<8x2x128xf32, #tpu.memory_space<vmem>>) attributes {dimension_semantics = [], scalar_prefetch = 0 : i64, scratch_operands = 0 : i64, tpu.core_type = #tpu.core_type<tc>} {
    %c0 = arith.constant 0 : index
    %c0_0 = arith.constant 0 : index
    %0 = vector.load %arg1[%c0, %c0_0] : memref<128x512xf32, #tpu.memory_space<vmem>>, vector<128x512xf32>
    %cst = arith.constant 0.000000e+00 : f32
    %1 = vector.broadcast %cst : f32 to vector<2x128xf32>
    %cst_1 = arith.constant 0.000000e+00 : f32
    %2 = vector.broadcast %cst_1 : f32 to vector<2x128xf32>
    %c0_i32 = arith.constant 0 : i32
    %c8_i32 = arith.constant 8 : i32
    %3 = arith.addi %c0_i32, %c8_i32 : i32
    %c1_i32 = arith.constant 1 : i32
    %4:2 = scf.for %arg3 = %c0_i32 to %3 step %c1_i32 iter_args(%arg4 = %1, %arg5 = %2) -> (vector<2x128xf32>, vector<2x128xf32>)  : i32 {
      %5 = arith.index_cast %arg3 : i32 to index
      %c0_3 = arith.constant 0 : index
      %c0_4 = arith.constant 0 : index
      %6 = vector.load %arg0[%5, %c0_3, %c0_4] : memref<8x2x512xf32, #tpu.memory_space<vmem>>, vector<1x2x512xf32>
      %7 = vector.shape_cast %6 : vector<1x2x512xf32> to vector<2x512xf32>
      %cst_5 = arith.constant dense<0.000000e+00> : vector<2x512xf32>
      %8 = tpu.matmul %arg4, %0, %cst_5 {dimension_numbers = #tpu.dot_dimension_numbers<[1], [0], [0], [1], [0, 0, 1, 1], [], []>} : vector<2x128xf32>, vector<128x512xf32>, vector<2x512xf32> -> vector<2x512xf32>
      %9 = arith.addf %7, %8 : vector<2x512xf32>
      %10 = vector.extract_strided_slice %9 {offsets = [0, 0], sizes = [2, 128], strides = [1, 1]} : vector<2x512xf32> to vector<2x128xf32>
      %11 = arith.negf %10 : vector<2x128xf32>
      %12 = math.exp %11 : vector<2x128xf32>
      %cst_6 = arith.constant 1.000000e+00 : f32
      %13 = vector.broadcast %cst_6 : f32 to vector<2x128xf32>
      %14 = arith.addf %13, %12 : vector<2x128xf32>
      %15 = arith.divf %13, %14 : vector<2x128xf32>
      %16 = vector.extract_strided_slice %9 {offsets = [0, 128], sizes = [2, 128], strides = [1, 1]} : vector<2x512xf32> to vector<2x128xf32>
      %17 = arith.negf %16 : vector<2x128xf32>
      %18 = math.exp %17 : vector<2x128xf32>
      %cst_7 = arith.constant 1.000000e+00 : f32
      %19 = vector.broadcast %cst_7 : f32 to vector<2x128xf32>
      %20 = arith.addf %19, %18 : vector<2x128xf32>
      %21 = arith.divf %19, %20 : vector<2x128xf32>
      %22 = vector.extract_strided_slice %9 {offsets = [0, 256], sizes = [2, 128], strides = [1, 1]} : vector<2x512xf32> to vector<2x128xf32>
      %23 = math.tanh %22 : vector<2x128xf32>
      %24 = vector.extract_strided_slice %9 {offsets = [0, 384], sizes = [2, 128], strides = [1, 1]} : vector<2x512xf32> to vector<2x128xf32>
      %25 = arith.negf %24 : vector<2x128xf32>
      %26 = math.exp %25 : vector<2x128xf32>
      %cst_8 = arith.constant 1.000000e+00 : f32
      %27 = vector.broadcast %cst_8 : f32 to vector<2x128xf32>
      %28 = arith.addf %27, %26 : vector<2x128xf32>
      %29 = arith.divf %27, %28 : vector<2x128xf32>
      %30 = arith.mulf %21, %arg5 : vector<2x128xf32>
      %31 = arith.mulf %15, %23 : vector<2x128xf32>
      %32 = arith.addf %30, %31 : vector<2x128xf32>
      %33 = math.tanh %32 : vector<2x128xf32>
      %34 = arith.mulf %29, %33 : vector<2x128xf32>
      %35 = arith.index_cast %arg3 : i32 to index
      %c0_9 = arith.constant 0 : index
      %c0_10 = arith.constant 0 : index
      %36 = vector.load %arg2[%35, %c0_9, %c0_10] : memref<8x2x128xf32, #tpu.memory_space<vmem>>, vector<1x2x128xf32>
      %37 = vector.shape_cast %36 : vector<1x2x128xf32> to vector<2x128xf32>
      %38 = vector.shape_cast %34 : vector<2x128xf32> to vector<1x2x128xf32>
      tpu.vector_store %arg2[%35, %c0_9, %c0_10], %38 {strides = array<i32>} : memref<8x2x128xf32, #tpu.memory_space<vmem>>, vector<1x2x128xf32>,
      scf.yield %34, %32 : vector<2x128xf32>, vector<2x128xf32>
    }
    %c8_i32_2 = arith.constant 8 : i32
    return
  }
}

module attributes {stable_mosaic.version = 11 : i64} {
  func.func @_linear_logsoftmax_kernel(%arg0: i32, %arg1: memref<16x128xf32, #tpu.memory_space<vmem>>, %arg2: memref<128x10xf32, #tpu.memory_space<vmem>>, %arg3: memref<1x10xf32, #tpu.memory_space<vmem>>, %arg4: memref<16x10xf32, #tpu.memory_space<vmem>>) attributes {dimension_semantics = [#tpu.dimension_semantics<parallel>], iteration_bounds = array<i64: 1>, scalar_prefetch = 0 : i64, scratch_operands = 0 : i64, tpu.core_type = #tpu.core_type<tc>, window_params = [{transform_indices = @transform_0, window_bounds = array<i64: 16, 128>}, {pipeline_mode = #tpu.pipeline_mode<synchronous>, transform_indices = @transform_1, window_bounds = array<i64: 128, 10>}, {pipeline_mode = #tpu.pipeline_mode<synchronous>, transform_indices = @transform_2, window_bounds = array<i64: 1, 10>}, {transform_indices = @transform_3, window_bounds = array<i64: 16, 10>}]} {
    %c0 = arith.constant 0 : index
    %c0_0 = arith.constant 0 : index
    %0 = vector.load %arg1[%c0, %c0_0] : memref<16x128xf32, #tpu.memory_space<vmem>>, vector<16x128xf32>
    %c0_1 = arith.constant 0 : index
    %c0_2 = arith.constant 0 : index
    %1 = vector.load %arg2[%c0_1, %c0_2] : memref<128x10xf32, #tpu.memory_space<vmem>>, vector<128x10xf32>
    %cst = arith.constant dense<0.000000e+00> : vector<16x10xf32>
    %2 = tpu.matmul %0, %1, %cst {dimension_numbers = #tpu.dot_dimension_numbers<[1], [0], [0], [1], [0, 0, 1, 1], [], []>} : vector<16x128xf32>, vector<128x10xf32>, vector<16x10xf32> -> vector<16x10xf32>
    %c0_3 = arith.constant 0 : index
    %c0_4 = arith.constant 0 : index
    %3 = vector.load %arg3[%c0_3, %c0_4] : memref<1x10xf32, #tpu.memory_space<vmem>>, vector<1x10xf32>
    %4 = vector.broadcast %3 : vector<1x10xf32> to vector<16x10xf32>
    %5 = arith.addf %2, %4 : vector<16x10xf32>
    %cst_5 = arith.constant dense<0xFF800000> : vector<16xf32>
    %6 = vector.multi_reduction <maximumf>, %5, %cst_5 [1] : vector<16x10xf32> to vector<16xf32>
    %7 = vector.shape_cast %6 : vector<16xf32> to vector<16x1xf32>
    %8 = vector.broadcast %7 : vector<16x1xf32> to vector<16x10xf32>
    %9 = arith.subf %5, %8 : vector<16x10xf32>
    %10 = math.exp %9 : vector<16x10xf32>
    %cst_6 = arith.constant dense<0.000000e+00> : vector<16xf32>
    %11 = vector.multi_reduction <add>, %10, %cst_6 [1] : vector<16x10xf32> to vector<16xf32>
    %12 = vector.shape_cast %11 : vector<16xf32> to vector<16x1xf32>
    %13 = math.log %12 : vector<16x1xf32>
    %14 = vector.broadcast %13 : vector<16x1xf32> to vector<16x10xf32>
    %15 = arith.subf %9, %14 : vector<16x10xf32>
    %c0_7 = arith.constant 0 : index
    %c0_8 = arith.constant 0 : index
    %16 = vector.load %arg4[%c0_7, %c0_8] : memref<16x10xf32, #tpu.memory_space<vmem>>, vector<16x10xf32>
    tpu.vector_store %arg4[%c0_7, %c0_8], %15 {strides = array<i32>} : memref<16x10xf32, #tpu.memory_space<vmem>>, vector<16x10xf32>,
    return
  }
  func.func @transform_0(%arg0: i32) -> (i32, i32) {
    %c0_i32 = arith.constant 0 : i32
    %c0_i32_0 = arith.constant 0 : i32
    return %arg0, %c0_i32 : i32, i32
  }
  func.func @transform_1(%arg0: i32) -> (i32, i32) {
    %c0_i32 = arith.constant 0 : i32
    %c0_i32_0 = arith.constant 0 : i32
    %c0_i32_1 = arith.constant 0 : i32
    return %c0_i32, %c0_i32_0 : i32, i32
  }
  func.func @transform_2(%arg0: i32) -> (i32, i32) {
    %c0_i32 = arith.constant 0 : i32
    %c0_i32_0 = arith.constant 0 : i32
    %c0_i32_1 = arith.constant 0 : i32
    return %c0_i32, %c0_i32_0 : i32, i32
  }
  func.func @transform_3(%arg0: i32) -> (i32, i32) {
    %c0_i32 = arith.constant 0 : i32
    %c0_i32_0 = arith.constant 0 : i32
    return %arg0, %c0_i32 : i32, i32
  }
}

</mosaic_0001>

<llo_original>
// kernel: probnet_forward.6
$region0: #{probnet_forward.6}
  #allocation0 [shape = 'u32[]', space=smem, size = 0x4, offset = 0x4, fixed_abs, tag = 'smem constant byte address 0x4 - core index']
  #allocation1 [shape = 'u32[72,128]{1,0:T(1,128)}', space=vmem, size = 0x9000, scoped, tag = 'internal scratch']
  %s0 = inlined_call_operand.vmem [shape: f32[64,36], index: 0, kind: input, shape index: {}]
  %s1 = inlined_call_operand.vmem [shape: f32[64,36], index: 1, kind: input, shape index: {}]
  %s2 = inlined_call_operand.vmem [shape: f32[64,36], index: 2, kind: input, shape index: {}]
  %s3 = inlined_call_operand.vmem [shape: f32[64,36], index: 3, kind: input, shape index: {}]
  %s4 = inlined_call_operand.vmem [shape: f32[36,8], index: 4, kind: input, shape index: {}]
  %s5 = inlined_call_operand.vmem [shape: f32[1,8], index: 5, kind: input, shape index: {}]
  %s6 = inlined_call_operand.vmem [shape: f32[1,8], index: 6, kind: input, shape index: {}]
  %s7 = inlined_call_operand.vmem [shape: f32[1,8], index: 7, kind: input, shape index: {}]
  %s8 = inlined_call_operand.vmem [shape: f32[64,8], index: 8, kind: output, shape index: {}]
  %s9 = sld [smem:[#allocation0]]
  $region42: #{probnet_forward.6} parent=0
    _
  %s11 = ssub.s32 1, %s9
  %s12 = scalar_select 0, %s11, %s9
  // Predicated region
  $region2: #{probnet_forward.6} parent=0 // pred_check
    _
  $region3: #{probnet_forward.6} parent=0 // pred_check_branch
    %14 = sbr.rel (0) target = $region5
  $region4: #{probnet_forward.6} parent=0 // pred_region
    _
  $region5: #{probnet_forward.6} parent=0 // pred_fallthru
    _
  // Predicated region
  $region6: #{probnet_forward.6} parent=0 // pred_check
    _
  $region7: #{probnet_forward.6} parent=0 // pred_check_branch
    %16 = sbr.rel (0) target = $region9
  $region8: #{probnet_forward.6} parent=0 // pred_region
    _
  $region9: #{probnet_forward.6} parent=0 // pred_fallthru
    _
  // Predicated region
  $region10: #{probnet_forward.6} parent=0 // pred_check
    _
  $region11: #{probnet_forward.6} parent=0 // pred_check_branch
    %18 = sbr.rel (0) target = $region13
  $region12: #{probnet_forward.6} parent=0 // pred_region
    _
  $region13: #{probnet_forward.6} parent=0 // pred_fallthru
    _
  // Predicated region
  $region14: #{probnet_forward.6} parent=0 // pred_check
    _
  $region15: #{probnet_forward.6} parent=0 // pred_check_branch
    %20 = sbr.rel (0) target = $region17
  $region16: #{probnet_forward.6} parent=0 // pred_region
    _
  $region17: #{probnet_forward.6} parent=0 // pred_fallthru
    _
  // Predicated region
  $region18: #{probnet_forward.6} parent=0 // pred_check
    _
  $region19: #{probnet_forward.6} parent=0 // pred_check_branch
    %22 = sbr.rel (0) target = $region21
  $region20: #{probnet_forward.6} parent=0 // pred_region
    _
  $region21: #{probnet_forward.6} parent=0 // pred_fallthru
    _
  // Predicated region
  $region22: #{probnet_forward.6} parent=0 // pred_check
    _
  $region23: #{probnet_forward.6} parent=0 // pred_check_branch
    %24 = sbr.rel (0) target = $region25
  $region24: #{probnet_forward.6} parent=0 // pred_region
    _
  $region25: #{probnet_forward.6} parent=0 // pred_fallthru
    _
  // Predicated region
  $region26: #{probnet_forward.6} parent=0 // pred_check
    _
  $region27: #{probnet_forward.6} parent=0 // pred_check_branch
    %26 = sbr.rel (0) target = $region29
  $region28: #{probnet_forward.6} parent=0 // pred_region
    _
  $region29: #{probnet_forward.6} parent=0 // pred_fallthru
    _
  // Predicated region
  $region30: #{probnet_forward.6} parent=0 // pred_check
    _
  $region31: #{probnet_forward.6} parent=0 // pred_check_branch
    %28 = sbr.rel (0) target = $region33
  $region32: #{probnet_forward.6} parent=0 // pred_region
    _
  $region33: #{probnet_forward.6} parent=0 // pred_fallthru
    _
  %v29 = vld [vmem:[%s4] sm:$0xff]
  %v30 = vld [vmem:[%s4 + $0x8] sm:$0xff]
  %v31 = vld [vmem:[%s4 + $0x10] sm:$0xff]
  %v32 = vld [vmem:[%s4 + $0x18] sm:$0xff]
  %v33 = vld [vmem:[%s4 + $0x20] sm:$0xf]
  %v34 = vld [vmem:[%s5] sm:$0x1]
  %v35 = vld [vmem:[%s6] sm:$0x1]
  %v36 = vld [vmem:[%s7] sm:$0x1]
  %v37 = vld [vmem:[%s0] sm:$0xff]
  %v38 = vld [vmem:[%s0 + $0x8] sm:$0xff]
  %v39 = vld [vmem:[%s0 + $0x10] sm:$0xff]
  %v40 = vld [vmem:[%s0 + $0x18] sm:$0xff]
  %v41 = vld [vmem:[%s0 + $0x20] sm:$0xff]
  %v42 = vld [vmem:[%s0 + $0x28] sm:$0xff]
  %v43 = vld [vmem:[%s0 + $0x30] sm:$0xff]
  %v44 = vld [vmem:[%s0 + $0x38] sm:$0xff]
  %v46 = vperm.slane %v34, 0
  %vm48 = vcmask 293888
  %v50 = vsel %vm48, %v37, 0
  %v53 = vsel %vm48, %v38, 0
  %v56 = vsel %vm48, %v39, 0
  %v59 = vsel %vm48, %v40, 0
  %v62 = vsel %vm48, %v41, 0
  %v65 = vsel %vm48, %v42, 0
  %v68 = vsel %vm48, %v43, 0
  %v71 = vsel %vm48, %v44, 0
  %vm73 = vcmask 1043456
  %v75 = vsel %vm73, %v33, 0
  %77 = vmatpush.msra.mxu0 0.0
  %78 = vmatpush.msra.mxu0 0.0
  %79 = vmatpush.msra.mxu0 0.0
  %80 = vmatpush.msra.mxu0 0.0
  %81 = vmatpush.msra.mxu0 0.0
  %82 = vmatpush.msra.mxu0 0.0
  %83 = vmatpush.msra.mxu0 0.0
  %84 = vmatpush.msra.mxu0 0.0
  %85 = vmatpush.msra.mxu0 0.0
  %86 = vmatpush.msra.mxu0 0.0
  %87 = vmatpush.msra.mxu0 0.0
  %88 = vmatpush.msra.mxu0 %v75
  %89 = vmatpush.msra.mxu0 %v32
  %90 = vmatpush.msra.mxu0 %v31
  %91 = vmatpush.msra.mxu0 %v30
  %92 = vmatpush.msra.mxu0 %v29
  %93 = vmatmul.f32.gmra.mxu0 %v50
  %v94 = vpop.f32.mrf.mxu0
  %v95 = vadd.f32 %v46, %v94
  %96 = vmatmul.f32.gmra.mxu0 %v53
  %v97 = vpop.f32.mrf.mxu0
  %v98 = vadd.f32 %v46, %v97
  %99 = vmatmul.f32.gmra.mxu0 %v56
  %v100 = vpop.f32.mrf.mxu0
  %v101 = vadd.f32 %v46, %v100
  %102 = vmatmul.f32.gmra.mxu0 %v59
  %v103 = vpop.f32.mrf.mxu0
  %v104 = vadd.f32 %v46, %v103
  %105 = vmatmul.f32.gmra.mxu0 %v62
  %v106 = vpop.f32.mrf.mxu0
  %v107 = vadd.f32 %v46, %v106
  %108 = vmatmul.f32.gmra.mxu0 %v65
  %v109 = vpop.f32.mrf.mxu0
  %v110 = vadd.f32 %v46, %v109
  %111 = vmatmul.f32.gmra.mxu0 %v68
  %v112 = vpop.f32.mrf.mxu0
  %v113 = vadd.f32 %v46, %v112
  %114 = vmatmul.f32.gmra.mxu0 %v71
  %v115 = vpop.f32.mrf.mxu0
  %v116 = vadd.f32 %v46, %v115
  %117 = vdwg.mxu0
  %v118 = vmax.f32 %v95, 0.0
  %v119 = vmax.f32 %v98, 0.0
  %v120 = vmax.f32 %v101, 0.0
  %v121 = vmax.f32 %v104, 0.0
  %v122 = vmax.f32 %v107, 0.0
  %v123 = vmax.f32 %v110, 0.0
  %v124 = vmax.f32 %v113, 0.0
  %v125 = vmax.f32 %v116, 0.0
  %v127 = vperm.slane %v35, 0
  %v129 = vmul.f32 %v118, %v127
  %v130 = vmul.f32 %v119, %v127
  %v131 = vmul.f32 %v120, %v127
  %v132 = vmul.f32 %v121, %v127
  %v133 = vmul.f32 %v122, %v127
  %v134 = vmul.f32 %v123, %v127
  %v135 = vmul.f32 %v124, %v127
  %v136 = vmul.f32 %v125, %v127
  %v138 = vperm.slane %v36, 0
  %v140 = vadd.f32 %v129, %v138
  %v141 = vadd.f32 %v130, %v138
  %v142 = vadd.f32 %v131, %v138
  %v143 = vadd.f32 %v132, %v138
  %v144 = vadd.f32 %v133, %v138
  %v145 = vadd.f32 %v134, %v138
  %v146 = vadd.f32 %v135, %v138
  %v147 = vadd.f32 %v136, %v138
  %v148 = vld [vmem:[%s1] sm:$0xff]
  %v149 = vld [vmem:[%s1 + $0x8] sm:$0xff]
  %v150 = vld [vmem:[%s1 + $0x10] sm:$0xff]
  %v151 = vld [vmem:[%s1 + $0x18] sm:$0xff]
  %v152 = vld [vmem:[%s1 + $0x20] sm:$0xff]
  %v153 = vld [vmem:[%s1 + $0x28] sm:$0xff]
  %v154 = vld [vmem:[%s1 + $0x30] sm:$0xff]
  %v155 = vld [vmem:[%s1 + $0x38] sm:$0xff]
  %v157 = vsel %vm48, %v148, 0
  %v160 = vsel %vm48, %v149, 0
  %v163 = vsel %vm48, %v150, 0
  %v166 = vsel %vm48, %v151, 0
  %v169 = vsel %vm48, %v152, 0
  %v172 = vsel %vm48, %v153, 0
  %v175 = vsel %vm48, %v154, 0
  %v178 = vsel %vm48, %v155, 0
  %180 = vmatpush.msra.mxu0 0.0
  %181 = vmatpush.msra.mxu0 0.0
  %182 = vmatpush.msra.mxu0 0.0
  %183 = vmatpush.msra.mxu0 0.0
  %184 = vmatpush.msra.mxu0 0.0
  %185 = vmatpush.msra.mxu0 0.0
  %186 = vmatpush.msra.mxu0 0.0
  %187 = vmatpush.msra.mxu0 0.0
  %188 = vmatpush.msra.mxu0 0.0
  %189 = vmatpush.msra.mxu0 0.0
  %190 = vmatpush.msra.mxu0 0.0
  %191 = vmatpush.msra.mxu0 %v75
  %192 = vmatpush.msra.mxu0 %v32
  %193 = vmatpush.msra.mxu0 %v31
  %194 = vmatpush.msra.mxu0 %v30
  %195 = vmatpush.msra.mxu0 %v29
  %196 = vmatmul.f32.gmra.mxu0 %v157
  %v197 = vpop.f32.mrf.mxu0
  %v198 = vadd.f32 %v46, %v197
  %199 = vmatmul.f32.gmra.mxu0 %v160
  %v200 = vpop.f32.mrf.mxu0
  %v201 = vadd.f32 %v46, %v200
  %202 = vmatmul.f32.gmra.mxu0 %v163
  %v203 = vpop.f32.mrf.mxu0
  %v204 = vadd.f32 %v46, %v203
  %205 = vmatmul.f32.gmra.mxu0 %v166
  %v206 = vpop.f32.mrf.mxu0
  %v207 = vadd.f32 %v46, %v206
  %208 = vmatmul.f32.gmra.mxu0 %v169
  %v209 = vpop.f32.mrf.mxu0
  %v210 = vadd.f32 %v46, %v209
  %211 = vmatmul.f32.gmra.mxu0 %v172
  %v212 = vpop.f32.mrf.mxu0
  %v213 = vadd.f32 %v46, %v212
  %214 = vmatmul.f32.gmra.mxu0 %v175
  %v215 = vpop.f32.mrf.mxu0
  %v216 = vadd.f32 %v46, %v215
  %217 = vmatmul.f32.gmra.mxu0 %v178
  %v218 = vpop.f32.mrf.mxu0
  %v219 = vadd.f32 %v46, %v218
  %220 = vdwg.mxu0
  %v221 = vmax.f32 %v198, 0.0
  %v222 = vmax.f32 %v201, 0.0
  %v223 = vmax.f32 %v204, 0.0
  %v224 = vmax.f32 %v207, 0.0
  %v225 = vmax.f32 %v210, 0.0
  %v226 = vmax.f32 %v213, 0.0
  %v227 = vmax.f32 %v216, 0.0
  %v228 = vmax.f32 %v219, 0.0
  %v229 = vmul.f32 %v221, %v127
  %v230 = vmul.f32 %v222, %v127
  %v231 = vmul.f32 %v223, %v127
  %v232 = vmul.f32 %v224, %v127
  %v233 = vmul.f32 %v225, %v127
  %v234 = vmul.f32 %v226, %v127
  %v235 = vmul.f32 %v227, %v127
  %v236 = vmul.f32 %v228, %v127
  %v237 = vadd.f32 %v229, %v138
  %v238 = vadd.f32 %v230, %v138
  %v239 = vadd.f32 %v231, %v138
  %v240 = vadd.f32 %v232, %v138
  %v241 = vadd.f32 %v233, %v138
  %v242 = vadd.f32 %v234, %v138
  %v243 = vadd.f32 %v235, %v138
  %v244 = vadd.f32 %v236, %v138
  %v245 = vmax.f32 %v140, %v237
  %v246 = vmax.f32 %v141, %v238
  %v247 = vmax.f32 %v142, %v239
  %v248 = vmax.f32 %v143, %v240
  %v249 = vmax.f32 %v144, %v241
  %v250 = vmax.f32 %v145, %v242
  %v251 = vmax.f32 %v146, %v243
  %v252 = vmax.f32 %v147, %v244
  %v253 = vld [vmem:[%s2] sm:$0xff]
  %v254 = vld [vmem:[%s2 + $0x8] sm:$0xff]
  %v255 = vld [vmem:[%s2 + $0x10] sm:$0xff]
  %v256 = vld [vmem:[%s2 + $0x18] sm:$0xff]
  %v257 = vld [vmem:[%s2 + $0x20] sm:$0xff]
  %v258 = vld [vmem:[%s2 + $0x28] sm:$0xff]
  %v259 = vld [vmem:[%s2 + $0x30] sm:$0xff]
  %v260 = vld [vmem:[%s2 + $0x38] sm:$0xff]
  %v262 = vsel %vm48, %v253, 0
  %v265 = vsel %vm48, %v254, 0
  %v268 = vsel %vm48, %v255, 0
  %v271 = vsel %vm48, %v256, 0
  %v274 = vsel %vm48, %v257, 0
  %v277 = vsel %vm48, %v258, 0
  %v280 = vsel %vm48, %v259, 0
  %v283 = vsel %vm48, %v260, 0
  %285 = vmatpush.msra.mxu0 0.0
  %286 = vmatpush.msra.mxu0 0.0
  %287 = vmatpush.msra.mxu0 0.0
  %288 = vmatpush.msra.mxu0 0.0
  %289 = vmatpush.msra.mxu0 0.0
  %290 = vmatpush.msra.mxu0 0.0
  %291 = vmatpush.msra.mxu0 0.0
  %292 = vmatpush.msra.mxu0 0.0
  %293 = vmatpush.msra.mxu0 0.0
  %294 = vmatpush.msra.mxu0 0.0
  %295 = vmatpush.msra.mxu0 0.0
  %296 = vmatpush.msra.mxu0 %v75
  %297 = vmatpush.msra.mxu0 %v32
  %298 = vmatpush.msra.mxu0 %v31
  %299 = vmatpush.msra.mxu0 %v30
  %300 = vmatpush.msra.mxu0 %v29
  %301 = vmatmul.f32.gmra.mxu0 %v262
  %v302 = vpop.f32.mrf.mxu0
  %v303 = vadd.f32 %v46, %v302
  %304 = vmatmul.f32.gmra.mxu0 %v265
  %v305 = vpop.f32.mrf.mxu0
  %v306 = vadd.f32 %v46, %v305
  %307 = vmatmul.f32.gmra.mxu0 %v268
  %v308 = vpop.f32.mrf.mxu0
  %v309 = vadd.f32 %v46, %v308
  %310 = vmatmul.f32.gmra.mxu0 %v271
  %v311 = vpop.f32.mrf.mxu0
  %v312 = vadd.f32 %v46, %v311
  %313 = vmatmul.f32.gmra.mxu0 %v274
  %v314 = vpop.f32.mrf.mxu0
  %v315 = vadd.f32 %v46, %v314
  %316 = vmatmul.f32.gmra.mxu0 %v277
  %v317 = vpop.f32.mrf.mxu0
  %v318 = vadd.f32 %v46, %v317
  %319 = vmatmul.f32.gmra.mxu0 %v280
  %v320 = vpop.f32.mrf.mxu0
  %v321 = vadd.f32 %v46, %v320
  %322 = vmatmul.f32.gmra.mxu0 %v283
  %v323 = vpop.f32.mrf.mxu0
  %v324 = vadd.f32 %v46, %v323
  %325 = vdwg.mxu0
  %v326 = vmax.f32 %v303, 0.0
  %v327 = vmax.f32 %v306, 0.0
  %v328 = vmax.f32 %v309, 0.0
  %v329 = vmax.f32 %v312, 0.0
  %v330 = vmax.f32 %v315, 0.0
  %v331 = vmax.f32 %v318, 0.0
  %v332 = vmax.f32 %v321, 0.0
  %v333 = vmax.f32 %v324, 0.0
  %v334 = vmul.f32 %v326, %v127
  %v335 = vmul.f32 %v327, %v127
  %v336 = vmul.f32 %v328, %v127
  %v337 = vmul.f32 %v329, %v127
  %v338 = vmul.f32 %v330, %v127
  %v339 = vmul.f32 %v331, %v127
  %v340 = vmul.f32 %v332, %v127
  %v341 = vmul.f32 %v333, %v127
  %v342 = vadd.f32 %v334, %v138
  %v343 = vadd.f32 %v335, %v138
  %v344 = vadd.f32 %v336, %v138
  %v345 = vadd.f32 %v337, %v138
  %v346 = vadd.f32 %v338, %v138
  %v347 = vadd.f32 %v339, %v138
  %v348 = vadd.f32 %v340, %v138
  %v349 = vadd.f32 %v341, %v138
  %v350 = vld [vmem:[%s3] sm:$0xff]
  %v351 = vld [vmem:[%s3 + $0x8] sm:$0xff]
  %v352 = vld [vmem:[%s3 + $0x10] sm:$0xff]
  %v353 = vld [vmem:[%s3 + $0x18] sm:$0xff]
  %v354 = vld [vmem:[%s3 + $0x20] sm:$0xff]
  %v355 = vld [vmem:[%s3 + $0x28] sm:$0xff]
  %v356 = vld [vmem:[%s3 + $0x30] sm:$0xff]
  %v357 = vld [vmem:[%s3 + $0x38] sm:$0xff]
  %v359 = vsel %vm48, %v350, 0
  %v362 = vsel %vm48, %v351, 0
  %v365 = vsel %vm48, %v352, 0
  %v368 = vsel %vm48, %v353, 0
  %v371 = vsel %vm48, %v354, 0
  %v374 = vsel %vm48, %v355, 0
  %v377 = vsel %vm48, %v356, 0
  %v380 = vsel %vm48, %v357, 0
  %382 = vmatpush.msra.mxu0 0.0
  %383 = vmatpush.msra.mxu0 0.0
  %384 = vmatpush.msra.mxu0 0.0
  %385 = vmatpush.msra.mxu0 0.0
  %386 = vmatpush.msra.mxu0 0.0
  %387 = vmatpush.msra.mxu0 0.0
  %388 = vmatpush.msra.mxu0 0.0
  %389 = vmatpush.msra.mxu0 0.0
  %390 = vmatpush.msra.mxu0 0.0
  %391 = vmatpush.msra.mxu0 0.0
  %392 = vmatpush.msra.mxu0 0.0
  %393 = vmatpush.msra.mxu0 %v75
  %394 = vmatpush.msra.mxu0 %v32
  %395 = vmatpush.msra.mxu0 %v31
  %396 = vmatpush.msra.mxu0 %v30
  %397 = vmatpush.msra.mxu0 %v29
  %398 = vmatmul.f32.gmra.mxu0 %v359
  %v399 = vpop.f32.mrf.mxu0
  %v400 = vadd.f32 %v46, %v399
  %401 = vmatmul.f32.gmra.mxu0 %v362
  %v402 = vpop.f32.mrf.mxu0
  %v403 = vadd.f32 %v46, %v402
  %404 = vmatmul.f32.gmra.mxu0 %v365
  %v405 = vpop.f32.mrf.mxu0
  %v406 = vadd.f32 %v46, %v405
  %407 = vmatmul.f32.gmra.mxu0 %v368
  %v408 = vpop.f32.mrf.mxu0
  %v409 = vadd.f32 %v46, %v408
  %410 = vmatmul.f32.gmra.mxu0 %v371
  %v411 = vpop.f32.mrf.mxu0
  %v412 = vadd.f32 %v46, %v411
  %413 = vmatmul.f32.gmra.mxu0 %v374
  %v414 = vpop.f32.mrf.mxu0
  %v415 = vadd.f32 %v46, %v414
  %416 = vmatmul.f32.gmra.mxu0 %v377
  %v417 = vpop.f32.mrf.mxu0
  %v418 = vadd.f32 %v46, %v417
  %419 = vmatmul.f32.gmra.mxu0 %v380
  %v420 = vpop.f32.mrf.mxu0
  %v421 = vadd.f32 %v46, %v420
  %422 = vdwg.mxu0
  %v423 = vmax.f32 %v400, 0.0
  %v424 = vmax.f32 %v403, 0.0
  %v425 = vmax.f32 %v406, 0.0
  %v426 = vmax.f32 %v409, 0.0
  %v427 = vmax.f32 %v412, 0.0
  %v428 = vmax.f32 %v415, 0.0
  %v429 = vmax.f32 %v418, 0.0
  %v430 = vmax.f32 %v421, 0.0
  %v431 = vmul.f32 %v423, %v127
  %v432 = vmul.f32 %v424, %v127
  %v433 = vmul.f32 %v425, %v127
  %v434 = vmul.f32 %v426, %v127
  %v435 = vmul.f32 %v427, %v127
  %v436 = vmul.f32 %v428, %v127
  %v437 = vmul.f32 %v429, %v127
  %v438 = vmul.f32 %v430, %v127
  %v439 = vadd.f32 %v431, %v138
  %v440 = vadd.f32 %v432, %v138
  %v441 = vadd.f32 %v433, %v138
  %v442 = vadd.f32 %v434, %v138
  %v443 = vadd.f32 %v435, %v138
  %v444 = vadd.f32 %v436, %v138
  %v445 = vadd.f32 %v437, %v138
  %v446 = vadd.f32 %v438, %v138
  %v447 = vmax.f32 %v342, %v439
  %v448 = vmax.f32 %v343, %v440
  %v449 = vmax.f32 %v344, %v441
  %v450 = vmax.f32 %v345, %v442
  %v451 = vmax.f32 %v346, %v443
  %v452 = vmax.f32 %v347, %v444
  %v453 = vmax.f32 %v348, %v445
  %v454 = vmax.f32 %v349, %v446
  %v455 = vmax.f32 %v245, %v447
  %v456 = vmax.f32 %v246, %v448
  %v457 = vmax.f32 %v247, %v449
  %v458 = vmax.f32 %v248, %v450
  %v459 = vmax.f32 %v249, %v451
  %v460 = vmax.f32 %v250, %v452
  %v461 = vmax.f32 %v251, %v453
  %v462 = vmax.f32 %v252, %v454
  %vm463 = vcmask 64512
  %464 = vst.msk [vmem:[%s8] sm:$0xff] %vm463, %v455
  %465 = vst.msk [vmem:[%s8 + $0x8] sm:$0xff] %vm463, %v456
  %466 = vst.msk [vmem:[%s8 + $0x10] sm:$0xff] %vm463, %v457
  %467 = vst.msk [vmem:[%s8 + $0x18] sm:$0xff] %vm463, %v458
  %468 = vst.msk [vmem:[%s8 + $0x20] sm:$0xff] %vm463, %v459
  %469 = vst.msk [vmem:[%s8 + $0x28] sm:$0xff] %vm463, %v460
  %470 = vst.msk [vmem:[%s8 + $0x30] sm:$0xff] %vm463, %v461
  %471 = vst.msk [vmem:[%s8 + $0x38] sm:$0xff] %vm463, %v462
  // Predicated region
  $region34: #{probnet_forward.6} parent=0 // pred_check
    _
  $region35: #{probnet_forward.6} parent=0 // pred_check_branch
    %473 = sbr.rel (0) target = $region37
  $region36: #{probnet_forward.6} parent=0 // pred_region
    _
  $region37: #{probnet_forward.6} parent=0 // pred_fallthru
    _
  // Predicated region
  $region38: #{probnet_forward.6} parent=0 // pred_check
    _
  $region39: #{probnet_forward.6} parent=0 // pred_check_branch
    %475 = sbr.rel (0) target = $region41
  $region40: #{probnet_forward.6} parent=0 // pred_region
    _
  $region41: #{probnet_forward.6} parent=0 // pred_fallthru
    _

// kernel: probnet_forward.7
$region0: #{probnet_forward.7}
  #allocation0 [shape = 'u32[]', space=smem, size = 0x4, offset = 0x4, fixed_abs, tag = 'smem constant byte address 0x4 - core index']
  #allocation1 [shape = 'u32[72,128]{1,0:T(1,128)}', space=vmem, size = 0x9000, scoped, tag = 'internal scratch']
  %s0 = inlined_call_operand.vmem [shape: f32[16,32], index: 0, kind: input, shape index: {}]
  %s1 = inlined_call_operand.vmem [shape: f32[32,512], index: 1, kind: input, shape index: {}]
  %s2 = inlined_call_operand.vmem [shape: f32[1,512], index: 2, kind: input, shape index: {}]
  %s3 = inlined_call_operand.vmem [shape: f32[16,512], index: 3, kind: output, shape index: {}]
  %s4 = sld [smem:[#allocation0]]
  $region22: #{probnet_forward.7} parent=0
    _
  %s6 = ssub.s32 1, %s4
  %s7 = scalar_select 0, %s6, %s4
  // Predicated region
  $region2: #{probnet_forward.7} parent=0 // pred_check
    _
  $region3: #{probnet_forward.7} parent=0 // pred_check_branch
    %9 = sbr.rel (0) target = $region5
  $region4: #{probnet_forward.7} parent=0 // pred_region
    _
  $region5: #{probnet_forward.7} parent=0 // pred_fallthru
    _
  // Predicated region
  $region6: #{probnet_forward.7} parent=0 // pred_check
    _
  $region7: #{probnet_forward.7} parent=0 // pred_check_branch
    %11 = sbr.rel (0) target = $region9
  $region8: #{probnet_forward.7} parent=0 // pred_region
    _
  $region9: #{probnet_forward.7} parent=0 // pred_fallthru
    _
  // Predicated region
  $region10: #{probnet_forward.7} parent=0 // pred_check
    _
  $region11: #{probnet_forward.7} parent=0 // pred_check_branch
    %13 = sbr.rel (0) target = $region13
  $region12: #{probnet_forward.7} parent=0 // pred_region
    _
  $region13: #{probnet_forward.7} parent=0 // pred_fallthru
    _
  %v14 = vld [vmem:[%s0] sm:$0xff]
  %v15 = vld [vmem:[%s0 + $0x8] sm:$0xff]
  %v16 = vld [vmem:[%s1] sm:$0xff]
  %v17 = vld [vmem:[%s1 + $0x8] sm:$0xff]
  %v18 = vld [vmem:[%s1 + $0x10] sm:$0xff]
  %v19 = vld [vmem:[%s1 + $0x18] sm:$0xff]
  %v20 = vld [vmem:[%s1 + $0x20] sm:$0xff]
  %v21 = vld [vmem:[%s1 + $0x28] sm:$0xff]
  %v22 = vld [vmem:[%s1 + $0x30] sm:$0xff]
  %v23 = vld [vmem:[%s1 + $0x38] sm:$0xff]
  %v24 = vld [vmem:[%s1 + $0x40] sm:$0xff]
  %v25 = vld [vmem:[%s1 + $0x48] sm:$0xff]
  %v26 = vld [vmem:[%s1 + $0x50] sm:$0xff]
  %v27 = vld [vmem:[%s1 + $0x58] sm:$0xff]
  %v28 = vld [vmem:[%s1 + $0x60] sm:$0xff]
  %v29 = vld [vmem:[%s1 + $0x68] sm:$0xff]
  %v30 = vld [vmem:[%s1 + $0x70] sm:$0xff]
  %v31 = vld [vmem:[%s1 + $0x78] sm:$0xff]
  %v32 = vld [vmem:[%s2] sm:$0xf]
  %v34 = vperm.slane %v32, 0
  %v35 = vperm.slane %v32, 1
  %v36 = vperm.slane %v32, 2
  %v37 = vperm.slane %v32, 3
  %vm42 = vcmask 261120
  %v44 = vsel %vm42, %v14, 0
  %v47 = vsel %vm42, %v15, 0
  %49 = vmatpush.msra.mxu0 0.0
  %50 = vmatpush.msra.mxu0 0.0
  %51 = vmatpush.msra.mxu0 0.0
  %52 = vmatpush.msra.mxu0 0.0
  %53 = vmatpush.msra.mxu0 0.0
  %54 = vmatpush.msra.mxu0 0.0
  %55 = vmatpush.msra.mxu0 0.0
  %56 = vmatpush.msra.mxu0 0.0
  %57 = vmatpush.msra.mxu0 0.0
  %58 = vmatpush.msra.mxu0 0.0
  %59 = vmatpush.msra.mxu0 0.0
  %60 = vmatpush.msra.mxu0 0.0
  %61 = vmatpush.msra.mxu0 %v28
  %62 = vmatpush.msra.mxu0 %v24
  %63 = vmatpush.msra.mxu0 %v20
  %64 = vmatpush.msra.mxu0 %v16
  %65 = vmatmul.f32.gmra.mxu0 %v44
  %v66 = vpop.f32.mrf.mxu0
  %v67 = vadd.f32 %v34, %v66
  %68 = vmatmul.f32.gmra.mxu0 %v47
  %v69 = vpop.f32.mrf.mxu0
  %v70 = vadd.f32 %v34, %v69
  %71 = vdwg.mxu0
  %72 = vmatpush.msra.mxu0 0.0
  %73 = vmatpush.msra.mxu0 0.0
  %74 = vmatpush.msra.mxu0 0.0
  %75 = vmatpush.msra.mxu0 0.0
  %76 = vmatpush.msra.mxu0 0.0
  %77 = vmatpush.msra.mxu0 0.0
  %78 = vmatpush.msra.mxu0 0.0
  %79 = vmatpush.msra.mxu0 0.0
  %80 = vmatpush.msra.mxu0 0.0
  %81 = vmatpush.msra.mxu0 0.0
  %82 = vmatpush.msra.mxu0 0.0
  %83 = vmatpush.msra.mxu0 0.0
  %84 = vmatpush.msra.mxu0 %v29
  %85 = vmatpush.msra.mxu0 %v25
  %86 = vmatpush.msra.mxu0 %v21
  %87 = vmatpush.msra.mxu0 %v17
  %88 = vmatmul.f32.gmra.mxu0 %v44
  %v89 = vpop.f32.mrf.mxu0
  %v90 = vadd.f32 %v35, %v89
  %91 = vmatmul.f32.gmra.mxu0 %v47
  %v92 = vpop.f32.mrf.mxu0
  %v93 = vadd.f32 %v35, %v92
  %94 = vdwg.mxu0
  %95 = vmatpush.msra.mxu0 0.0
  %96 = vmatpush.msra.mxu0 0.0
  %97 = vmatpush.msra.mxu0 0.0
  %98 = vmatpush.msra.mxu0 0.0
  %99 = vmatpush.msra.mxu0 0.0
  %100 = vmatpush.msra.mxu0 0.0
  %101 = vmatpush.msra.mxu0 0.0
  %102 = vmatpush.msra.mxu0 0.0
  %103 = vmatpush.msra.mxu0 0.0
  %104 = vmatpush.msra.mxu0 0.0
  %105 = vmatpush.msra.mxu0 0.0
  %106 = vmatpush.msra.mxu0 0.0
  %107 = vmatpush.msra.mxu0 %v30
  %108 = vmatpush.msra.mxu0 %v26
  %109 = vmatpush.msra.mxu0 %v22
  %110 = vmatpush.msra.mxu0 %v18
  %111 = vmatmul.f32.gmra.mxu0 %v44
  %v112 = vpop.f32.mrf.mxu0
  %v113 = vadd.f32 %v36, %v112
  %114 = vmatmul.f32.gmra.mxu0 %v47
  %v115 = vpop.f32.mrf.mxu0
  %v116 = vadd.f32 %v36, %v115
  %117 = vdwg.mxu0
  %118 = vmatpush.msra.mxu0 0.0
  %119 = vmatpush.msra.mxu0 0.0
  %120 = vmatpush.msra.mxu0 0.0
  %121 = vmatpush.msra.mxu0 0.0
  %122 = vmatpush.msra.mxu0 0.0
  %123 = vmatpush.msra.mxu0 0.0
  %124 = vmatpush.msra.mxu0 0.0
  %125 = vmatpush.msra.mxu0 0.0
  %126 = vmatpush.msra.mxu0 0.0
  %127 = vmatpush.msra.mxu0 0.0
  %128 = vmatpush.msra.mxu0 0.0
  %129 = vmatpush.msra.mxu0 0.0
  %130 = vmatpush.msra.mxu0 %v31
  %131 = vmatpush.msra.mxu0 %v27
  %132 = vmatpush.msra.mxu0 %v23
  %133 = vmatpush.msra.mxu0 %v19
  %134 = vmatmul.f32.gmra.mxu0 %v44
  %v135 = vpop.f32.mrf.mxu0
  %v136 = vadd.f32 %v37, %v135
  %137 = vmatmul.f32.gmra.mxu0 %v47
  %v138 = vpop.f32.mrf.mxu0
  %v139 = vadd.f32 %v37, %v138
  %140 = vdwg.mxu0
  %141 = vst [vmem:[%s3] sm:$0xff] %v67
  %142 = vst [vmem:[%s3 + $0x8] sm:$0xff] %v90
  %143 = vst [vmem:[%s3 + $0x10] sm:$0xff] %v113
  %144 = vst [vmem:[%s3 + $0x18] sm:$0xff] %v136
  %145 = vst [vmem:[%s3 + $0x20] sm:$0xff] %v70
  %146 = vst [vmem:[%s3 + $0x28] sm:$0xff] %v93
  %147 = vst [vmem:[%s3 + $0x30] sm:$0xff] %v116
  %148 = vst [vmem:[%s3 + $0x38] sm:$0xff] %v139
  // Predicated region
  $region14: #{probnet_forward.7} parent=0 // pred_check
    _
  $region15: #{probnet_forward.7} parent=0 // pred_check_branch
    %150 = sbr.rel (0) target = $region17
  $region16: #{probnet_forward.7} parent=0 // pred_region
    _
  $region17: #{probnet_forward.7} parent=0 // pred_fallthru
    _
  // Predicated region
  $region18: #{probnet_forward.7} parent=0 // pred_check
    _
  $region19: #{probnet_forward.7} parent=0 // pred_check_branch
    %152 = sbr.rel (0) target = $region21
  $region20: #{probnet_forward.7} parent=0 // pred_region
    _
  $region21: #{probnet_forward.7} parent=0 // pred_fallthru
    _

// kernel: probnet_forward.5
$region0: #{probnet_forward.5}
  #allocation0 [shape = 'u32[]', space=smem, size = 0x4, offset = 0x4, fixed_abs, tag = 'smem constant byte address 0x4 - core index']
  #allocation1 [shape = 'u32[72,128]{1,0:T(1,128)}', space=vmem, size = 0x9000, scoped, tag = 'internal scratch']
  %s0 = inlined_call_operand.vmem [shape: f32[360,9], index: 0, kind: input, shape index: {}]
  %s1 = inlined_call_operand.vmem [shape: f32[360,9], index: 1, kind: input, shape index: {}]
  %s2 = inlined_call_operand.vmem [shape: f32[360,9], index: 2, kind: input, shape index: {}]
  %s3 = inlined_call_operand.vmem [shape: f32[360,9], index: 3, kind: input, shape index: {}]
  %s4 = inlined_call_operand.vmem [shape: f32[9,4], index: 4, kind: input, shape index: {}]
  %s5 = inlined_call_operand.vmem [shape: f32[1,4], index: 5, kind: input, shape index: {}]
  %s6 = inlined_call_operand.vmem [shape: f32[1,4], index: 6, kind: input, shape index: {}]
  %s7 = inlined_call_operand.vmem [shape: f32[1,4], index: 7, kind: input, shape index: {}]
  %s8 = inlined_call_operand.vmem [shape: f32[360,4], index: 8, kind: output, shape index: {}]
  %s9 = sld [smem:[#allocation0]]
  $region42: #{probnet_forward.5} parent=0
    _
  %s11 = ssub.s32 1, %s9
  %s12 = scalar_select 0, %s11, %s9
  // Predicated region
  $region2: #{probnet_forward.5} parent=0 // pred_check
    _
  $region3: #{probnet_forward.5} parent=0 // pred_check_branch
    %14 = sbr.rel (0) target = $region5
  $region4: #{probnet_forward.5} parent=0 // pred_region
    _
  $region5: #{probnet_forward.5} parent=0 // pred_fallthru
    _
  // Predicated region
  $region6: #{probnet_forward.5} parent=0 // pred_check
    _
  $region7: #{probnet_forward.5} parent=0 // pred_check_branch
    %16 = sbr.rel (0) target = $region9
  $region8: #{probnet_forward.5} parent=0 // pred_region
    _
  $region9: #{probnet_forward.5} parent=0 // pred_fallthru
    _
  // Predicated region
  $region10: #{probnet_forward.5} parent=0 // pred_check
    _
  $region11: #{probnet_forward.5} parent=0 // pred_check_branch
    %18 = sbr.rel (0) target = $region13
  $region12: #{probnet_forward.5} parent=0 // pred_region
    _
  $region13: #{probnet_forward.5} parent=0 // pred_fallthru
    _
  // Predicated region
  $region14: #{probnet_forward.5} parent=0 // pred_check
    _
  $region15: #{probnet_forward.5} parent=0 // pred_check_branch
    %20 = sbr.rel (0) target = $region17
  $region16: #{probnet_forward.5} parent=0 // pred_region
    _
  $region17: #{probnet_forward.5} parent=0 // pred_fallthru
    _
  // Predicated region
  $region18: #{probnet_forward.5} parent=0 // pred_check
    _
  $region19: #{probnet_forward.5} parent=0 // pred_check_branch
    %22 = sbr.rel (0) target = $region21
  $region20: #{probnet_forward.5} parent=0 // pred_region
    _
  $region21: #{probnet_forward.5} parent=0 // pred_fallthru
    _
  // Predicated region
  $region22: #{probnet_forward.5} parent=0 // pred_check
    _
  $region23: #{probnet_forward.5} parent=0 // pred_check_branch
    %24 = sbr.rel (0) target = $region25
  $region24: #{probnet_forward.5} parent=0 // pred_region
    _
  $region25: #{probnet_forward.5} parent=0 // pred_fallthru
    _
  // Predicated region
  $region26: #{probnet_forward.5} parent=0 // pred_check
    _
  $region27: #{probnet_forward.5} parent=0 // pred_check_branch
    %26 = sbr.rel (0) target = $region29
  $region28: #{probnet_forward.5} parent=0 // pred_region
    _
  $region29: #{probnet_forward.5} parent=0 // pred_fallthru
    _
  // Predicated region
  $region30: #{probnet_forward.5} parent=0 // pred_check
    _
  $region31: #{probnet_forward.5} parent=0 // pred_check_branch
    %28 = sbr.rel (0) target = $region33
  $region32: #{probnet_forward.5} parent=0 // pred_region
    _
  $region33: #{probnet_forward.5} parent=0 // pred_fallthru
    _
  %v29 = vld [vmem:[%s4] sm:$0xff]
  %v30 = vld [vmem:[%s4 + $0x8] sm:$0x1]
  %v31 = vld [vmem:[%s5] sm:$0x1]
  %v32 = vld [vmem:[%s6] sm:$0x1]
  %v33 = vld [vmem:[%s7] sm:$0x1]
  %v34 = vld [vmem:[%s0] sm:$0xff]
  %v35 = vld [vmem:[%s0 + $0x8] sm:$0xff]
  %v36 = vld [vmem:[%s0 + $0x10] sm:$0xff]
  %v37 = vld [vmem:[%s0 + $0x18] sm:$0xff]
  %v38 = vld [vmem:[%s0 + $0x20] sm:$0xff]
  %v39 = vld [vmem:[%s0 + $0x28] sm:$0xff]
  %v40 = vld [vmem:[%s0 + $0x30] sm:$0xff]
  %v41 = vld [vmem:[%s0 + $0x38] sm:$0xff]
  %v42 = vld [vmem:[%s0 + $0x40] sm:$0xff]
  %v43 = vld [vmem:[%s0 + $0x48] sm:$0xff]
  %v44 = vld [vmem:[%s0 + $0x50] sm:$0xff]
  %v45 = vld [vmem:[%s0 + $0x58] sm:$0xff]
  %v46 = vld [vmem:[%s0 + $0x60] sm:$0xff]
  %v47 = vld [vmem:[%s0 + $0x68] sm:$0xff]
  %v48 = vld [vmem:[%s0 + $0x70] sm:$0xff]
  %v49 = vld [vmem:[%s0 + $0x78] sm:$0xff]
  %v50 = vld [vmem:[%s0 + $0x80] sm:$0xff]
  %v51 = vld [vmem:[%s0 + $0x88] sm:$0xff]
  %v52 = vld [vmem:[%s0 + $0x90] sm:$0xff]
  %v53 = vld [vmem:[%s0 + $0x98] sm:$0xff]
  %v54 = vld [vmem:[%s0 + $0xa0] sm:$0xff]
  %v55 = vld [vmem:[%s0 + $0xa8] sm:$0xff]
  %v56 = vld [vmem:[%s0 + $0xb0] sm:$0xff]
  %v57 = vld [vmem:[%s0 + $0xb8] sm:$0xff]
  %v58 = vld [vmem:[%s0 + $0xc0] sm:$0xff]
  %v59 = vld [vmem:[%s0 + $0xc8] sm:$0xff]
  %v60 = vld [vmem:[%s0 + $0xd0] sm:$0xff]
  %v61 = vld [vmem:[%s0 + $0xd8] sm:$0xff]
  %v62 = vld [vmem:[%s0 + $0xe0] sm:$0xff]
  %v63 = vld [vmem:[%s0 + $0xe8] sm:$0xff]
  %v64 = vld [vmem:[%s0 + $0xf0] sm:$0xff]
  %v65 = vld [vmem:[%s0 + $0xf8] sm:$0xff]
  %v66 = vld [vmem:[%s0 + $0x100] sm:$0xff]
  %v67 = vld [vmem:[%s0 + $0x108] sm:$0xff]
  %v68 = vld [vmem:[%s0 + $0x110] sm:$0xff]
  %v69 = vld [vmem:[%s0 + $0x118] sm:$0xff]
  %v70 = vld [vmem:[%s0 + $0x120] sm:$0xff]
  %v71 = vld [vmem:[%s0 + $0x128] sm:$0xff]
  %v72 = vld [vmem:[%s0 + $0x130] sm:$0xff]
  %v73 = vld [vmem:[%s0 + $0x138] sm:$0xff]
  %v74 = vld [vmem:[%s0 + $0x140] sm:$0xff]
  %v75 = vld [vmem:[%s0 + $0x148] sm:$0xff]
  %v76 = vld [vmem:[%s0 + $0x150] sm:$0xff]
  %v77 = vld [vmem:[%s0 + $0x158] sm:$0xff]
  %v78 = vld [vmem:[%s0 + $0x160] sm:$0xff]
  %v80 = vperm.slane %v31, 0
  %vm82 = vcmask 72704
  %v84 = vsel %vm82, %v34, 0
  %v87 = vsel %vm82, %v35, 0
  %v90 = vsel %vm82, %v36, 0
  %v93 = vsel %vm82, %v37, 0
  %v96 = vsel %vm82, %v38, 0
  %v99 = vsel %vm82, %v39, 0
  %v102 = vsel %vm82, %v40, 0
  %v105 = vsel %vm82, %v41, 0
  %v108 = vsel %vm82, %v42, 0
  %v111 = vsel %vm82, %v43, 0
  %v114 = vsel %vm82, %v44, 0
  %v117 = vsel %vm82, %v45, 0
  %v120 = vsel %vm82, %v46, 0
  %v123 = vsel %vm82, %v47, 0
  %v126 = vsel %vm82, %v48, 0
  %v129 = vsel %vm82, %v49, 0
  %v132 = vsel %vm82, %v50, 0
  %v135 = vsel %vm82, %v51, 0
  %v138 = vsel %vm82, %v52, 0
  %v141 = vsel %vm82, %v53, 0
  %v144 = vsel %vm82, %v54, 0
  %v147 = vsel %vm82, %v55, 0
  %v150 = vsel %vm82, %v56, 0
  %v153 = vsel %vm82, %v57, 0
  %v156 = vsel %vm82, %v58, 0
  %v159 = vsel %vm82, %v59, 0
  %v162 = vsel %vm82, %v60, 0
  %v165 = vsel %vm82, %v61, 0
  %v168 = vsel %vm82, %v62, 0
  %v171 = vsel %vm82, %v63, 0
  %v174 = vsel %vm82, %v64, 0
  %v177 = vsel %vm82, %v65, 0
  %v180 = vsel %vm82, %v66, 0
  %v183 = vsel %vm82, %v67, 0
  %v186 = vsel %vm82, %v68, 0
  %v189 = vsel %vm82, %v69, 0
  %v192 = vsel %vm82, %v70, 0
  %v195 = vsel %vm82, %v71, 0
  %v198 = vsel %vm82, %v72, 0
  %v201 = vsel %vm82, %v73, 0
  %v204 = vsel %vm82, %v74, 0
  %v207 = vsel %vm82, %v75, 0
  %v210 = vsel %vm82, %v76, 0
  %v213 = vsel %vm82, %v77, 0
  %v216 = vsel %vm82, %v78, 0
  %vm218 = vcmask 1040384
  %v220 = vsel %vm218, %v30, 0
  %222 = vmatpush.msra.mxu0 0.0
  %223 = vmatpush.msra.mxu0 0.0
  %224 = vmatpush.msra.mxu0 0.0
  %225 = vmatpush.msra.mxu0 0.0
  %226 = vmatpush.msra.mxu0 0.0
  %227 = vmatpush.msra.mxu0 0.0
  %228 = vmatpush.msra.mxu0 0.0
  %229 = vmatpush.msra.mxu0 0.0
  %230 = vmatpush.msra.mxu0 0.0
  %231 = vmatpush.msra.mxu0 0.0
  %232 = vmatpush.msra.mxu0 0.0
  %233 = vmatpush.msra.mxu0 0.0
  %234 = vmatpush.msra.mxu0 0.0
  %235 = vmatpush.msra.mxu0 0.0
  %236 = vmatpush.msra.mxu0 %v220
  %237 = vmatpush.msra.mxu0 %v29
  %238 = vmatmul.f32.gmra.mxu0 %v84
  %v239 = vpop.f32.mrf.mxu0
  %v240 = vadd.f32 %v80, %v239
  %241 = vmatmul.f32.gmra.mxu0 %v87
  %v242 = vpop.f32.mrf.mxu0
  %v243 = vadd.f32 %v80, %v242
  %244 = vmatmul.f32.gmra.mxu0 %v90
  %v245 = vpop.f32.mrf.mxu0
  %v246 = vadd.f32 %v80, %v245
  %247 = vmatmul.f32.gmra.mxu0 %v93
  %v248 = vpop.f32.mrf.mxu0
  %v249 = vadd.f32 %v80, %v248
  %250 = vmatmul.f32.gmra.mxu0 %v96
  %v251 = vpop.f32.mrf.mxu0
  %v252 = vadd.f32 %v80, %v251
  %253 = vmatmul.f32.gmra.mxu0 %v99
  %v254 = vpop.f32.mrf.mxu0
  %v255 = vadd.f32 %v80, %v254
  %256 = vmatmul.f32.gmra.mxu0 %v102
  %v257 = vpop.f32.mrf.mxu0
  %v258 = vadd.f32 %v80, %v257
  %259 = vmatmul.f32.gmra.mxu0 %v105
  %v260 = vpop.f32.mrf.mxu0
  %v261 = vadd.f32 %v80, %v260
  %262 = vmatmul.f32.gmra.mxu0 %v108
  %v263 = vpop.f32.mrf.mxu0
  %v264 = vadd.f32 %v80, %v263
  %265 = vmatmul.f32.gmra.mxu0 %v111
  %v266 = vpop.f32.mrf.mxu0
  %v267 = vadd.f32 %v80, %v266
  %268 = vmatmul.f32.gmra.mxu0 %v114
  %v269 = vpop.f32.mrf.mxu0
  %v270 = vadd.f32 %v80, %v269
  %271 = vmatmul.f32.gmra.mxu0 %v117
  %v272 = vpop.f32.mrf.mxu0
  %v273 = vadd.f32 %v80, %v272
  %274 = vmatmul.f32.gmra.mxu0 %v120
  %v275 = vpop.f32.mrf.mxu0
  %v276 = vadd.f32 %v80, %v275
  %277 = vmatmul.f32.gmra.mxu0 %v123
  %v278 = vpop.f32.mrf.mxu0
  %v279 = vadd.f32 %v80, %v278
  %280 = vmatmul.f32.gmra.mxu0 %v126
  %v281 = vpop.f32.mrf.mxu0
  %v282 = vadd.f32 %v80, %v281
  %283 = vmatmul.f32.gmra.mxu0 %v129
  %v284 = vpop.f32.mrf.mxu0
  %v285 = vadd.f32 %v80, %v284
  %286 = vmatmul.f32.gmra.mxu0 %v132
  %v287 = vpop.f32.mrf.mxu0
  %v288 = vadd.f32 %v80, %v287
  %289 = vmatmul.f32.gmra.mxu0 %v135
  %v290 = vpop.f32.mrf.mxu0
  %v291 = vadd.f32 %v80, %v290
  %292 = vmatmul.f32.gmra.mxu0 %v138
  %v293 = vpop.f32.mrf.mxu0
  %v294 = vadd.f32 %v80, %v293
  %295 = vmatmul.f32.gmra.mxu0 %v141
  %v296 = vpop.f32.mrf.mxu0
  %v297 = vadd.f32 %v80, %v296
  %298 = vmatmul.f32.gmra.mxu0 %v144
  %v299 = vpop.f32.mrf.mxu0
  %v300 = vadd.f32 %v80, %v299
  %301 = vmatmul.f32.gmra.mxu0 %v147
  %v302 = vpop.f32.mrf.mxu0
  %v303 = vadd.f32 %v80, %v302
  %304 = vmatmul.f32.gmra.mxu0 %v150
  %v305 = vpop.f32.mrf.mxu0
  %v306 = vadd.f32 %v80, %v305
  %307 = vmatmul.f32.gmra.mxu0 %v153
  %v308 = vpop.f32.mrf.mxu0
  %v309 = vadd.f32 %v80, %v308
  %310 = vmatmul.f32.gmra.mxu0 %v156
  %v311 = vpop.f32.mrf.mxu0
  %v312 = vadd.f32 %v80, %v311
  %313 = vmatmul.f32.gmra.mxu0 %v159
  %v314 = vpop.f32.mrf.mxu0
  %v315 = vadd.f32 %v80, %v314
  %316 = vmatmul.f32.gmra.mxu0 %v162
  %v317 = vpop.f32.mrf.mxu0
  %v318 = vadd.f32 %v80, %v317
  %319 = vmatmul.f32.gmra.mxu0 %v165
  %v320 = vpop.f32.mrf.mxu0
  %v321 = vadd.f32 %v80, %v320
  %322 = vmatmul.f32.gmra.mxu0 %v168
  %v323 = vpop.f32.mrf.mxu0
  %v324 = vadd.f32 %v80, %v323
  %325 = vmatmul.f32.gmra.mxu0 %v171
  %v326 = vpop.f32.mrf.mxu0
  %v327 = vadd.f32 %v80, %v326
  %328 = vmatmul.f32.gmra.mxu0 %v174
  %v329 = vpop.f32.mrf.mxu0
  %v330 = vadd.f32 %v80, %v329
  %331 = vmatmul.f32.gmra.mxu0 %v177
  %v332 = vpop.f32.mrf.mxu0
  %v333 = vadd.f32 %v80, %v332
  %334 = vmatmul.f32.gmra.mxu0 %v180
  %v335 = vpop.f32.mrf.mxu0
  %v336 = vadd.f32 %v80, %v335
  %337 = vmatmul.f32.gmra.mxu0 %v183
  %v338 = vpop.f32.mrf.mxu0
  %v339 = vadd.f32 %v80, %v338
  %340 = vmatmul.f32.gmra.mxu0 %v186
  %v341 = vpop.f32.mrf.mxu0
  %v342 = vadd.f32 %v80, %v341
  %343 = vmatmul.f32.gmra.mxu0 %v189
  %v344 = vpop.f32.mrf.mxu0
  %v345 = vadd.f32 %v80, %v344
  %346 = vmatmul.f32.gmra.mxu0 %v192
  %v347 = vpop.f32.mrf.mxu0
  %v348 = vadd.f32 %v80, %v347
  %349 = vmatmul.f32.gmra.mxu0 %v195
  %v350 = vpop.f32.mrf.mxu0
  %v351 = vadd.f32 %v80, %v350
  %352 = vmatmul.f32.gmra.mxu0 %v198
  %v353 = vpop.f32.mrf.mxu0
  %v354 = vadd.f32 %v80, %v353
  %355 = vmatmul.f32.gmra.mxu0 %v201
  %v356 = vpop.f32.mrf.mxu0
  %v357 = vadd.f32 %v80, %v356
  %358 = vmatmul.f32.gmra.mxu0 %v204
  %v359 = vpop.f32.mrf.mxu0
  %v360 = vadd.f32 %v80, %v359
  %361 = vmatmul.f32.gmra.mxu0 %v207
  %v362 = vpop.f32.mrf.mxu0
  %v363 = vadd.f32 %v80, %v362
  %364 = vmatmul.f32.gmra.mxu0 %v210
  %v365 = vpop.f32.mrf.mxu0
  %v366 = vadd.f32 %v80, %v365
  %367 = vmatmul.f32.gmra.mxu0 %v213
  %v368 = vpop.f32.mrf.mxu0
  %v369 = vadd.f32 %v80, %v368
  %370 = vmatmul.f32.gmra.mxu0 %v216
  %v371 = vpop.f32.mrf.mxu0
  %v372 = vadd.f32 %v80, %v371
  %373 = vdwg.mxu0
  %v374 = vmax.f32 %v240, 0.0
  %v375 = vmax.f32 %v243, 0.0
  %v376 = vmax.f32 %v246, 0.0
  %v377 = vmax.f32 %v249, 0.0
  %v378 = vmax.f32 %v252, 0.0
  %v379 = vmax.f32 %v255, 0.0
  %v380 = vmax.f32 %v258, 0.0
  %v381 = vmax.f32 %v261, 0.0
  %v382 = vmax.f32 %v264, 0.0
  %v383 = vmax.f32 %v267, 0.0
  %v384 = vmax.f32 %v270, 0.0
  %v385 = vmax.f32 %v273, 0.0
  %v386 = vmax.f32 %v276, 0.0
  %v387 = vmax.f32 %v279, 0.0
  %v388 = vmax.f32 %v282, 0.0
  %v389 = vmax.f32 %v285, 0.0
  %v390 = vmax.f32 %v288, 0.0
  %v391 = vmax.f32 %v291, 0.0
  %v392 = vmax.f32 %v294, 0.0
  %v393 = vmax.f32 %v297, 0.0
  %v394 = vmax.f32 %v300, 0.0
  %v395 = vmax.f32 %v303, 0.0
  %v396 = vmax.f32 %v306, 0.0
  %v397 = vmax.f32 %v309, 0.0
  %v398 = vmax.f32 %v312, 0.0
  %v399 = vmax.f32 %v315, 0.0
  %v400 = vmax.f32 %v318, 0.0
  %v401 = vmax.f32 %v321, 0.0
  %v402 = vmax.f32 %v324, 0.0
  %v403 = vmax.f32 %v327, 0.0
  %v404 = vmax.f32 %v330, 0.0
  %v405 = vmax.f32 %v333, 0.0
  %v406 = vmax.f32 %v336, 0.0
  %v407 = vmax.f32 %v339, 0.0
  %v408 = vmax.f32 %v342, 0.0
  %v409 = vmax.f32 %v345, 0.0
  %v410 = vmax.f32 %v348, 0.0
  %v411 = vmax.f32 %v351, 0.0
  %v412 = vmax.f32 %v354, 0.0
  %v413 = vmax.f32 %v357, 0.0
  %v414 = vmax.f32 %v360, 0.0
  %v415 = vmax.f32 %v363, 0.0
  %v416 = vmax.f32 %v366, 0.0
  %v417 = vmax.f32 %v369, 0.0
  %v418 = vmax.f32 %v372, 0.0
  %v420 = vperm.slane %v32, 0
  %v422 = vmul.f32 %v374, %v420
  %v423 = vmul.f32 %v375, %v420
  %v424 = vmul.f32 %v376, %v420
  %v425 = vmul.f32 %v377, %v420
  %v426 = vmul.f32 %v378, %v420
  %v427 = vmul.f32 %v379, %v420
  %v428 = vmul.f32 %v380, %v420
  %v429 = vmul.f32 %v381, %v420
  %v430 = vmul.f32 %v382, %v420
  %v431 = vmul.f32 %v383, %v420
  %v432 = vmul.f32 %v384, %v420
  %v433 = vmul.f32 %v385, %v420
  %v434 = vmul.f32 %v386, %v420
  %v435 = vmul.f32 %v387, %v420
  %v436 = vmul.f32 %v388, %v420
  %v437 = vmul.f32 %v389, %v420
  %v438 = vmul.f32 %v390, %v420
  %v439 = vmul.f32 %v391, %v420
  %v440 = vmul.f32 %v392, %v420
  %v441 = vmul.f32 %v393, %v420
  %v442 = vmul.f32 %v394, %v420
  %v443 = vmul.f32 %v395, %v420
  %v444 = vmul.f32 %v396, %v420
  %v445 = vmul.f32 %v397, %v420
  %v446 = vmul.f32 %v398, %v420
  %v447 = vmul.f32 %v399, %v420
  %v448 = vmul.f32 %v400, %v420
  %v449 = vmul.f32 %v401, %v420
  %v450 = vmul.f32 %v402, %v420
  %v451 = vmul.f32 %v403, %v420
  %v452 = vmul.f32 %v404, %v420
  %v453 = vmul.f32 %v405, %v420
  %v454 = vmul.f32 %v406, %v420
  %v455 = vmul.f32 %v407, %v420
  %v456 = vmul.f32 %v408, %v420
  %v457 = vmul.f32 %v409, %v420
  %v458 = vmul.f32 %v410, %v420
  %v459 = vmul.f32 %v411, %v420
  %v460 = vmul.f32 %v412, %v420
  %v461 = vmul.f32 %v413, %v420
  %v462 = vmul.f32 %v414, %v420
  %v463 = vmul.f32 %v415, %v420
  %v464 = vmul.f32 %v416, %v420
  %v465 = vmul.f32 %v417, %v420
  %v466 = vmul.f32 %v418, %v420
  %v468 = vperm.slane %v33, 0
  %v470 = vadd.f32 %v422, %v468
  %v471 = vadd.f32 %v423, %v468
  %v472 = vadd.f32 %v424, %v468
  %v473 = vadd.f32 %v425, %v468
  %v474 = vadd.f32 %v426, %v468
  %v475 = vadd.f32 %v427, %v468
  %v476 = vadd.f32 %v428, %v468
  %v477 = vadd.f32 %v429, %v468
  %v478 = vadd.f32 %v430, %v468
  %v479 = vadd.f32 %v431, %v468
  %v480 = vadd.f32 %v432, %v468
  %v481 = vadd.f32 %v433, %v468
  %v482 = vadd.f32 %v434, %v468
  %v483 = vadd.f32 %v435, %v468
  %v484 = vadd.f32 %v436, %v468
  %v485 = vadd.f32 %v437, %v468
  %v486 = vadd.f32 %v438, %v468
  %v487 = vadd.f32 %v439, %v468
  %v488 = vadd.f32 %v440, %v468
  %v489 = vadd.f32 %v441, %v468
  %v490 = vadd.f32 %v442, %v468
  %v491 = vadd.f32 %v443, %v468
  %v492 = vadd.f32 %v444, %v468
  %v493 = vadd.f32 %v445, %v468
  %v494 = vadd.f32 %v446, %v468
  %v495 = vadd.f32 %v447, %v468
  %v496 = vadd.f32 %v448, %v468
  %v497 = vadd.f32 %v449, %v468
  %v498 = vadd.f32 %v450, %v468
  %v499 = vadd.f32 %v451, %v468
  %v500 = vadd.f32 %v452, %v468
  %v501 = vadd.f32 %v453, %v468
  %v502 = vadd.f32 %v454, %v468
  %v503 = vadd.f32 %v455, %v468
  %v504 = vadd.f32 %v456, %v468
  %v505 = vadd.f32 %v457, %v468
  %v506 = vadd.f32 %v458, %v468
  %v507 = vadd.f32 %v459, %v468
  %v508 = vadd.f32 %v460, %v468
  %v509 = vadd.f32 %v461, %v468
  %v510 = vadd.f32 %v462, %v468
  %v511 = vadd.f32 %v463, %v468
  %v512 = vadd.f32 %v464, %v468
  %v513 = vadd.f32 %v465, %v468
  %v514 = vadd.f32 %v466, %v468
  %v515 = vld [vmem:[%s1] sm:$0xff]
  %v516 = vld [vmem:[%s1 + $0x8] sm:$0xff]
  %v517 = vld [vmem:[%s1 + $0x10] sm:$0xff]
  %v518 = vld [vmem:[%s1 + $0x18] sm:$0xff]
  %v519 = vld [vmem:[%s1 + $0x20] sm:$0xff]
  %v520 = vld [vmem:[%s1 + $0x28] sm:$0xff]
  %v521 = vld [vmem:[%s1 + $0x30] sm:$0xff]
  %v522 = vld [vmem:[%s1 + $0x38] sm:$0xff]
  %v523 = vld [vmem:[%s1 + $0x40] sm:$0xff]
  %v524 = vld [vmem:[%s1 + $0x48] sm:$0xff]
  %v525 = vld [vmem:[%s1 + $0x50] sm:$0xff]
  %v526 = vld [vmem:[%s1 + $0x58] sm:$0xff]
  %v527 = vld [vmem:[%s1 + $0x60] sm:$0xff]
  %v528 = vld [vmem:[%s1 + $0x68] sm:$0xff]
  %v529 = vld [vmem:[%s1 + $0x70] sm:$0xff]
  %v530 = vld [vmem:[%s1 + $0x78] sm:$0xff]
  %v531 = vld [vmem:[%s1 + $0x80] sm:$0xff]
  %v532 = vld [vmem:[%s1 + $0x88] sm:$0xff]
  %v533 = vld [vmem:[%s1 + $0x90] sm:$0xff]
  %v534 = vld [vmem:[%s1 + $0x98] sm:$0xff]
  %v535 = vld [vmem:[%s1 + $0xa0] sm:$0xff]
  %v536 = vld [vmem:[%s1 + $0xa8] sm:$0xff]
  %v537 = vld [vmem:[%s1 + $0xb0] sm:$0xff]
  %v538 = vld [vmem:[%s1 + $0xb8] sm:$0xff]
  %v539 = vld [vmem:[%s1 + $0xc0] sm:$0xff]
  %v540 = vld [vmem:[%s1 + $0xc8] sm:$0xff]
  %v541 = vld [vmem:[%s1 + $0xd0] sm:$0xff]
  %v542 = vld [vmem:[%s1 + $0xd8] sm:$0xff]
  %v543 = vld [vmem:[%s1 + $0xe0] sm:$0xff]
  %v544 = vld [vmem:[%s1 + $0xe8] sm:$0xff]
  %v545 = vld [vmem:[%s1 + $0xf0] sm:$0xff]
  %v546 = vld [vmem:[%s1 + $0xf8] sm:$0xff]
  %v547 = vld [vmem:[%s1 + $0x100] sm:$0xff]
  %v548 = vld [vmem:[%s1 + $0x108] sm:$0xff]
  %v549 = vld [vmem:[%s1 + $0x110] sm:$0xff]
  %v550 = vld [vmem:[%s1 + $0x118] sm:$0xff]
  %v551 = vld [vmem:[%s1 + $0x120] sm:$0xff]
  %v552 = vld [vmem:[%s1 + $0x128] sm:$0xff]
  %v553 = vld [vmem:[%s1 + $0x130] sm:$0xff]
  %v554 = vld [vmem:[%s1 + $0x138] sm:$0xff]
  %v555 = vld [vmem:[%s1 + $0x140] sm:$0xff]
  %v556 = vld [vmem:[%s1 + $0x148] sm:$0xff]
  %v557 = vld [vmem:[%s1 + $0x150] sm:$0xff]
  %v558 = vld [vmem:[%s1 + $0x158] sm:$0xff]
  %v559 = vld [vmem:[%s1 + $0x160] sm:$0xff]
  %v561 = vsel %vm82, %v515, 0
  %v564 = vsel %vm82, %v516, 0
  %v567 = vsel %vm82, %v517, 0
  %v570 = vsel %vm82, %v518, 0
  %v573 = vsel %vm82, %v519, 0
  %v576 = vsel %vm82, %v520, 0
  %v579 = vsel %vm82, %v521, 0
  %v582 = vsel %vm82, %v522, 0
  %v585 = vsel %vm82, %v523, 0
  %v588 = vsel %vm82, %v524, 0
  %v591 = vsel %vm82, %v525, 0
  %v594 = vsel %vm82, %v526, 0
  %v597 = vsel %vm82, %v527, 0
  %v600 = vsel %vm82, %v528, 0
  %v603 = vsel %vm82, %v529, 0
  %v606 = vsel %vm82, %v530, 0
  %v609 = vsel %vm82, %v531, 0
  %v612 = vsel %vm82, %v532, 0
  %v615 = vsel %vm82, %v533, 0
  %v618 = vsel %vm82, %v534, 0
  %v621 = vsel %vm82, %v535, 0
  %v624 = vsel %vm82, %v536, 0
  %v627 = vsel %vm82, %v537, 0
  %v630 = vsel %vm82, %v538, 0
  %v633 = vsel %vm82, %v539, 0
  %v636 = vsel %vm82, %v540, 0
  %v639 = vsel %vm82, %v541, 0
  %v642 = vsel %vm82, %v542, 0
  %v645 = vsel %vm82, %v543, 0
  %v648 = vsel %vm82, %v544, 0
  %v651 = vsel %vm82, %v545, 0
  %v654 = vsel %vm82, %v546, 0
  %v657 = vsel %vm82, %v547, 0
  %v660 = vsel %vm82, %v548, 0
  %v663 = vsel %vm82, %v549, 0
  %v666 = vsel %vm82, %v550, 0
  %v669 = vsel %vm82, %v551, 0
  %v672 = vsel %vm82, %v552, 0
  %v675 = vsel %vm82, %v553, 0
  %v678 = vsel %vm82, %v554, 0
  %v681 = vsel %vm82, %v555, 0
  %v684 = vsel %vm82, %v556, 0
  %v687 = vsel %vm82, %v557, 0
  %v690 = vsel %vm82, %v558, 0
  %v693 = vsel %vm82, %v559, 0
  %695 = vmatpush.msra.mxu0 0.0
  %696 = vmatpush.msra.mxu0 0.0
  %697 = vmatpush.msra.mxu0 0.0
  %698 = vmatpush.msra.mxu0 0.0
  %699 = vmatpush.msra.mxu0 0.0
  %700 = vmatpush.msra.mxu0 0.0
  %701 = vmatpush.msra.mxu0 0.0
  %702 = vmatpush.msra.mxu0 0.0
  %703 = vmatpush.msra.mxu0 0.0
  %704 = vmatpush.msra.mxu0 0.0
  %705 = vmatpush.msra.mxu0 0.0
  %706 = vmatpush.msra.mxu0 0.0
  %707 = vmatpush.msra.mxu0 0.0
  %708 = vmatpush.msra.mxu0 0.0
  %709 = vmatpush.msra.mxu0 %v220
  %710 = vmatpush.msra.mxu0 %v29
  %711 = vmatmul.f32.gmra.mxu0 %v561
  %v712 = vpop.f32.mrf.mxu0
  %v713 = vadd.f32 %v80, %v712
  %714 = vmatmul.f32.gmra.mxu0 %v564
  %v715 = vpop.f32.mrf.mxu0
  %v716 = vadd.f32 %v80, %v715
  %717 = vmatmul.f32.gmra.mxu0 %v567
  %v718 = vpop.f32.mrf.mxu0
  %v719 = vadd.f32 %v80, %v718
  %720 = vmatmul.f32.gmra.mxu0 %v570
  %v721 = vpop.f32.mrf.mxu0
  %v722 = vadd.f32 %v80, %v721
  %723 = vmatmul.f32.gmra.mxu0 %v573
  %v724 = vpop.f32.mrf.mxu0
  %v725 = vadd.f32 %v80, %v724
  %726 = vmatmul.f32.gmra.mxu0 %v576
  %v727 = vpop.f32.mrf.mxu0
  %v728 = vadd.f32 %v80, %v727
  %729 = vmatmul.f32.gmra.mxu0 %v579
  %v730 = vpop.f32.mrf.mxu0
  %v731 = vadd.f32 %v80, %v730
  %732 = vmatmul.f32.gmra.mxu0 %v582
  %v733 = vpop.f32.mrf.mxu0
  %v734 = vadd.f32 %v80, %v733
  %735 = vmatmul.f32.gmra.mxu0 %v585
  %v736 = vpop.f32.mrf.mxu0
  %v737 = vadd.f32 %v80, %v736
  %738 = vmatmul.f32.gmra.mxu0 %v588
  %v739 = vpop.f32.mrf.mxu0
  %v740 = vadd.f32 %v80, %v739
  %741 = vmatmul.f32.gmra.mxu0 %v591
  %v742 = vpop.f32.mrf.mxu0
  %v743 = vadd.f32 %v80, %v742
  %744 = vmatmul.f32.gmra.mxu0 %v594
  %v745 = vpop.f32.mrf.mxu0
  %v746 = vadd.f32 %v80, %v745
  %747 = vmatmul.f32.gmra.mxu0 %v597
  %v748 = vpop.f32.mrf.mxu0
  %v749 = vadd.f32 %v80, %v748
  %750 = vmatmul.f32.gmra.mxu0 %v600
  %v751 = vpop.f32.mrf.mxu0
  %v752 = vadd.f32 %v80, %v751
  %753 = vmatmul.f32.gmra.mxu0 %v603
  %v754 = vpop.f32.mrf.mxu0
  %v755 = vadd.f32 %v80, %v754
  %756 = vmatmul.f32.gmra.mxu0 %v606
  %v757 = vpop.f32.mrf.mxu0
  %v758 = vadd.f32 %v80, %v757
  %759 = vmatmul.f32.gmra.mxu0 %v609
  %v760 = vpop.f32.mrf.mxu0
  %v761 = vadd.f32 %v80, %v760
  %762 = vmatmul.f32.gmra.mxu0 %v612
  %v763 = vpop.f32.mrf.mxu0
  %v764 = vadd.f32 %v80, %v763
  %765 = vmatmul.f32.gmra.mxu0 %v615
  %v766 = vpop.f32.mrf.mxu0
  %v767 = vadd.f32 %v80, %v766
  %768 = vmatmul.f32.gmra.mxu0 %v618
  %v769 = vpop.f32.mrf.mxu0
  %v770 = vadd.f32 %v80, %v769
  %771 = vmatmul.f32.gmra.mxu0 %v621
  %v772 = vpop.f32.mrf.mxu0
  %v773 = vadd.f32 %v80, %v772
  %774 = vmatmul.f32.gmra.mxu0 %v624
  %v775 = vpop.f32.mrf.mxu0
  %v776 = vadd.f32 %v80, %v775
  %777 = vmatmul.f32.gmra.mxu0 %v627
  %v778 = vpop.f32.mrf.mxu0
  %v779 = vadd.f32 %v80, %v778
  %780 = vmatmul.f32.gmra.mxu0 %v630
  %v781 = vpop.f32.mrf.mxu0
  %v782 = vadd.f32 %v80, %v781
  %783 = vmatmul.f32.gmra.mxu0 %v633
  %v784 = vpop.f32.mrf.mxu0
  %v785 = vadd.f32 %v80, %v784
  %786 = vmatmul.f32.gmra.mxu0 %v636
  %v787 = vpop.f32.mrf.mxu0
  %v788 = vadd.f32 %v80, %v787
  %789 = vmatmul.f32.gmra.mxu0 %v639
  %v790 = vpop.f32.mrf.mxu0
  %v791 = vadd.f32 %v80, %v790
  %792 = vmatmul.f32.gmra.mxu0 %v642
  %v793 = vpop.f32.mrf.mxu0
  %v794 = vadd.f32 %v80, %v793
  %795 = vmatmul.f32.gmra.mxu0 %v645
  %v796 = vpop.f32.mrf.mxu0
  %v797 = vadd.f32 %v80, %v796
  %798 = vmatmul.f32.gmra.mxu0 %v648
  %v799 = vpop.f32.mrf.mxu0
  %v800 = vadd.f32 %v80, %v799
  %801 = vmatmul.f32.gmra.mxu0 %v651
  %v802 = vpop.f32.mrf.mxu0
  %v803 = vadd.f32 %v80, %v802
  %804 = vmatmul.f32.gmra.mxu0 %v654
  %v805 = vpop.f32.mrf.mxu0
  %v806 = vadd.f32 %v80, %v805
  %807 = vmatmul.f32.gmra.mxu0 %v657
  %v808 = vpop.f32.mrf.mxu0
  %v809 = vadd.f32 %v80, %v808
  %810 = vmatmul.f32.gmra.mxu0 %v660
  %v811 = vpop.f32.mrf.mxu0
  %v812 = vadd.f32 %v80, %v811
  %813 = vmatmul.f32.gmra.mxu0 %v663
  %v814 = vpop.f32.mrf.mxu0
  %v815 = vadd.f32 %v80, %v814
  %816 = vmatmul.f32.gmra.mxu0 %v666
  %v817 = vpop.f32.mrf.mxu0
  %v818 = vadd.f32 %v80, %v817
  %819 = vmatmul.f32.gmra.mxu0 %v669
  %v820 = vpop.f32.mrf.mxu0
  %v821 = vadd.f32 %v80, %v820
  %822 = vmatmul.f32.gmra.mxu0 %v672
  %v823 = vpop.f32.mrf.mxu0
  %v824 = vadd.f32 %v80, %v823
  %825 = vmatmul.f32.gmra.mxu0 %v675
  %v826 = vpop.f32.mrf.mxu0
  %v827 = vadd.f32 %v80, %v826
  %828 = vmatmul.f32.gmra.mxu0 %v678
  %v829 = vpop.f32.mrf.mxu0
  %v830 = vadd.f32 %v80, %v829
  %831 = vmatmul.f32.gmra.mxu0 %v681
  %v832 = vpop.f32.mrf.mxu0
  %v833 = vadd.f32 %v80, %v832
  %834 = vmatmul.f32.gmra.mxu0 %v684
  %v835 = vpop.f32.mrf.mxu0
  %v836 = vadd.f32 %v80, %v835
  %837 = vmatmul.f32.gmra.mxu0 %v687
  %v838 = vpop.f32.mrf.mxu0
  %v839 = vadd.f32 %v80, %v838
  %840 = vmatmul.f32.gmra.mxu0 %v690
  %v841 = vpop.f32.mrf.mxu0
  %v842 = vadd.f32 %v80, %v841
  %843 = vmatmul.f32.gmra.mxu0 %v693
  %v844 = vpop.f32.mrf.mxu0
  %v845 = vadd.f32 %v80, %v844
  %846 = vdwg.mxu0
  %v847 = vmax.f32 %v713, 0.0
  %v848 = vmax.f32 %v716, 0.0
  %v849 = vmax.f32 %v719, 0.0
  %v850 = vmax.f32 %v722, 0.0
  %v851 = vmax.f32 %v725, 0.0
  %v852 = vmax.f32 %v728, 0.0
  %v853 = vmax.f32 %v731, 0.0
  %v854 = vmax.f32 %v734, 0.0
  %v855 = vmax.f32 %v737, 0.0
  %v856 = vmax.f32 %v740, 0.0
  %v857 = vmax.f32 %v743, 0.0
  %v858 = vmax.f32 %v746, 0.0
  %v859 = vmax.f32 %v749, 0.0
  %v860 = vmax.f32 %v752, 0.0
  %v861 = vmax.f32 %v755, 0.0
  %v862 = vmax.f32 %v758, 0.0
  %v863 = vmax.f32 %v761, 0.0
  %v864 = vmax.f32 %v764, 0.0
  %v865 = vmax.f32 %v767, 0.0
  %v866 = vmax.f32 %v770, 0.0
  %v867 = vmax.f32 %v773, 0.0
  %v868 = vmax.f32 %v776, 0.0
  %v869 = vmax.f32 %v779, 0.0
  %v870 = vmax.f32 %v782, 0.0
  %v871 = vmax.f32 %v785, 0.0
  %v872 = vmax.f32 %v788, 0.0
  %v873 = vmax.f32 %v791, 0.0
  %v874 = vmax.f32 %v794, 0.0
  %v875 = vmax.f32 %v797, 0.0
  %v876 = vmax.f32 %v800, 0.0
  %v877 = vmax.f32 %v803, 0.0
  %v878 = vmax.f32 %v806, 0.0
  %v879 = vmax.f32 %v809, 0.0
  %v880 = vmax.f32 %v812, 0.0
  %v881 = vmax.f32 %v815, 0.0
  %v882 = vmax.f32 %v818, 0.0
  %v883 = vmax.f32 %v821, 0.0
  %v884 = vmax.f32 %v824, 0.0
  %v885 = vmax.f32 %v827, 0.0
  %v886 = vmax.f32 %v830, 0.0
  %v887 = vmax.f32 %v833, 0.0
  %v888 = vmax.f32 %v836, 0.0
  %v889 = vmax.f32 %v839, 0.0
  %v890 = vmax.f32 %v842, 0.0
  %v891 = vmax.f32 %v845, 0.0
  %v892 = vmul.f32 %v847, %v420
  %v893 = vmul.f32 %v848, %v420
  %v894 = vmul.f32 %v849, %v420
  %v895 = vmul.f32 %v850, %v420
  %v896 = vmul.f32 %v851, %v420
  %v897 = vmul.f32 %v852, %v420
  %v898 = vmul.f32 %v853, %v420
  %v899 = vmul.f32 %v854, %v420
  %v900 = vmul.f32 %v855, %v420
  %v901 = vmul.f32 %v856, %v420
  %v902 = vmul.f32 %v857, %v420
  %v903 = vmul.f32 %v858, %v420
  %v904 = vmul.f32 %v859, %v420
  %v905 = vmul.f32 %v860, %v420
  %v906 = vmul.f32 %v861, %v420
  %v907 = vmul.f32 %v862, %v420
  %v908 = vmul.f32 %v863, %v420
  %v909 = vmul.f32 %v864, %v420
  %v910 = vmul.f32 %v865, %v420
  %v911 = vmul.f32 %v866, %v420
  %v912 = vmul.f32 %v867, %v420
  %v913 = vmul.f32 %v868, %v420
  %v914 = vmul.f32 %v869, %v420
  %v915 = vmul.f32 %v870, %v420
  %v916 = vmul.f32 %v871, %v420
  %v917 = vmul.f32 %v872, %v420
  %v918 = vmul.f32 %v873, %v420
  %v919 = vmul.f32 %v874, %v420
  %v920 = vmul.f32 %v875, %v420
  %v921 = vmul.f32 %v876, %v420
  %v922 = vmul.f32 %v877, %v420
  %v923 = vmul.f32 %v878, %v420
  %v924 = vmul.f32 %v879, %v420
  %v925 = vmul.f32 %v880, %v420
  %v926 = vmul.f32 %v881, %v420
  %v927 = vmul.f32 %v882, %v420
  %v928 = vmul.f32 %v883, %v420
  %v929 = vmul.f32 %v884, %v420
  %v930 = vmul.f32 %v885, %v420
  %v931 = vmul.f32 %v886, %v420
  %v932 = vmul.f32 %v887, %v420
  %v933 = vmul.f32 %v888, %v420
  %v934 = vmul.f32 %v889, %v420
  %v935 = vmul.f32 %v890, %v420
  %v936 = vmul.f32 %v891, %v420
  %v937 = vadd.f32 %v892, %v468
  %v938 = vadd.f32 %v893, %v468
  %v939 = vadd.f32 %v894, %v468
  %v940 = vadd.f32 %v895, %v468
  %v941 = vadd.f32 %v896, %v468
  %v942 = vadd.f32 %v897, %v468
  %v943 = vadd.f32 %v898, %v468
  %v944 = vadd.f32 %v899, %v468
  %v945 = vadd.f32 %v900, %v468
  %v946 = vadd.f32 %v901, %v468
  %v947 = vadd.f32 %v902, %v468
  %v948 = vadd.f32 %v903, %v468
  %v949 = vadd.f32 %v904, %v468
  %v950 = vadd.f32 %v905, %v468
  %v951 = vadd.f32 %v906, %v468
  %v952 = vadd.f32 %v907, %v468
  %v953 = vadd.f32 %v908, %v468
  %v954 = vadd.f32 %v909, %v468
  %v955 = vadd.f32 %v910, %v468
  %v956 = vadd.f32 %v911, %v468
  %v957 = vadd.f32 %v912, %v468
  %v958 = vadd.f32 %v913, %v468
  %v959 = vadd.f32 %v914, %v468
  %v960 = vadd.f32 %v915, %v468
  %v961 = vadd.f32 %v916, %v468
  %v962 = vadd.f32 %v917, %v468
  %v963 = vadd.f32 %v918, %v468
  %v964 = vadd.f32 %v919, %v468
  %v965 = vadd.f32 %v920, %v468
  %v966 = vadd.f32 %v921, %v468
  %v967 = vadd.f32 %v922, %v468
  %v968 = vadd.f32 %v923, %v468
  %v969 = vadd.f32 %v924, %v468
  %v970 = vadd.f32 %v925, %v468
  %v971 = vadd.f32 %v926, %v468
  %v972 = vadd.f32 %v927, %v468
  %v973 = vadd.f32 %v928, %v468
  %v974 = vadd.f32 %v929, %v468
  %v975 = vadd.f32 %v930, %v468
  %v976 = vadd.f32 %v931, %v468
  %v977 = vadd.f32 %v932, %v468
  %v978 = vadd.f32 %v933, %v468
  %v979 = vadd.f32 %v934, %v468
  %v980 = vadd.f32 %v935, %v468
  %v981 = vadd.f32 %v936, %v468
  %v982 = vmax.f32 %v470, %v937
  %v983 = vmax.f32 %v471, %v938
  %v984 = vmax.f32 %v472, %v939
  %v985 = vmax.f32 %v473, %v940
  %v986 = vmax.f32 %v474, %v941
  %v987 = vmax.f32 %v475, %v942
  %v988 = vmax.f32 %v476, %v943
  %v989 = vmax.f32 %v477, %v944
  %v990 = vmax.f32 %v478, %v945
  %v991 = vmax.f32 %v479, %v946
  %v992 = vmax.f32 %v480, %v947
  %v993 = vmax.f32 %v481, %v948
  %v994 = vmax.f32 %v482, %v949
  %v995 = vmax.f32 %v483, %v950
  %v996 = vmax.f32 %v484, %v951
  %v997 = vmax.f32 %v485, %v952
  %v998 = vmax.f32 %v486, %v953
  %v999 = vmax.f32 %v487, %v954
  %v1000 = vmax.f32 %v488, %v955
  %v1001 = vmax.f32 %v489, %v956
  %v1002 = vmax.f32 %v490, %v957
  %v1003 = vmax.f32 %v491, %v958
  %v1004 = vmax.f32 %v492, %v959
  %v1005 = vmax.f32 %v493, %v960
  %v1006 = vmax.f32 %v494, %v961
  %v1007 = vmax.f32 %v495, %v962
  %v1008 = vmax.f32 %v496, %v963
  %v1009 = vmax.f32 %v497, %v964
  %v1010 = vmax.f32 %v498, %v965
  %v1011 = vmax.f32 %v499, %v966
  %v1012 = vmax.f32 %v500, %v967
  %v1013 = vmax.f32 %v501, %v968
  %v1014 = vmax.f32 %v502, %v969
  %v1015 = vmax.f32 %v503, %v970
  %v1016 = vmax.f32 %v504, %v971
  %v1017 = vmax.f32 %v505, %v972
  %v1018 = vmax.f32 %v506, %v973
  %v1019 = vmax.f32 %v507, %v974
  %v1020 = vmax.f32 %v508, %v975
  %v1021 = vmax.f32 %v509, %v976
  %v1022 = vmax.f32 %v510, %v977
  %v1023 = vmax.f32 %v511, %v978
  %v1024 = vmax.f32 %v512, %v979
  %v1025 = vmax.f32 %v513, %v980
  %v1026 = vmax.f32 %v514, %v981
  %v1027 = vld [vmem:[%s2] sm:$0xff]
  %v1028 = vld [vmem:[%s2 + $0x8] sm:$0xff]
  %v1029 = vld [vmem:[%s2 + $0x10] sm:$0xff]
  %v1030 = vld [vmem:[%s2 + $0x18] sm:$0xff]
  %v1031 = vld [vmem:[%s2 + $0x20] sm:$0xff]
  %v1032 = vld [vmem:[%s2 + $0x28] sm:$0xff]
  %v1033 = vld [vmem:[%s2 + $0x30] sm:$0xff]
  %v1034 = vld [vmem:[%s2 + $0x38] sm:$0xff]
  %v1035 = vld [vmem:[%s2 + $0x40] sm:$0xff]
  %v1036 = vld [vmem:[%s2 + $0x48] sm:$0xff]
  %v1037 = vld [vmem:[%s2 + $0x50] sm:$0xff]
  %v1038 = vld [vmem:[%s2 + $0x58] sm:$0xff]
  %v1039 = vld [vmem:[%s2 + $0x60] sm:$0xff]
  %v1040 = vld [vmem:[%s2 + $0x68] sm:$0xff]
  %v1041 = vld [vmem:[%s2 + $0x70] sm:$0xff]
  %v1042 = vld [vmem:[%s2 + $0x78] sm:$0xff]
  %v1043 = vld [vmem:[%s2 + $0x80] sm:$0xff]
  %v1044 = vld [vmem:[%s2 + $0x88] sm:$0xff]
  %v1045 = vld [vmem:[%s2 + $0x90] sm:$0xff]
  %v1046 = vld [vmem:[%s2 + $0x98] sm:$0xff]
  %v1047 = vld [vmem:[%s2 + $0xa0] sm:$0xff]
  %v1048 = vld [vmem:[%s2 + $0xa8] sm:$0xff]
  %v1049 = vld [vmem:[%s2 + $0xb0] sm:$0xff]
  %v1050 = vld [vmem:[%s2 + $0xb8] sm:$0xff]
  %v1051 = vld [vmem:[%s2 + $0xc0] sm:$0xff]
  %v1052 = vld [vmem:[%s2 + $0xc8] sm:$0xff]
  %v1053 = vld [vmem:[%s2 + $0xd0] sm:$0xff]
  %v1054 = vld [vmem:[%s2 + $0xd8] sm:$0xff]
  %v1055 = vld [vmem:[%s2 + $0xe0] sm:$0xff]
  %v1056 = vld [vmem:[%s2 + $0xe8] sm:$0xff]
  %v1057 = vld [vmem:[%s2 + $0xf0] sm:$0xff]
  %v1058 = vld [vmem:[%s2 + $0xf8] sm:$0xff]
  %v1059 = vld [vmem:[%s2 + $0x100] sm:$0xff]
  %v1060 = vld [vmem:[%s2 + $0x108] sm:$0xff]
  %v1061 = vld [vmem:[%s2 + $0x110] sm:$0xff]
  %v1062 = vld [vmem:[%s2 + $0x118] sm:$0xff]
  %v1063 = vld [vmem:[%s2 + $0x120] sm:$0xff]
  %v1064 = vld [vmem:[%s2 + $0x128] sm:$0xff]
  %v1065 = vld [vmem:[%s2 + $0x130] sm:$0xff]
  %v1066 = vld [vmem:[%s2 + $0x138] sm:$0xff]
  %v1067 = vld [vmem:[%s2 + $0x140] sm:$0xff]
  %v1068 = vld [vmem:[%s2 + $0x148] sm:$0xff]
  %v1069 = vld [vmem:[%s2 + $0x150] sm:$0xff]
  %v1070 = vld [vmem:[%s2 + $0x158] sm:$0xff]
  %v1071 = vld [vmem:[%s2 + $0x160] sm:$0xff]
  %v1073 = vsel %vm82, %v1027, 0
  %v1076 = vsel %vm82, %v1028, 0
  %v1079 = vsel %vm82, %v1029, 0
  %v1082 = vsel %vm82, %v1030, 0
  %v1085 = vsel %vm82, %v1031, 0
  %v1088 = vsel %vm82, %v1032, 0
  %v1091 = vsel %vm82, %v1033, 0
  %v1094 = vsel %vm82, %v1034, 0
  %v1097 = vsel %vm82, %v1035, 0
  %v1100 = vsel %vm82, %v1036, 0
  %v1103 = vsel %vm82, %v1037, 0
  %v1106 = vsel %vm82, %v1038, 0
  %v1109 = vsel %vm82, %v1039, 0
  %v1112 = vsel %vm82, %v1040, 0
  %v1115 = vsel %vm82, %v1041, 0
  %v1118 = vsel %vm82, %v1042, 0
  %v1121 = vsel %vm82, %v1043, 0
  %v1124 = vsel %vm82, %v1044, 0
  %v1127 = vsel %vm82, %v1045, 0
  %v1130 = vsel %vm82, %v1046, 0
  %v1133 = vsel %vm82, %v1047, 0
  %v1136 = vsel %vm82, %v1048, 0
  %v1139 = vsel %vm82, %v1049, 0
  %v1142 = vsel %vm82, %v1050, 0
  %v1145 = vsel %vm82, %v1051, 0
  %v1148 = vsel %vm82, %v1052, 0
  %v1151 = vsel %vm82, %v1053, 0
  %v1154 = vsel %vm82, %v1054, 0
  %v1157 = vsel %vm82, %v1055, 0
  %v1160 = vsel %vm82, %v1056, 0
  %v1163 = vsel %vm82, %v1057, 0
  %v1166 = vsel %vm82, %v1058, 0
  %v1169 = vsel %vm82, %v1059, 0
  %v1172 = vsel %vm82, %v1060, 0
  %v1175 = vsel %vm82, %v1061, 0
  %v1178 = vsel %vm82, %v1062, 0
  %v1181 = vsel %vm82, %v1063, 0
  %v1184 = vsel %vm82, %v1064, 0
  %v1187 = vsel %vm82, %v1065, 0
  %v1190 = vsel %vm82, %v1066, 0
  %v1193 = vsel %vm82, %v1067, 0
  %v1196 = vsel %vm82, %v1068, 0
  %v1199 = vsel %vm82, %v1069, 0
  %v1202 = vsel %vm82, %v1070, 0
  %v1205 = vsel %vm82, %v1071, 0
  %1207 = vmatpush.msra.mxu0 0.0
  %1208 = vmatpush.msra.mxu0 0.0
  %1209 = vmatpush.msra.mxu0 0.0
  %1210 = vmatpush.msra.mxu0 0.0
  %1211 = vmatpush.msra.mxu0 0.0
  %1212 = vmatpush.msra.mxu0 0.0
  %1213 = vmatpush.msra.mxu0 0.0
  %1214 = vmatpush.msra.mxu0 0.0
  %1215 = vmatpush.msra.mxu0 0.0
  %1216 = vmatpush.msra.mxu0 0.0
  %1217 = vmatpush.msra.mxu0 0.0
  %1218 = vmatpush.msra.mxu0 0.0
  %1219 = vmatpush.msra.mxu0 0.0
  %1220 = vmatpush.msra.mxu0 0.0
  %1221 = vmatpush.msra.mxu0 %v220
  %1222 = vmatpush.msra.mxu0 %v29
  %1223 = vmatmul.f32.gmra.mxu0 %v1073
  %v1224 = vpop.f32.mrf.mxu0
  %v1225 = vadd.f32 %v80, %v1224
  %1226 = vmatmul.f32.gmra.mxu0 %v1076
  %v1227 = vpop.f32.mrf.mxu0
  %v1228 = vadd.f32 %v80, %v1227
  %1229 = vmatmul.f32.gmra.mxu0 %v1079
  %v1230 = vpop.f32.mrf.mxu0
  %v1231 = vadd.f32 %v80, %v1230
  %1232 = vmatmul.f32.gmra.mxu0 %v1082
  %v1233 = vpop.f32.mrf.mxu0
  %v1234 = vadd.f32 %v80, %v1233
  %1235 = vmatmul.f32.gmra.mxu0 %v1085
  %v1236 = vpop.f32.mrf.mxu0
  %v1237 = vadd.f32 %v80, %v1236
  %1238 = vmatmul.f32.gmra.mxu0 %v1088
  %v1239 = vpop.f32.mrf.mxu0
  %v1240 = vadd.f32 %v80, %v1239
  %1241 = vmatmul.f32.gmra.mxu0 %v1091
  %v1242 = vpop.f32.mrf.mxu0
  %v1243 = vadd.f32 %v80, %v1242
  %1244 = vmatmul.f32.gmra.mxu0 %v1094
  %v1245 = vpop.f32.mrf.mxu0
  %v1246 = vadd.f32 %v80, %v1245
  %1247 = vmatmul.f32.gmra.mxu0 %v1097
  %v1248 = vpop.f32.mrf.mxu0
  %v1249 = vadd.f32 %v80, %v1248
  %1250 = vmatmul.f32.gmra.mxu0 %v1100
  %v1251 = vpop.f32.mrf.mxu0
  %v1252 = vadd.f32 %v80, %v1251
  %1253 = vmatmul.f32.gmra.mxu0 %v1103
  %v1254 = vpop.f32.mrf.mxu0
  %v1255 = vadd.f32 %v80, %v1254
  %1256 = vmatmul.f32.gmra.mxu0 %v1106
  %v1257 = vpop.f32.mrf.mxu0
  %v1258 = vadd.f32 %v80, %v1257
  %1259 = vmatmul.f32.gmra.mxu0 %v1109
  %v1260 = vpop.f32.mrf.mxu0
  %v1261 = vadd.f32 %v80, %v1260
  %1262 = vmatmul.f32.gmra.mxu0 %v1112
  %v1263 = vpop.f32.mrf.mxu0
  %v1264 = vadd.f32 %v80, %v1263
  %1265 = vmatmul.f32.gmra.mxu0 %v1115
  %v1266 = vpop.f32.mrf.mxu0
  %v1267 = vadd.f32 %v80, %v1266
  %1268 = vmatmul.f32.gmra.mxu0 %v1118
  %v1269 = vpop.f32.mrf.mxu0
  %v1270 = vadd.f32 %v80, %v1269
  %1271 = vmatmul.f32.gmra.mxu0 %v1121
  %v1272 = vpop.f32.mrf.mxu0
  %v1273 = vadd.f32 %v80, %v1272
  %1274 = vmatmul.f32.gmra.mxu0 %v1124
  %v1275 = vpop.f32.mrf.mxu0
  %v1276 = vadd.f32 %v80, %v1275
  %1277 = vmatmul.f32.gmra.mxu0 %v1127
  %v1278 = vpop.f32.mrf.mxu0
  %v1279 = vadd.f32 %v80, %v1278
  %1280 = vmatmul.f32.gmra.mxu0 %v1130
  %v1281 = vpop.f32.mrf.mxu0
  %v1282 = vadd.f32 %v80, %v1281
  %1283 = vmatmul.f32.gmra.mxu0 %v1133
  %v1284 = vpop.f32.mrf.mxu0
  %v1285 = vadd.f32 %v80, %v1284
  %1286 = vmatmul.f32.gmra.mxu0 %v1136
  %v1287 = vpop.f32.mrf.mxu0
  %v1288 = vadd.f32 %v80, %v1287
  %1289 = vmatmul.f32.gmra.mxu0 %v1139
  %v1290 = vpop.f32.mrf.mxu0
  %v1291 = vadd.f32 %v80, %v1290
  %1292 = vmatmul.f32.gmra.mxu0 %v1142
  %v1293 = vpop.f32.mrf.mxu0
  %v1294 = vadd.f32 %v80, %v1293
  %1295 = vmatmul.f32.gmra.mxu0 %v1145
  %v1296 = vpop.f32.mrf.mxu0
  %v1297 = vadd.f32 %v80, %v1296
  %1298 = vmatmul.f32.gmra.mxu0 %v1148
  %v1299 = vpop.f32.mrf.mxu0
  %v1300 = vadd.f32 %v80, %v1299
  %1301 = vmatmul.f32.gmra.mxu0 %v1151
  %v1302 = vpop.f32.mrf.mxu0
  %v1303 = vadd.f32 %v80, %v1302
  %1304 = vmatmul.f32.gmra.mxu0 %v1154
  %v1305 = vpop.f32.mrf.mxu0
  %v1306 = vadd.f32 %v80, %v1305
  %1307 = vmatmul.f32.gmra.mxu0 %v1157
  %v1308 = vpop.f32.mrf.mxu0
  %v1309 = vadd.f32 %v80, %v1308
  %1310 = vmatmul.f32.gmra.mxu0 %v1160
  %v1311 = vpop.f32.mrf.mxu0
  %v1312 = vadd.f32 %v80, %v1311
  %1313 = vmatmul.f32.gmra.mxu0 %v1163
  %v1314 = vpop.f32.mrf.mxu0
  %v1315 = vadd.f32 %v80, %v1314
  %1316 = vmatmul.f32.gmra.mxu0 %v1166
  %v1317 = vpop.f32.mrf.mxu0
  %v1318 = vadd.f32 %v80, %v1317
  %1319 = vmatmul.f32.gmra.mxu0 %v1169
  %v1320 = vpop.f32.mrf.mxu0
  %v1321 = vadd.f32 %v80, %v1320
  %1322 = vmatmul.f32.gmra.mxu0 %v1172
  %v1323 = vpop.f32.mrf.mxu0
  %v1324 = vadd.f32 %v80, %v1323
  %1325 = vmatmul.f32.gmra.mxu0 %v1175
  %v1326 = vpop.f32.mrf.mxu0
  %v1327 = vadd.f32 %v80, %v1326
  %1328 = vmatmul.f32.gmra.mxu0 %v1178
  %v1329 = vpop.f32.mrf.mxu0
  %v1330 = vadd.f32 %v80, %v1329
  %1331 = vmatmul.f32.gmra.mxu0 %v1181
  %v1332 = vpop.f32.mrf.mxu0
  %v1333 = vadd.f32 %v80, %v1332
  %1334 = vmatmul.f32.gmra.mxu0 %v1184
  %v1335 = vpop.f32.mrf.mxu0
  %v1336 = vadd.f32 %v80, %v1335
  %1337 = vmatmul.f32.gmra.mxu0 %v1187
  %v1338 = vpop.f32.mrf.mxu0
  %v1339 = vadd.f32 %v80, %v1338
  %1340 = vmatmul.f32.gmra.mxu0 %v1190
  %v1341 = vpop.f32.mrf.mxu0
  %v1342 = vadd.f32 %v80, %v1341
  %1343 = vmatmul.f32.gmra.mxu0 %v1193
  %v1344 = vpop.f32.mrf.mxu0
  %v1345 = vadd.f32 %v80, %v1344
  %1346 = vmatmul.f32.gmra.mxu0 %v1196
  %v1347 = vpop.f32.mrf.mxu0
  %v1348 = vadd.f32 %v80, %v1347
  %1349 = vmatmul.f32.gmra.mxu0 %v1199
  %v1350 = vpop.f32.mrf.mxu0
  %v1351 = vadd.f32 %v80, %v1350
  %1352 = vmatmul.f32.gmra.mxu0 %v1202
  %v1353 = vpop.f32.mrf.mxu0
  %v1354 = vadd.f32 %v80, %v1353
  %1355 = vmatmul.f32.gmra.mxu0 %v1205
  %v1356 = vpop.f32.mrf.mxu0
  %v1357 = vadd.f32 %v80, %v1356
  %1358 = vdwg.mxu0
  %v1359 = vmax.f32 %v1225, 0.0
  %v1360 = vmax.f32 %v1228, 0.0
  %v1361 = vmax.f32 %v1231, 0.0
  %v1362 = vmax.f32 %v1234, 0.0
  %v1363 = vmax.f32 %v1237, 0.0
  %v1364 = vmax.f32 %v1240, 0.0
  %v1365 = vmax.f32 %v1243, 0.0
  %v1366 = vmax.f32 %v1246, 0.0
  %v1367 = vmax.f32 %v1249, 0.0
  %v1368 = vmax.f32 %v1252, 0.0
  %v1369 = vmax.f32 %v1255, 0.0
  %v1370 = vmax.f32 %v1258, 0.0
  %v1371 = vmax.f32 %v1261, 0.0
  %v1372 = vmax.f32 %v1264, 0.0
  %v1373 = vmax.f32 %v1267, 0.0
  %v1374 = vmax.f32 %v1270, 0.0
  %v1375 = vmax.f32 %v1273, 0.0
  %v1376 = vmax.f32 %v1276, 0.0
  %v1377 = vmax.f32 %v1279, 0.0
  %v1378 = vmax.f32 %v1282, 0.0
  %v1379 = vmax.f32 %v1285, 0.0
  %v1380 = vmax.f32 %v1288, 0.0
  %v1381 = vmax.f32 %v1291, 0.0
  %v1382 = vmax.f32 %v1294, 0.0
  %v1383 = vmax.f32 %v1297, 0.0
  %v1384 = vmax.f32 %v1300, 0.0
  %v1385 = vmax.f32 %v1303, 0.0
  %v1386 = vmax.f32 %v1306, 0.0
  %v1387 = vmax.f32 %v1309, 0.0
  %v1388 = vmax.f32 %v1312, 0.0
  %v1389 = vmax.f32 %v1315, 0.0
  %v1390 = vmax.f32 %v1318, 0.0
  %v1391 = vmax.f32 %v1321, 0.0
  %v1392 = vmax.f32 %v1324, 0.0
  %v1393 = vmax.f32 %v1327, 0.0
  %v1394 = vmax.f32 %v1330, 0.0
  %v1395 = vmax.f32 %v1333, 0.0
  %v1396 = vmax.f32 %v1336, 0.0
  %v1397 = vmax.f32 %v1339, 0.0
  %v1398 = vmax.f32 %v1342, 0.0
  %v1399 = vmax.f32 %v1345, 0.0
  %v1400 = vmax.f32 %v1348, 0.0
  %v1401 = vmax.f32 %v1351, 0.0
  %v1402 = vmax.f32 %v1354, 0.0
  %v1403 = vmax.f32 %v1357, 0.0
  %v1404 = vmul.f32 %v1359, %v420
  %v1405 = vmul.f32 %v1360, %v420
  %v1406 = vmul.f32 %v1361, %v420
  %v1407 = vmul.f32 %v1362, %v420
  %v1408 = vmul.f32 %v1363, %v420
  %v1409 = vmul.f32 %v1364, %v420
  %v1410 = vmul.f32 %v1365, %v420
  %v1411 = vmul.f32 %v1366, %v420
  %v1412 = vmul.f32 %v1367, %v420
  %v1413 = vmul.f32 %v1368, %v420
  %v1414 = vmul.f32 %v1369, %v420
  %v1415 = vmul.f32 %v1370, %v420
  %v1416 = vmul.f32 %v1371, %v420
  %v1417 = vmul.f32 %v1372, %v420
  %v1418 = vmul.f32 %v1373, %v420
  %v1419 = vmul.f32 %v1374, %v420
  %v1420 = vmul.f32 %v1375, %v420
  %v1421 = vmul.f32 %v1376, %v420
  %v1422 = vmul.f32 %v1377, %v420
  %v1423 = vmul.f32 %v1378, %v420
  %v1424 = vmul.f32 %v1379, %v420
  %v1425 = vmul.f32 %v1380, %v420
  %v1426 = vmul.f32 %v1381, %v420
  %v1427 = vmul.f32 %v1382, %v420
  %v1428 = vmul.f32 %v1383, %v420
  %v1429 = vmul.f32 %v1384, %v420
  %v1430 = vmul.f32 %v1385, %v420
  %v1431 = vmul.f32 %v1386, %v420
  %v1432 = vmul.f32 %v1387, %v420
  %v1433 = vmul.f32 %v1388, %v420
  %v1434 = vmul.f32 %v1389, %v420
  %v1435 = vmul.f32 %v1390, %v420
  %v1436 = vmul.f32 %v1391, %v420
  %v1437 = vmul.f32 %v1392, %v420
  %v1438 = vmul.f32 %v1393, %v420
  %v1439 = vmul.f32 %v1394, %v420
  %v1440 = vmul.f32 %v1395, %v420
  %v1441 = vmul.f32 %v1396, %v420
  %v1442 = vmul.f32 %v1397, %v420
  %v1443 = vmul.f32 %v1398, %v420
  %v1444 = vmul.f32 %v1399, %v420
  %v1445 = vmul.f32 %v1400, %v420
  %v1446 = vmul.f32 %v1401, %v420
  %v1447 = vmul.f32 %v1402, %v420
  %v1448 = vmul.f32 %v1403, %v420
  %v1449 = vadd.f32 %v1404, %v468
  %v1450 = vadd.f32 %v1405, %v468
  %v1451 = vadd.f32 %v1406, %v468
  %v1452 = vadd.f32 %v1407, %v468
  %v1453 = vadd.f32 %v1408, %v468
  %v1454 = vadd.f32 %v1409, %v468
  %v1455 = vadd.f32 %v1410, %v468
  %v1456 = vadd.f32 %v1411, %v468
  %v1457 = vadd.f32 %v1412, %v468
  %v1458 = vadd.f32 %v1413, %v468
  %v1459 = vadd.f32 %v1414, %v468
  %v1460 = vadd.f32 %v1415, %v468
  %v1461 = vadd.f32 %v1416, %v468
  %v1462 = vadd.f32 %v1417, %v468
  %v1463 = vadd.f32 %v1418, %v468
  %v1464 = vadd.f32 %v1419, %v468
  %v1465 = vadd.f32 %v1420, %v468
  %v1466 = vadd.f32 %v1421, %v468
  %v1467 = vadd.f32 %v1422, %v468
  %v1468 = vadd.f32 %v1423, %v468
  %v1469 = vadd.f32 %v1424, %v468
  %v1470 = vadd.f32 %v1425, %v468
  %v1471 = vadd.f32 %v1426, %v468
  %v1472 = vadd.f32 %v1427, %v468
  %v1473 = vadd.f32 %v1428, %v468
  %v1474 = vadd.f32 %v1429, %v468
  %v1475 = vadd.f32 %v1430, %v468
  %v1476 = vadd.f32 %v1431, %v468
  %v1477 = vadd.f32 %v1432, %v468
  %v1478 = vadd.f32 %v1433, %v468
  %v1479 = vadd.f32 %v1434, %v468
  %v1480 = vadd.f32 %v1435, %v468
  %v1481 = vadd.f32 %v1436, %v468
  %v1482 = vadd.f32 %v1437, %v468
  %v1483 = vadd.f32 %v1438, %v468
  %v1484 = vadd.f32 %v1439, %v468
  %v1485 = vadd.f32 %v1440, %v468
  %v1486 = vadd.f32 %v1441, %v468
  %v1487 = vadd.f32 %v1442, %v468
  %v1488 = vadd.f32 %v1443, %v468
  %v1489 = vadd.f32 %v1444, %v468
  %v1490 = vadd.f32 %v1445, %v468
  %v1491 = vadd.f32 %v1446, %v468
  %v1492 = vadd.f32 %v1447, %v468
  %v1493 = vadd.f32 %v1448, %v468
  %v1494 = vld [vmem:[%s3] sm:$0xff]
  %v1495 = vld [vmem:[%s3 + $0x8] sm:$0xff]
  %v1496 = vld [vmem:[%s3 + $0x10] sm:$0xff]
  %v1497 = vld [vmem:[%s3 + $0x18] sm:$0xff]
  %v1498 = vld [vmem:[%s3 + $0x20] sm:$0xff]
  %v1499 = vld [vmem:[%s3 + $0x28] sm:$0xff]
  %v1500 = vld [vmem:[%s3 + $0x30] sm:$0xff]
  %v1501 = vld [vmem:[%s3 + $0x38] sm:$0xff]
  %v1502 = vld [vmem:[%s3 + $0x40] sm:$0xff]
  %v1503 = vld [vmem:[%s3 + $0x48] sm:$0xff]
  %v1504 = vld [vmem:[%s3 + $0x50] sm:$0xff]
  %v1505 = vld [vmem:[%s3 + $0x58] sm:$0xff]
  %v1506 = vld [vmem:[%s3 + $0x60] sm:$0xff]
  %v1507 = vld [vmem:[%s3 + $0x68] sm:$0xff]
  %v1508 = vld [vmem:[%s3 + $0x70] sm:$0xff]
  %v1509 = vld [vmem:[%s3 + $0x78] sm:$0xff]
  %v1510 = vld [vmem:[%s3 + $0x80] sm:$0xff]
  %v1511 = vld [vmem:[%s3 + $0x88] sm:$0xff]
  %v1512 = vld [vmem:[%s3 + $0x90] sm:$0xff]
  %v1513 = vld [vmem:[%s3 + $0x98] sm:$0xff]
  %v1514 = vld [vmem:[%s3 + $0xa0] sm:$0xff]
  %v1515 = vld [vmem:[%s3 + $0xa8] sm:$0xff]
  %v1516 = vld [vmem:[%s3 + $0xb0] sm:$0xff]
  %v1517 = vld [vmem:[%s3 + $0xb8] sm:$0xff]
  %v1518 = vld [vmem:[%s3 + $0xc0] sm:$0xff]
  %v1519 = vld [vmem:[%s3 + $0xc8] sm:$0xff]
  %v1520 = vld [vmem:[%s3 + $0xd0] sm:$0xff]
  %v1521 = vld [vmem:[%s3 + $0xd8] sm:$0xff]
  %v1522 = vld [vmem:[%s3 + $0xe0] sm:$0xff]
  %v1523 = vld [vmem:[%s3 + $0xe8] sm:$0xff]
  %v1524 = vld [vmem:[%s3 + $0xf0] sm:$0xff]
  %v1525 = vld [vmem:[%s3 + $0xf8] sm:$0xff]
  %v1526 = vld [vmem:[%s3 + $0x100] sm:$0xff]
  %v1527 = vld [vmem:[%s3 + $0x108] sm:$0xff]
  %v1528 = vld [vmem:[%s3 + $0x110] sm:$0xff]
  %v1529 = vld [vmem:[%s3 + $0x118] sm:$0xff]
  %v1530 = vld [vmem:[%s3 + $0x120] sm:$0xff]
  %v1531 = vld [vmem:[%s3 + $0x128] sm:$0xff]
  %v1532 = vld [vmem:[%s3 + $0x130] sm:$0xff]
  %v1533 = vld [vmem:[%s3 + $0x138] sm:$0xff]
  %v1534 = vld [vmem:[%s3 + $0x140] sm:$0xff]
  %v1535 = vld [vmem:[%s3 + $0x148] sm:$0xff]
  %v1536 = vld [vmem:[%s3 + $0x150] sm:$0xff]
  %v1537 = vld [vmem:[%s3 + $0x158] sm:$0xff]
  %v1538 = vld [vmem:[%s3 + $0x160] sm:$0xff]
  %v1540 = vsel %vm82, %v1494, 0
  %v1543 = vsel %vm82, %v1495, 0
  %v1546 = vsel %vm82, %v1496, 0
  %v1549 = vsel %vm82, %v1497, 0
  %v1552 = vsel %vm82, %v1498, 0
  %v1555 = vsel %vm82, %v1499, 0
  %v1558 = vsel %vm82, %v1500, 0
  %v1561 = vsel %vm82, %v1501, 0
  %v1564 = vsel %vm82, %v1502, 0
  %v1567 = vsel %vm82, %v1503, 0
  %v1570 = vsel %vm82, %v1504, 0
  %v1573 = vsel %vm82, %v1505, 0
  %v1576 = vsel %vm82, %v1506, 0
  %v1579 = vsel %vm82, %v1507, 0
  %v1582 = vsel %vm82, %v1508, 0
  %v1585 = vsel %vm82, %v1509, 0
  %v1588 = vsel %vm82, %v1510, 0
  %v1591 = vsel %vm82, %v1511, 0
  %v1594 = vsel %vm82, %v1512, 0
  %v1597 = vsel %vm82, %v1513, 0
  %v1600 = vsel %vm82, %v1514, 0
  %v1603 = vsel %vm82, %v1515, 0
  %v1606 = vsel %vm82, %v1516, 0
  %v1609 = vsel %vm82, %v1517, 0
  %v1612 = vsel %vm82, %v1518, 0
  %v1615 = vsel %vm82, %v1519, 0
  %v1618 = vsel %vm82, %v1520, 0
  %v1621 = vsel %vm82, %v1521, 0
  %v1624 = vsel %vm82, %v1522, 0
  %v1627 = vsel %vm82, %v1523, 0
  %v1630 = vsel %vm82, %v1524, 0
  %v1633 = vsel %vm82, %v1525, 0
  %v1636 = vsel %vm82, %v1526, 0
  %v1639 = vsel %vm82, %v1527, 0
  %v1642 = vsel %vm82, %v1528, 0
  %v1645 = vsel %vm82, %v1529, 0
  %v1648 = vsel %vm82, %v1530, 0
  %v1651 = vsel %vm82, %v1531, 0
  %v1654 = vsel %vm82, %v1532, 0
  %v1657 = vsel %vm82, %v1533, 0
  %v1660 = vsel %vm82, %v1534, 0
  %v1663 = vsel %vm82, %v1535, 0
  %v1666 = vsel %vm82, %v1536, 0
  %v1669 = vsel %vm82, %v1537, 0
  %v1672 = vsel %vm82, %v1538, 0
  %1674 = vmatpush.msra.mxu0 0.0
  %1675 = vmatpush.msra.mxu0 0.0
  %1676 = vmatpush.msra.mxu0 0.0
  %1677 = vmatpush.msra.mxu0 0.0
  %1678 = vmatpush.msra.mxu0 0.0
  %1679 = vmatpush.msra.mxu0 0.0
  %1680 = vmatpush.msra.mxu0 0.0
  %1681 = vmatpush.msra.mxu0 0.0
  %1682 = vmatpush.msra.mxu0 0.0
  %1683 = vmatpush.msra.mxu0 0.0
  %1684 = vmatpush.msra.mxu0 0.0
  %1685 = vmatpush.msra.mxu0 0.0
  %1686 = vmatpush.msra.mxu0 0.0
  %1687 = vmatpush.msra.mxu0 0.0
  %1688 = vmatpush.msra.mxu0 %v220
  %1689 = vmatpush.msra.mxu0 %v29
  %1690 = vmatmul.f32.gmra.mxu0 %v1540
  %v1691 = vpop.f32.mrf.mxu0
  %v1692 = vadd.f32 %v80, %v1691
  %1693 = vmatmul.f32.gmra.mxu0 %v1543
  %v1694 = vpop.f32.mrf.mxu0
  %v1695 = vadd.f32 %v80, %v1694
  %1696 = vmatmul.f32.gmra.mxu0 %v1546
  %v1697 = vpop.f32.mrf.mxu0
  %v1698 = vadd.f32 %v80, %v1697
  %1699 = vmatmul.f32.gmra.mxu0 %v1549
  %v1700 = vpop.f32.mrf.mxu0
  %v1701 = vadd.f32 %v80, %v1700
  %1702 = vmatmul.f32.gmra.mxu0 %v1552
  %v1703 = vpop.f32.mrf.mxu0
  %v1704 = vadd.f32 %v80, %v1703
  %1705 = vmatmul.f32.gmra.mxu0 %v1555
  %v1706 = vpop.f32.mrf.mxu0
  %v1707 = vadd.f32 %v80, %v1706
  %1708 = vmatmul.f32.gmra.mxu0 %v1558
  %v1709 = vpop.f32.mrf.mxu0
  %v1710 = vadd.f32 %v80, %v1709
  %1711 = vmatmul.f32.gmra.mxu0 %v1561
  %v1712 = vpop.f32.mrf.mxu0
  %v1713 = vadd.f32 %v80, %v1712
  %1714 = vmatmul.f32.gmra.mxu0 %v1564
  %v1715 = vpop.f32.mrf.mxu0
  %v1716 = vadd.f32 %v80, %v1715
  %1717 = vmatmul.f32.gmra.mxu0 %v1567
  %v1718 = vpop.f32.mrf.mxu0
  %v1719 = vadd.f32 %v80, %v1718
  %1720 = vmatmul.f32.gmra.mxu0 %v1570
  %v1721 = vpop.f32.mrf.mxu0
  %v1722 = vadd.f32 %v80, %v1721
  %1723 = vmatmul.f32.gmra.mxu0 %v1573
  %v1724 = vpop.f32.mrf.mxu0
  %v1725 = vadd.f32 %v80, %v1724
  %1726 = vmatmul.f32.gmra.mxu0 %v1576
  %v1727 = vpop.f32.mrf.mxu0
  %v1728 = vadd.f32 %v80, %v1727
  %1729 = vmatmul.f32.gmra.mxu0 %v1579
  %v1730 = vpop.f32.mrf.mxu0
  %v1731 = vadd.f32 %v80, %v1730
  %1732 = vmatmul.f32.gmra.mxu0 %v1582
  %v1733 = vpop.f32.mrf.mxu0
  %v1734 = vadd.f32 %v80, %v1733
  %1735 = vmatmul.f32.gmra.mxu0 %v1585
  %v1736 = vpop.f32.mrf.mxu0
  %v1737 = vadd.f32 %v80, %v1736
  %1738 = vmatmul.f32.gmra.mxu0 %v1588
  %v1739 = vpop.f32.mrf.mxu0
  %v1740 = vadd.f32 %v80, %v1739
  %1741 = vmatmul.f32.gmra.mxu0 %v1591
  %v1742 = vpop.f32.mrf.mxu0
  %v1743 = vadd.f32 %v80, %v1742
  %1744 = vmatmul.f32.gmra.mxu0 %v1594
  %v1745 = vpop.f32.mrf.mxu0
  %v1746 = vadd.f32 %v80, %v1745
  %1747 = vmatmul.f32.gmra.mxu0 %v1597
  %v1748 = vpop.f32.mrf.mxu0
  %v1749 = vadd.f32 %v80, %v1748
  %1750 = vmatmul.f32.gmra.mxu0 %v1600
  %v1751 = vpop.f32.mrf.mxu0
  %v1752 = vadd.f32 %v80, %v1751
  %1753 = vmatmul.f32.gmra.mxu0 %v1603
  %v1754 = vpop.f32.mrf.mxu0
  %v1755 = vadd.f32 %v80, %v1754
  %1756 = vmatmul.f32.gmra.mxu0 %v1606
  %v1757 = vpop.f32.mrf.mxu0
  %v1758 = vadd.f32 %v80, %v1757
  %1759 = vmatmul.f32.gmra.mxu0 %v1609
  %v1760 = vpop.f32.mrf.mxu0
  %v1761 = vadd.f32 %v80, %v1760
  %1762 = vmatmul.f32.gmra.mxu0 %v1612
  %v1763 = vpop.f32.mrf.mxu0
  %v1764 = vadd.f32 %v80, %v1763
  %1765 = vmatmul.f32.gmra.mxu0 %v1615
  %v1766 = vpop.f32.mrf.mxu0
  %v1767 = vadd.f32 %v80, %v1766
  %1768 = vmatmul.f32.gmra.mxu0 %v1618
  %v1769 = vpop.f32.mrf.mxu0
  %v1770 = vadd.f32 %v80, %v1769
  %1771 = vmatmul.f32.gmra.mxu0 %v1621
  %v1772 = vpop.f32.mrf.mxu0
  %v1773 = vadd.f32 %v80, %v1772
  %1774 = vmatmul.f32.gmra.mxu0 %v1624
  %v1775 = vpop.f32.mrf.mxu0
  %v1776 = vadd.f32 %v80, %v1775
  %1777 = vmatmul.f32.gmra.mxu0 %v1627
  %v1778 = vpop.f32.mrf.mxu0
  %v1779 = vadd.f32 %v80, %v1778
  %1780 = vmatmul.f32.gmra.mxu0 %v1630
  %v1781 = vpop.f32.mrf.mxu0
  %v1782 = vadd.f32 %v80, %v1781
  %1783 = vmatmul.f32.gmra.mxu0 %v1633
  %v1784 = vpop.f32.mrf.mxu0
  %v1785 = vadd.f32 %v80, %v1784
  %1786 = vmatmul.f32.gmra.mxu0 %v1636
  %v1787 = vpop.f32.mrf.mxu0
  %v1788 = vadd.f32 %v80, %v1787
  %1789 = vmatmul.f32.gmra.mxu0 %v1639
  %v1790 = vpop.f32.mrf.mxu0
  %v1791 = vadd.f32 %v80, %v1790
  %1792 = vmatmul.f32.gmra.mxu0 %v1642
  %v1793 = vpop.f32.mrf.mxu0
  %v1794 = vadd.f32 %v80, %v1793
  %1795 = vmatmul.f32.gmra.mxu0 %v1645
  %v1796 = vpop.f32.mrf.mxu0
  %v1797 = vadd.f32 %v80, %v1796
  %1798 = vmatmul.f32.gmra.mxu0 %v1648
  %v1799 = vpop.f32.mrf.mxu0
  %v1800 = vadd.f32 %v80, %v1799
  %1801 = vmatmul.f32.gmra.mxu0 %v1651
  %v1802 = vpop.f32.mrf.mxu0
  %v1803 = vadd.f32 %v80, %v1802
  %1804 = vmatmul.f32.gmra.mxu0 %v1654
  %v1805 = vpop.f32.mrf.mxu0
  %v1806 = vadd.f32 %v80, %v1805
  %1807 = vmatmul.f32.gmra.mxu0 %v1657
  %v1808 = vpop.f32.mrf.mxu0
  %v1809 = vadd.f32 %v80, %v1808
  %1810 = vmatmul.f32.gmra.mxu0 %v1660
  %v1811 = vpop.f32.mrf.mxu0
  %v1812 = vadd.f32 %v80, %v1811
  %1813 = vmatmul.f32.gmra.mxu0 %v1663
  %v1814 = vpop.f32.mrf.mxu0
  %v1815 = vadd.f32 %v80, %v1814
  %1816 = vmatmul.f32.gmra.mxu0 %v1666
  %v1817 = vpop.f32.mrf.mxu0
  %v1818 = vadd.f32 %v80, %v1817
  %1819 = vmatmul.f32.gmra.mxu0 %v1669
  %v1820 = vpop.f32.mrf.mxu0
  %v1821 = vadd.f32 %v80, %v1820
  %1822 = vmatmul.f32.gmra.mxu0 %v1672
  %v1823 = vpop.f32.mrf.mxu0
  %v1824 = vadd.f32 %v80, %v1823
  %1825 = vdwg.mxu0
  %v1826 = vmax.f32 %v1692, 0.0
  %v1827 = vmax.f32 %v1695, 0.0
  %v1828 = vmax.f32 %v1698, 0.0
  %v1829 = vmax.f32 %v1701, 0.0
  %v1830 = vmax.f32 %v1704, 0.0
  %v1831 = vmax.f32 %v1707, 0.0
  %v1832 = vmax.f32 %v1710, 0.0
  %v1833 = vmax.f32 %v1713, 0.0
  %v1834 = vmax.f32 %v1716, 0.0
  %v1835 = vmax.f32 %v1719, 0.0
  %v1836 = vmax.f32 %v1722, 0.0
  %v1837 = vmax.f32 %v1725, 0.0
  %v1838 = vmax.f32 %v1728, 0.0
  %v1839 = vmax.f32 %v1731, 0.0
  %v1840 = vmax.f32 %v1734, 0.0
  %v1841 = vmax.f32 %v1737, 0.0
  %v1842 = vmax.f32 %v1740, 0.0
  %v1843 = vmax.f32 %v1743, 0.0
  %v1844 = vmax.f32 %v1746, 0.0
  %v1845 = vmax.f32 %v1749, 0.0
  %v1846 = vmax.f32 %v1752, 0.0
  %v1847 = vmax.f32 %v1755, 0.0
  %v1848 = vmax.f32 %v1758, 0.0
  %v1849 = vmax.f32 %v1761, 0.0
  %v1850 = vmax.f32 %v1764, 0.0
  %v1851 = vmax.f32 %v1767, 0.0
  %v1852 = vmax.f32 %v1770, 0.0
  %v1853 = vmax.f32 %v1773, 0.0
  %v1854 = vmax.f32 %v1776, 0.0
  %v1855 = vmax.f32 %v1779, 0.0
  %v1856 = vmax.f32 %v1782, 0.0
  %v1857 = vmax.f32 %v1785, 0.0
  %v1858 = vmax.f32 %v1788, 0.0
  %v1859 = vmax.f32 %v1791, 0.0
  %v1860 = vmax.f32 %v1794, 0.0
  %v1861 = vmax.f32 %v1797, 0.0
  %v1862 = vmax.f32 %v1800, 0.0
  %v1863 = vmax.f32 %v1803, 0.0
  %v1864 = vmax.f32 %v1806, 0.0
  %v1865 = vmax.f32 %v1809, 0.0
  %v1866 = vmax.f32 %v1812, 0.0
  %v1867 = vmax.f32 %v1815, 0.0
  %v1868 = vmax.f32 %v1818, 0.0
  %v1869 = vmax.f32 %v1821, 0.0
  %v1870 = vmax.f32 %v1824, 0.0
  %v1871 = vmul.f32 %v1826, %v420
  %v1872 = vmul.f32 %v1827, %v420
  %v1873 = vmul.f32 %v1828, %v420
  %v1874 = vmul.f32 %v1829, %v420
  %v1875 = vmul.f32 %v1830, %v420
  %v1876 = vmul.f32 %v1831, %v420
  %v1877 = vmul.f32 %v1832, %v420
  %v1878 = vmul.f32 %v1833, %v420
  %v1879 = vmul.f32 %v1834, %v420
  %v1880 = vmul.f32 %v1835, %v420
  %v1881 = vmul.f32 %v1836, %v420
  %v1882 = vmul.f32 %v1837, %v420
  %v1883 = vmul.f32 %v1838, %v420
  %v1884 = vmul.f32 %v1839, %v420
  %v1885 = vmul.f32 %v1840, %v420
  %v1886 = vmul.f32 %v1841, %v420
  %v1887 = vmul.f32 %v1842, %v420
  %v1888 = vmul.f32 %v1843, %v420
  %v1889 = vmul.f32 %v1844, %v420
  %v1890 = vmul.f32 %v1845, %v420
  %v1891 = vmul.f32 %v1846, %v420
  %v1892 = vmul.f32 %v1847, %v420
  %v1893 = vmul.f32 %v1848, %v420
  %v1894 = vmul.f32 %v1849, %v420
  %v1895 = vmul.f32 %v1850, %v420
  %v1896 = vmul.f32 %v1851, %v420
  %v1897 = vmul.f32 %v1852, %v420
  %v1898 = vmul.f32 %v1853, %v420
  %v1899 = vmul.f32 %v1854, %v420
  %v1900 = vmul.f32 %v1855, %v420
  %v1901 = vmul.f32 %v1856, %v420
  %v1902 = vmul.f32 %v1857, %v420
  %v1903 = vmul.f32 %v1858, %v420
  %v1904 = vmul.f32 %v1859, %v420
  %v1905 = vmul.f32 %v1860, %v420
  %v1906 = vmul.f32 %v1861, %v420
  %v1907 = vmul.f32 %v1862, %v420
  %v1908 = vmul.f32 %v1863, %v420
  %v1909 = vmul.f32 %v1864, %v420
  %v1910 = vmul.f32 %v1865, %v420
  %v1911 = vmul.f32 %v1866, %v420
  %v1912 = vmul.f32 %v1867, %v420
  %v1913 = vmul.f32 %v1868, %v420
  %v1914 = vmul.f32 %v1869, %v420
  %v1915 = vmul.f32 %v1870, %v420
  %v1916 = vadd.f32 %v1871, %v468
  %v1917 = vadd.f32 %v1872, %v468
  %v1918 = vadd.f32 %v1873, %v468
  %v1919 = vadd.f32 %v1874, %v468
  %v1920 = vadd.f32 %v1875, %v468
  %v1921 = vadd.f32 %v1876, %v468
  %v1922 = vadd.f32 %v1877, %v468
  %v1923 = vadd.f32 %v1878, %v468
  %v1924 = vadd.f32 %v1879, %v468
  %v1925 = vadd.f32 %v1880, %v468
  %v1926 = vadd.f32 %v1881, %v468
  %v1927 = vadd.f32 %v1882, %v468
  %v1928 = vadd.f32 %v1883, %v468
  %v1929 = vadd.f32 %v1884, %v468
  %v1930 = vadd.f32 %v1885, %v468
  %v1931 = vadd.f32 %v1886, %v468
  %v1932 = vadd.f32 %v1887, %v468
  %v1933 = vadd.f32 %v1888, %v468
  %v1934 = vadd.f32 %v1889, %v468
  %v1935 = vadd.f32 %v1890, %v468
  %v1936 = vadd.f32 %v1891, %v468
  %v1937 = vadd.f32 %v1892, %v468
  %v1938 = vadd.f32 %v1893, %v468
  %v1939 = vadd.f32 %v1894, %v468
  %v1940 = vadd.f32 %v1895, %v468
  %v1941 = vadd.f32 %v1896, %v468
  %v1942 = vadd.f32 %v1897, %v468
  %v1943 = vadd.f32 %v1898, %v468
  %v1944 = vadd.f32 %v1899, %v468
  %v1945 = vadd.f32 %v1900, %v468
  %v1946 = vadd.f32 %v1901, %v468
  %v1947 = vadd.f32 %v1902, %v468
  %v1948 = vadd.f32 %v1903, %v468
  %v1949 = vadd.f32 %v1904, %v468
  %v1950 = vadd.f32 %v1905, %v468
  %v1951 = vadd.f32 %v1906, %v468
  %v1952 = vadd.f32 %v1907, %v468
  %v1953 = vadd.f32 %v1908, %v468
  %v1954 = vadd.f32 %v1909, %v468
  %v1955 = vadd.f32 %v1910, %v468
  %v1956 = vadd.f32 %v1911, %v468
  %v1957 = vadd.f32 %v1912, %v468
  %v1958 = vadd.f32 %v1913, %v468
  %v1959 = vadd.f32 %v1914, %v468
  %v1960 = vadd.f32 %v1915, %v468
  %v1961 = vmax.f32 %v1449, %v1916
  %v1962 = vmax.f32 %v1450, %v1917
  %v1963 = vmax.f32 %v1451, %v1918
  %v1964 = vmax.f32 %v1452, %v1919
  %v1965 = vmax.f32 %v1453, %v1920
  %v1966 = vmax.f32 %v1454, %v1921
  %v1967 = vmax.f32 %v1455, %v1922
  %v1968 = vmax.f32 %v1456, %v1923
  %v1969 = vmax.f32 %v1457, %v1924
  %v1970 = vmax.f32 %v1458, %v1925
  %v1971 = vmax.f32 %v1459, %v1926
  %v1972 = vmax.f32 %v1460, %v1927
  %v1973 = vmax.f32 %v1461, %v1928
  %v1974 = vmax.f32 %v1462, %v1929
  %v1975 = vmax.f32 %v1463, %v1930
  %v1976 = vmax.f32 %v1464, %v1931
  %v1977 = vmax.f32 %v1465, %v1932
  %v1978 = vmax.f32 %v1466, %v1933
  %v1979 = vmax.f32 %v1467, %v1934
  %v1980 = vmax.f32 %v1468, %v1935
  %v1981 = vmax.f32 %v1469, %v1936
  %v1982 = vmax.f32 %v1470, %v1937
  %v1983 = vmax.f32 %v1471, %v1938
  %v1984 = vmax.f32 %v1472, %v1939
  %v1985 = vmax.f32 %v1473, %v1940
  %v1986 = vmax.f32 %v1474, %v1941
  %v1987 = vmax.f32 %v1475, %v1942
  %v1988 = vmax.f32 %v1476, %v1943
  %v1989 = vmax.f32 %v1477, %v1944
  %v1990 = vmax.f32 %v1478, %v1945
  %v1991 = vmax.f32 %v1479, %v1946
  %v1992 = vmax.f32 %v1480, %v1947
  %v1993 = vmax.f32 %v1481, %v1948
  %v1994 = vmax.f32 %v1482, %v1949
  %v1995 = vmax.f32 %v1483, %v1950
  %v1996 = vmax.f32 %v1484, %v1951
  %v1997 = vmax.f32 %v1485, %v1952
  %v1998 = vmax.f32 %v1486, %v1953
  %v1999 = vmax.f32 %v1487, %v1954
  %v2000 = vmax.f32 %v1488, %v1955
  %v2001 = vmax.f32 %v1489, %v1956
  %v2002 = vmax.f32 %v1490, %v1957
  %v2003 = vmax.f32 %v1491, %v1958
  %v2004 = vmax.f32 %v1492, %v1959
  %v2005 = vmax.f32 %v1493, %v1960
  %v2006 = vmax.f32 %v982, %v1961
  %v2007 = vmax.f32 %v983, %v1962
  %v2008 = vmax.f32 %v984, %v1963
  %v2009 = vmax.f32 %v985, %v1964
  %v2010 = vmax.f32 %v986, %v1965
  %v2011 = vmax.f32 %v987, %v1966
  %v2012 = vmax.f32 %v988, %v1967
  %v2013 = vmax.f32 %v989, %v1968
  %v2014 = vmax.f32 %v990, %v1969
  %v2015 = vmax.f32 %v991, %v1970
  %v2016 = vmax.f32 %v992, %v1971
  %v2017 = vmax.f32 %v993, %v1972
  %v2018 = vmax.f32 %v994, %v1973
  %v2019 = vmax.f32 %v995, %v1974
  %v2020 = vmax.f32 %v996, %v1975
  %v2021 = vmax.f32 %v997, %v1976
  %v2022 = vmax.f32 %v998, %v1977
  %v2023 = vmax.f32 %v999, %v1978
  %v2024 = vmax.f32 %v1000, %v1979
  %v2025 = vmax.f32 %v1001, %v1980
  %v2026 = vmax.f32 %v1002, %v1981
  %v2027 = vmax.f32 %v1003, %v1982
  %v2028 = vmax.f32 %v1004, %v1983
  %v2029 = vmax.f32 %v1005, %v1984
  %v2030 = vmax.f32 %v1006, %v1985
  %v2031 = vmax.f32 %v1007, %v1986
  %v2032 = vmax.f32 %v1008, %v1987
  %v2033 = vmax.f32 %v1009, %v1988
  %v2034 = vmax.f32 %v1010, %v1989
  %v2035 = vmax.f32 %v1011, %v1990
  %v2036 = vmax.f32 %v1012, %v1991
  %v2037 = vmax.f32 %v1013, %v1992
  %v2038 = vmax.f32 %v1014, %v1993
  %v2039 = vmax.f32 %v1015, %v1994
  %v2040 = vmax.f32 %v1016, %v1995
  %v2041 = vmax.f32 %v1017, %v1996
  %v2042 = vmax.f32 %v1018, %v1997
  %v2043 = vmax.f32 %v1019, %v1998
  %v2044 = vmax.f32 %v1020, %v1999
  %v2045 = vmax.f32 %v1021, %v2000
  %v2046 = vmax.f32 %v1022, %v2001
  %v2047 = vmax.f32 %v1023, %v2002
  %v2048 = vmax.f32 %v1024, %v2003
  %v2049 = vmax.f32 %v1025, %v2004
  %v2050 = vmax.f32 %v1026, %v2005
  %vm2051 = vcmask 31744
  %2052 = vst.msk [vmem:[%s8] sm:$0xff] %vm2051, %v2006
  %2053 = vst.msk [vmem:[%s8 + $0x8] sm:$0xff] %vm2051, %v2007
  %2054 = vst.msk [vmem:[%s8 + $0x10] sm:$0xff] %vm2051, %v2008
  %2055 = vst.msk [vmem:[%s8 + $0x18] sm:$0xff] %vm2051, %v2009
  %2056 = vst.msk [vmem:[%s8 + $0x20] sm:$0xff] %vm2051, %v2010
  %2057 = vst.msk [vmem:[%s8 + $0x28] sm:$0xff] %vm2051, %v2011
  %2058 = vst.msk [vmem:[%s8 + $0x30] sm:$0xff] %vm2051, %v2012
  %2059 = vst.msk [vmem:[%s8 + $0x38] sm:$0xff] %vm2051, %v2013
  %2060 = vst.msk [vmem:[%s8 + $0x40] sm:$0xff] %vm2051, %v2014
  %2061 = vst.msk [vmem:[%s8 + $0x48] sm:$0xff] %vm2051, %v2015
  %2062 = vst.msk [vmem:[%s8 + $0x50] sm:$0xff] %vm2051, %v2016
  %2063 = vst.msk [vmem:[%s8 + $0x58] sm:$0xff] %vm2051, %v2017
  %2064 = vst.msk [vmem:[%s8 + $0x60] sm:$0xff] %vm2051, %v2018
  %2065 = vst.msk [vmem:[%s8 + $0x68] sm:$0xff] %vm2051, %v2019
  %2066 = vst.msk [vmem:[%s8 + $0x70] sm:$0xff] %vm2051, %v2020
  %2067 = vst.msk [vmem:[%s8 + $0x78] sm:$0xff] %vm2051, %v2021
  %2068 = vst.msk [vmem:[%s8 + $0x80] sm:$0xff] %vm2051, %v2022
  %2069 = vst.msk [vmem:[%s8 + $0x88] sm:$0xff] %vm2051, %v2023
  %2070 = vst.msk [vmem:[%s8 + $0x90] sm:$0xff] %vm2051, %v2024
  %2071 = vst.msk [vmem:[%s8 + $0x98] sm:$0xff] %vm2051, %v2025
  %2072 = vst.msk [vmem:[%s8 + $0xa0] sm:$0xff] %vm2051, %v2026
  %2073 = vst.msk [vmem:[%s8 + $0xa8] sm:$0xff] %vm2051, %v2027
  %2074 = vst.msk [vmem:[%s8 + $0xb0] sm:$0xff] %vm2051, %v2028
  %2075 = vst.msk [vmem:[%s8 + $0xb8] sm:$0xff] %vm2051, %v2029
  %2076 = vst.msk [vmem:[%s8 + $0xc0] sm:$0xff] %vm2051, %v2030
  %2077 = vst.msk [vmem:[%s8 + $0xc8] sm:$0xff] %vm2051, %v2031
  %2078 = vst.msk [vmem:[%s8 + $0xd0] sm:$0xff] %vm2051, %v2032
  %2079 = vst.msk [vmem:[%s8 + $0xd8] sm:$0xff] %vm2051, %v2033
  %2080 = vst.msk [vmem:[%s8 + $0xe0] sm:$0xff] %vm2051, %v2034
  %2081 = vst.msk [vmem:[%s8 + $0xe8] sm:$0xff] %vm2051, %v2035
  %2082 = vst.msk [vmem:[%s8 + $0xf0] sm:$0xff] %vm2051, %v2036
  %2083 = vst.msk [vmem:[%s8 + $0xf8] sm:$0xff] %vm2051, %v2037
  %2084 = vst.msk [vmem:[%s8 + $0x100] sm:$0xff] %vm2051, %v2038
  %2085 = vst.msk [vmem:[%s8 + $0x108] sm:$0xff] %vm2051, %v2039
  %2086 = vst.msk [vmem:[%s8 + $0x110] sm:$0xff] %vm2051, %v2040
  %2087 = vst.msk [vmem:[%s8 + $0x118] sm:$0xff] %vm2051, %v2041
  %2088 = vst.msk [vmem:[%s8 + $0x120] sm:$0xff] %vm2051, %v2042
  %2089 = vst.msk [vmem:[%s8 + $0x128] sm:$0xff] %vm2051, %v2043
  %2090 = vst.msk [vmem:[%s8 + $0x130] sm:$0xff] %vm2051, %v2044
  %2091 = vst.msk [vmem:[%s8 + $0x138] sm:$0xff] %vm2051, %v2045
  %2092 = vst.msk [vmem:[%s8 + $0x140] sm:$0xff] %vm2051, %v2046
  %2093 = vst.msk [vmem:[%s8 + $0x148] sm:$0xff] %vm2051, %v2047
  %2094 = vst.msk [vmem:[%s8 + $0x150] sm:$0xff] %vm2051, %v2048
  %2095 = vst.msk [vmem:[%s8 + $0x158] sm:$0xff] %vm2051, %v2049
  %2096 = vst.msk [vmem:[%s8 + $0x160] sm:$0xff] %vm2051, %v2050
  // Predicated region
  $region34: #{probnet_forward.5} parent=0 // pred_check
    _
  $region35: #{probnet_forward.5} parent=0 // pred_check_branch
    %2098 = sbr.rel (0) target = $region37
  $region36: #{probnet_forward.5} parent=0 // pred_region
    _
  $region37: #{probnet_forward.5} parent=0 // pred_fallthru
    _
  // Predicated region
  $region38: #{probnet_forward.5} parent=0 // pred_check
    _
  $region39: #{probnet_forward.5} parent=0 // pred_check_branch
    %2100 = sbr.rel (0) target = $region41
  $region40: #{probnet_forward.5} parent=0 // pred_region
    _
  $region41: #{probnet_forward.5} parent=0 // pred_fallthru
    _

// kernel: probnet_forward.8
$region0: #{probnet_forward.8}
  #allocation0 [shape = 'u32[]', space=smem, size = 0x4, offset = 0x4, fixed_abs, tag = 'smem constant byte address 0x4 - core index']
  #allocation1 [shape = 'u32[72,128]{1,0:T(1,128)}', space=vmem, size = 0x9000, scoped, tag = 'internal scratch']
  %s0 = inlined_call_operand.vmem [shape: f32[8,2,512], index: 0, kind: input, shape index: {}]
  %s1 = inlined_call_operand.vmem [shape: f32[128,512], index: 1, kind: input, shape index: {}]
  %s2 = inlined_call_operand.vmem [shape: f32[8,2,128], index: 2, kind: output, shape index: {}]
  %s3 = sld [smem:[#allocation0]]
  $region25: #{probnet_forward.8} parent=0
    _
  %s5 = ssub.s32 1, %s3
  %s6 = scalar_select 0, %s5, %s3
  // Predicated region
  $region2: #{probnet_forward.8} parent=0 // pred_check
    _
  $region3: #{probnet_forward.8} parent=0 // pred_check_branch
    %8 = sbr.rel (0) target = $region5
  $region4: #{probnet_forward.8} parent=0 // pred_region
    _
  $region5: #{probnet_forward.8} parent=0 // pred_fallthru
    _
  // Predicated region
  $region6: #{probnet_forward.8} parent=0 // pred_check
    _
  $region7: #{probnet_forward.8} parent=0 // pred_check_branch
    %10 = sbr.rel (0) target = $region9
  $region8: #{probnet_forward.8} parent=0 // pred_region
    _
  $region9: #{probnet_forward.8} parent=0 // pred_fallthru
    _
  %v11 = vld [vmem:[%s1] sm:$0xff]
  %v12 = vld [vmem:[%s1 + $0x8] sm:$0xff]
  %v13 = vld [vmem:[%s1 + $0x10] sm:$0xff]
  %v14 = vld [vmem:[%s1 + $0x18] sm:$0xff]
  %v15 = vld [vmem:[%s1 + $0x20] sm:$0xff]
  %v16 = vld [vmem:[%s1 + $0x28] sm:$0xff]
  %v17 = vld [vmem:[%s1 + $0x30] sm:$0xff]
  %v18 = vld [vmem:[%s1 + $0x38] sm:$0xff]
  %v19 = vld [vmem:[%s1 + $0x40] sm:$0xff]
  %v20 = vld [vmem:[%s1 + $0x48] sm:$0xff]
  %v21 = vld [vmem:[%s1 + $0x50] sm:$0xff]
  %v22 = vld [vmem:[%s1 + $0x58] sm:$0xff]
  %v23 = vld [vmem:[%s1 + $0x60] sm:$0xff]
  %v24 = vld [vmem:[%s1 + $0x68] sm:$0xff]
  %v25 = vld [vmem:[%s1 + $0x70] sm:$0xff]
  %v26 = vld [vmem:[%s1 + $0x78] sm:$0xff]
  %v27 = vld [vmem:[%s1 + $0x80] sm:$0xff]
  %v28 = vld [vmem:[%s1 + $0x88] sm:$0xff]
  %v29 = vld [vmem:[%s1 + $0x90] sm:$0xff]
  %v30 = vld [vmem:[%s1 + $0x98] sm:$0xff]
  %v31 = vld [vmem:[%s1 + $0xa0] sm:$0xff]
  %v32 = vld [vmem:[%s1 + $0xa8] sm:$0xff]
  %v33 = vld [vmem:[%s1 + $0xb0] sm:$0xff]
  %v34 = vld [vmem:[%s1 + $0xb8] sm:$0xff]
  %v35 = vld [vmem:[%s1 + $0xc0] sm:$0xff]
  %v36 = vld [vmem:[%s1 + $0xc8] sm:$0xff]
  %v37 = vld [vmem:[%s1 + $0xd0] sm:$0xff]
  %v38 = vld [vmem:[%s1 + $0xd8] sm:$0xff]
  %v39 = vld [vmem:[%s1 + $0xe0] sm:$0xff]
  %v40 = vld [vmem:[%s1 + $0xe8] sm:$0xff]
  %v41 = vld [vmem:[%s1 + $0xf0] sm:$0xff]
  %v42 = vld [vmem:[%s1 + $0xf8] sm:$0xff]
  %v43 = vld [vmem:[%s1 + $0x100] sm:$0xff]
  %v44 = vld [vmem:[%s1 + $0x108] sm:$0xff]
  %v45 = vld [vmem:[%s1 + $0x110] sm:$0xff]
  %v46 = vld [vmem:[%s1 + $0x118] sm:$0xff]
  %v47 = vld [vmem:[%s1 + $0x120] sm:$0xff]
  %v48 = vld [vmem:[%s1 + $0x128] sm:$0xff]
  %v49 = vld [vmem:[%s1 + $0x130] sm:$0xff]
  %v50 = vld [vmem:[%s1 + $0x138] sm:$0xff]
  %v51 = vld [vmem:[%s1 + $0x140] sm:$0xff]
  %v52 = vld [vmem:[%s1 + $0x148] sm:$0xff]
  %v53 = vld [vmem:[%s1 + $0x150] sm:$0xff]
  %v54 = vld [vmem:[%s1 + $0x158] sm:$0xff]
  %v55 = vld [vmem:[%s1 + $0x160] sm:$0xff]
  %v56 = vld [vmem:[%s1 + $0x168] sm:$0xff]
  %v57 = vld [vmem:[%s1 + $0x170] sm:$0xff]
  %v58 = vld [vmem:[%s1 + $0x178] sm:$0xff]
  %v59 = vld [vmem:[%s1 + $0x180] sm:$0xff]
  %v60 = vld [vmem:[%s1 + $0x188] sm:$0xff]
  %v61 = vld [vmem:[%s1 + $0x190] sm:$0xff]
  %v62 = vld [vmem:[%s1 + $0x198] sm:$0xff]
  %v63 = vld [vmem:[%s1 + $0x1a0] sm:$0xff]
  %v64 = vld [vmem:[%s1 + $0x1a8] sm:$0xff]
  %v65 = vld [vmem:[%s1 + $0x1b0] sm:$0xff]
  %v66 = vld [vmem:[%s1 + $0x1b8] sm:$0xff]
  %v67 = vld [vmem:[%s1 + $0x1c0] sm:$0xff]
  %v68 = vld [vmem:[%s1 + $0x1c8] sm:$0xff]
  %v69 = vld [vmem:[%s1 + $0x1d0] sm:$0xff]
  %v70 = vld [vmem:[%s1 + $0x1d8] sm:$0xff]
  %v71 = vld [vmem:[%s1 + $0x1e0] sm:$0xff]
  %v72 = vld [vmem:[%s1 + $0x1e8] sm:$0xff]
  %v73 = vld [vmem:[%s1 + $0x1f0] sm:$0xff]
  %v74 = vld [vmem:[%s1 + $0x1f8] sm:$0xff]
  loop: start=0, step=1, limit=8
  $region10: #{probnet_forward.8} parent=0 // loop_pre_header
    _
  $region11: #{probnet_forward.8} parent=0 // loop_header
    %s76 = sphi 0, %s80
    %p77 = scmp.ge.s32.totalorder %s76, 8
    %v81 = vphi 0.0, %v251
    %v82 = vphi 0.0, %v249
  $region12: #{probnet_forward.8} parent=0 // loop_header_branch
    %79 = sbr.rel (%p77) target = $region16
  $region13: #{probnet_forward.8} parent=0 // loop_body
    %s83 = smul.u32 %s76, 4
    %s84 = smul.addr %s83, 2
    %s85 = scalar_lea.vmem %s0, %s84
    %v86 = vld [vmem:[%s85] sm:$0xff]
    %87 = vmatpush.msra.mxu0 %v71
    %88 = vmatpush.msra.mxu0 %v67
    %89 = vmatpush.msra.mxu0 %v63
    %90 = vmatpush.msra.mxu0 %v59
    %91 = vmatpush.msra.mxu0 %v55
    %92 = vmatpush.msra.mxu0 %v51
    %93 = vmatpush.msra.mxu0 %v47
    %94 = vmatpush.msra.mxu0 %v43
    %95 = vmatpush.msra.mxu0 %v39
    %96 = vmatpush.msra.mxu0 %v35
    %97 = vmatpush.msra.mxu0 %v31
    %98 = vmatpush.msra.mxu0 %v27
    %99 = vmatpush.msra.mxu0 %v23
    %100 = vmatpush.msra.mxu0 %v19
    %101 = vmatpush.msra.mxu0 %v15
    %102 = vmatpush.msra.mxu0 %v11
    %103 = vmatmul.f32.gmra.mxu0 %v81
    %v104 = vpop.f32.mrf.mxu0
    %v105 = vadd.f32 0.0, %v104
    %106 = vdwg.mxu0
    %107 = vmatpush.msra.mxu0 %v72
    %108 = vmatpush.msra.mxu0 %v68
    %109 = vmatpush.msra.mxu0 %v64
    %110 = vmatpush.msra.mxu0 %v60
    %111 = vmatpush.msra.mxu0 %v56
    %112 = vmatpush.msra.mxu0 %v52
    %113 = vmatpush.msra.mxu0 %v48
    %114 = vmatpush.msra.mxu0 %v44
    %115 = vmatpush.msra.mxu0 %v40
    %116 = vmatpush.msra.mxu0 %v36
    %117 = vmatpush.msra.mxu0 %v32
    %118 = vmatpush.msra.mxu0 %v28
    %119 = vmatpush.msra.mxu0 %v24
    %120 = vmatpush.msra.mxu0 %v20
    %121 = vmatpush.msra.mxu0 %v16
    %122 = vmatpush.msra.mxu0 %v12
    %123 = vmatmul.f32.gmra.mxu0 %v81
    %v124 = vpop.f32.mrf.mxu0
    %v125 = vadd.f32 0.0, %v124
    %126 = vdwg.mxu0
    %127 = vmatpush.msra.mxu0 %v73
    %128 = vmatpush.msra.mxu0 %v69
    %129 = vmatpush.msra.mxu0 %v65
    %130 = vmatpush.msra.mxu0 %v61
    %131 = vmatpush.msra.mxu0 %v57
    %132 = vmatpush.msra.mxu0 %v53
    %133 = vmatpush.msra.mxu0 %v49
    %134 = vmatpush.msra.mxu0 %v45
    %135 = vmatpush.msra.mxu0 %v41
    %136 = vmatpush.msra.mxu0 %v37
    %137 = vmatpush.msra.mxu0 %v33
    %138 = vmatpush.msra.mxu0 %v29
    %139 = vmatpush.msra.mxu0 %v25
    %140 = vmatpush.msra.mxu0 %v21
    %141 = vmatpush.msra.mxu0 %v17
    %142 = vmatpush.msra.mxu0 %v13
    %143 = vmatmul.f32.gmra.mxu0 %v81
    %v144 = vpop.f32.mrf.mxu0
    %v145 = vadd.f32 0.0, %v144
    %146 = vdwg.mxu0
    %147 = vmatpush.msra.mxu0 %v74
    %148 = vmatpush.msra.mxu0 %v70
    %149 = vmatpush.msra.mxu0 %v66
    %150 = vmatpush.msra.mxu0 %v62
    %151 = vmatpush.msra.mxu0 %v58
    %152 = vmatpush.msra.mxu0 %v54
    %153 = vmatpush.msra.mxu0 %v50
    %154 = vmatpush.msra.mxu0 %v46
    %155 = vmatpush.msra.mxu0 %v42
    %156 = vmatpush.msra.mxu0 %v38
    %157 = vmatpush.msra.mxu0 %v34
    %158 = vmatpush.msra.mxu0 %v30
    %159 = vmatpush.msra.mxu0 %v26
    %160 = vmatpush.msra.mxu0 %v22
    %161 = vmatpush.msra.mxu0 %v18
    %162 = vmatpush.msra.mxu0 %v14
    %163 = vmatmul.f32.gmra.mxu0 %v81
    %v164 = vpop.f32.mrf.mxu0
    %v165 = vadd.f32 0.0, %v164
    %166 = vdwg.mxu0
    %v171 = vrot.slane %v125, 6
    %v172 = vrot.slane %v145, 4
    %v173 = vrot.slane %v165, 2
    %vm174 = vcmask 1041408
    %v175 = vsel %vm174, %v105, %v171
    %vm176 = vcmask 1045508
    %v177 = vsel %vm176, %v172, %v173
    %vm178 = vcmask 1043456
    %v179 = vsel %vm178, %v175, %v177
    %v181 = vadd.f32 %v86, %v179
    %v182 = vxor.u32 %v181, 2147483648
    %v183 = vmul.f32 %v182, 1.442695
    %v184 = vpow.pop %v183
    %v185 = vadd.f32 %v184, 1.0
    %v186 = vrcp.pop %v185
    %v187 = vmul.f32 %v185, %v186
    %v188 = vsub.f32 1.0, %v187
    %v189 = vmul.f32 %v186, %v188
    %v190 = vadd.f32 %v186, %v189
    %vm191 = vweird.f32 %v185
    %vm192 = vweird.f32 %v186
    %vm193 = vmor %vm191, %vm192
    %v194 = vsel %vm193, %v186, %v190
    %v195 = vand.u32 2147483647, %v185
    %vm196 = vcmp.eq.f32.partialorder %v195, 8.507059e+37
    %v197 = vand.u32 %v185, 2147483648
    %v198 = vor.u32 1.1754944e-38, %v197
    %v199 = vsel %vm196, %v198, %v194
    %v200 = vmul.f32 1.0, %v199
    %v202 = vrot.slane %v181, 2
    %v204 = vxor.u32 %v202, 2147483648
    %v205 = vmul.f32 %v204, 1.442695
    %v206 = vpow.pop %v205
    %v207 = vadd.f32 %v206, 1.0
    %v208 = vrcp.pop %v207
    %v209 = vmul.f32 %v207, %v208
    %v210 = vsub.f32 1.0, %v209
    %v211 = vmul.f32 %v208, %v210
    %v212 = vadd.f32 %v208, %v211
    %vm213 = vweird.f32 %v207
    %vm214 = vweird.f32 %v208
    %vm215 = vmor %vm213, %vm214
    %v216 = vsel %vm215, %v208, %v212
    %v217 = vand.u32 2147483647, %v207
    %vm218 = vcmp.eq.f32.partialorder %v217, 8.507059e+37
    %v219 = vand.u32 %v207, 2147483648
    %v220 = vor.u32 1.1754944e-38, %v219
    %v221 = vsel %vm218, %v220, %v216
    %v222 = vmul.f32 1.0, %v221
    %v223 = vrot.slane %v181, 4
    %v225 = vtanh.pop %v223
    %v226 = vrot.slane %v181, 6
    %v228 = vxor.u32 %v226, 2147483648
    %v229 = vmul.f32 %v228, 1.442695
    %v230 = vpow.pop %v229
    %v231 = vadd.f32 %v230, 1.0
    %v232 = vrcp.pop %v231
    %v233 = vmul.f32 %v231, %v232
    %v234 = vsub.f32 1.0, %v233
    %v235 = vmul.f32 %v232, %v234
    %v236 = vadd.f32 %v232, %v235
    %vm237 = vweird.f32 %v231
    %vm238 = vweird.f32 %v232
    %vm239 = vmor %vm237, %vm238
    %v240 = vsel %vm239, %v232, %v236
    %v241 = vand.u32 2147483647, %v231
    %vm242 = vcmp.eq.f32.partialorder %v241, 8.507059e+37
    %v243 = vand.u32 %v231, 2147483648
    %v244 = vor.u32 1.1754944e-38, %v243
    %v245 = vsel %vm242, %v244, %v240
    %v246 = vmul.f32 1.0, %v245
    %v247 = vmul.f32 %v222, %v82
    %v248 = vmul.f32 %v200, %v225
    %v249 = vadd.f32 %v247, %v248
    %v250 = vtanh.pop %v249
    %v251 = vmul.f32 %v246, %v250
    %s252 = smul.u32 %s76, 2
    %s253 = scalar_lea.vmem %s2, %s252
    %254 = vst [vmem:[%s253] sm:$0x3] %v251
  $region14: #{probnet_forward.8} parent=0 // loop_footer
    %s80 = sadd.s32 1, %s76
  $region15: #{probnet_forward.8} parent=0 // loop_footer_branch
    %75 = sbr.rel target = $region11
  $region16: #{probnet_forward.8} parent=0 // loop_exit
    _
  // Predicated region
  $region17: #{probnet_forward.8} parent=0 // pred_check
    _
  $region18: #{probnet_forward.8} parent=0 // pred_check_branch
    %256 = sbr.rel (0) target = $region20
  $region19: #{probnet_forward.8} parent=0 // pred_region
    _
  $region20: #{probnet_forward.8} parent=0 // pred_fallthru
    _
  // Predicated region
  $region21: #{probnet_forward.8} parent=0 // pred_check
    _
  $region22: #{probnet_forward.8} parent=0 // pred_check_branch
    %258 = sbr.rel (0) target = $region24
  $region23: #{probnet_forward.8} parent=0 // pred_region
    _
  $region24: #{probnet_forward.8} parent=0 // pred_fallthru
    _

// kernel: probnet_forward.9
$region0: #{probnet_forward.9}
  #allocation0 [shape = 'u32[]', space=smem, size = 0x4, offset = 0x4, fixed_abs, tag = 'smem constant byte address 0x4 - core index']
  #allocation1 [shape = 'u32[72,128]{1,0:T(1,128)}', space=vmem, size = 0x9000, scoped, tag = 'internal scratch']
  %s0 = inlined_call_operand.vmem [shape: f32[16,128], index: 0, kind: input, shape index: {}]
  %s1 = inlined_call_operand.vmem [shape: f32[128,10], index: 1, kind: input, shape index: {}]
  %s2 = inlined_call_operand.vmem [shape: f32[1,10], index: 2, kind: input, shape index: {}]
  %s3 = inlined_call_operand.hbm [shape: f32[16,10], index: 3, kind: output, shape index: {}]
  %s4 = sld [smem:[#allocation0]]
  $region22: #{probnet_forward.9} parent=0
    _
  %s6 = ssub.s32 1, %s4
  %s7 = scalar_select 0, %s6, %s4
  $region1: #{probnet_forward.9} parent=0
    #allocation2 [shape = 'u8[8192]{0}', space=vmem, size = 0x2000, scoped, tag = 'output window, operand 0, single buffered']
    #allocation3 [shape = 's32[1]{0}', space=sflag, size = 0x4, scoped, tag = 'scoped memory for probnet_forward.9']
    %8 = vsyncpa [#allocation3], 0
    // Predicated region
    $region2: #{probnet_forward.9} parent=1 // pred_check
      _
    $region3: #{probnet_forward.9} parent=1 // pred_check_branch
      %10 = sbr.rel (0) target = $region5
    $region4: #{probnet_forward.9} parent=1 // pred_region
      _
    $region5: #{probnet_forward.9} parent=1 // pred_fallthru
      _
    // Predicated region
    $region6: #{probnet_forward.9} parent=1 // pred_check
      _
    $region7: #{probnet_forward.9} parent=1 // pred_check_branch
      %12 = sbr.rel (0) target = $region9
    $region8: #{probnet_forward.9} parent=1 // pred_region
      _
    $region9: #{probnet_forward.9} parent=1 // pred_fallthru
      _
    // Predicated region
    $region10: #{probnet_forward.9} parent=1 // pred_check
      _
    $region11: #{probnet_forward.9} parent=1 // pred_check_branch
      %14 = sbr.rel (0) target = $region13
    $region12: #{probnet_forward.9} parent=1 // pred_region
      _
    $region13: #{probnet_forward.9} parent=1 // pred_fallthru
      _
    %v15 = vld [vmem:[%s0] sm:$0xff]
    %v16 = vld [vmem:[%s0 + $0x8] sm:$0xff]
    %v17 = vld [vmem:[%s1] sm:$0xff]
    %v18 = vld [vmem:[%s1 + $0x8] sm:$0xff]
    %v19 = vld [vmem:[%s1 + $0x10] sm:$0xff]
    %v20 = vld [vmem:[%s1 + $0x18] sm:$0xff]
    %v21 = vld [vmem:[%s1 + $0x20] sm:$0xff]
    %v22 = vld [vmem:[%s1 + $0x28] sm:$0xff]
    %v23 = vld [vmem:[%s1 + $0x30] sm:$0xff]
    %v24 = vld [vmem:[%s1 + $0x38] sm:$0xff]
    %v25 = vld [vmem:[%s1 + $0x40] sm:$0xff]
    %v26 = vld [vmem:[%s1 + $0x48] sm:$0xff]
    %v27 = vld [vmem:[%s1 + $0x50] sm:$0xff]
    %v28 = vld [vmem:[%s1 + $0x58] sm:$0xff]
    %v29 = vld [vmem:[%s1 + $0x60] sm:$0xff]
    %v30 = vld [vmem:[%s1 + $0x68] sm:$0xff]
    %v31 = vld [vmem:[%s1 + $0x70] sm:$0xff]
    %v32 = vld [vmem:[%s1 + $0x78] sm:$0xff]
    %v33 = vld [vmem:[%s2] sm:$0x1]
    %v35 = vperm.slane %v33, 0
    %37 = vmatpush.msra.mxu0 %v32
    %38 = vmatpush.msra.mxu0 %v31
    %39 = vmatpush.msra.mxu0 %v30
    %40 = vmatpush.msra.mxu0 %v29
    %41 = vmatpush.msra.mxu0 %v28
    %42 = vmatpush.msra.mxu0 %v27
    %43 = vmatpush.msra.mxu0 %v26
    %44 = vmatpush.msra.mxu0 %v25
    %45 = vmatpush.msra.mxu0 %v24
    %46 = vmatpush.msra.mxu0 %v23
    %47 = vmatpush.msra.mxu0 %v22
    %48 = vmatpush.msra.mxu0 %v21
    %49 = vmatpush.msra.mxu0 %v20
    %50 = vmatpush.msra.mxu0 %v19
    %51 = vmatpush.msra.mxu0 %v18
    %52 = vmatpush.msra.mxu0 %v17
    %53 = vmatmul.f32.gmra.mxu0 %v15
    %v54 = vpop.f32.mrf.mxu0
    %v55 = vadd.f32 %v35, %v54
    %56 = vmatmul.f32.gmra.mxu0 %v16
    %v57 = vpop.f32.mrf.mxu0
    %v58 = vadd.f32 %v35, %v57
    %59 = vdwg.mxu0
    %vm60 = vcmask 80896
    %v61 = vsel %vm60, %v55, -inf
    %62 = vmax.xlane.f32.xlu0 %v61
    %v63 = vpop.xlane.xlu0 %62
    %v64 = vsel %vm60, %v58, -inf
    %65 = vmax.xlane.f32.xlu0 %v64
    %v66 = vpop.xlane.xlu0 %65
    %v67 = vsub.f32 %v55, %v63
    %v68 = vsub.f32 %v58, %v66
    %v69 = vmul.f32 %v67, 1.442695
    %v70 = vpow.pop %v69
    %v71 = vmul.f32 %v68, 1.442695
    %v72 = vpow.pop %v71
    %v73 = vsel %vm60, %v70, 0.0
    %74 = vadd.xlane.f32.xlu0 %v73
    %v75 = vpop.xlane.xlu0 %74
    %v76 = vsel %vm60, %v72, 0.0
    %77 = vadd.xlane.f32.xlu0 %v76
    %v78 = vpop.xlane.xlu0 %77
    %v79 = vlog2.pop %v75
    %v80 = vmul.f32 %v79, 0.6931472
    %v81 = vlog2.pop %v78
    %v82 = vmul.f32 %v81, 0.6931472
    %v83 = vsub.f32 %v67, %v80
    %v84 = vsub.f32 %v68, %v82
    %85 = vst.msk [vmem:[#allocation2] sm:$0xff] %vm60, %v83
    %86 = vst.msk [vmem:[#allocation2 + $0x8] sm:$0xff] %vm60, %v84
    // Predicated region
    $region14: #{probnet_forward.9} parent=1 // pred_check
      _
    $region15: #{probnet_forward.9} parent=1 // pred_check_branch
      %88 = sbr.rel (0) target = $region17
    $region16: #{probnet_forward.9} parent=1 // pred_region
      %90 = vsyncadd [#allocation3], 0
      %s91 = sshll.u32 [#allocation2], 4
      %s92 = int_to_ptr.vmem [resolvable:$true] %s91
      %s93 = sshll.u32 %s3, 4
      %s94 = int_to_ptr.hbm [resolvable:$true] %s93
      %99 = dma.vmem_to_hbm [thread:$0]  %s92, 256, %s94, [#allocation3], 128, 128, 8
    $region17: #{probnet_forward.9} parent=1 // pred_fallthru
      _
    // Predicated region
    $region18: #{probnet_forward.9} parent=1 // pred_check
      _
    $region19: #{probnet_forward.9} parent=1 // pred_check_branch
      %101 = sbr.rel (0) target = $region21
    $region20: #{probnet_forward.9} parent=1 // pred_region
      %103 = dma.done [#allocation3], 256
    $region21: #{probnet_forward.9} parent=1 // pred_fallthru
      _
    %104 = vsyncpa [#allocation3], 1

</llo_original>
